<compile_context>
chip_gen: v7x
topology: tpu7x:2x2x1
jax: 0.10.0
libtpu: 0.0.40
codegen_flags: <defaults>
</compile_context>

<pallas_src>
import jax
import jax.numpy as jnp
from jax.experimental import pallas as pl
from jax.experimental.pallas import tpu as pltpu


CP = 128  # lane-padded intermediate channel width: [b1(32)|b2(32)|b3(32)|0(32)]


def _make_block_kernel(H, W, Cin, Cout, b_tile):
    HW = H * W
    M = b_tile * HW
    K3 = 3 * CP

    def kernel(x_ref, w1_ref, wab_ref, wf_ref, o_ref, pad_ref):
        # pad_ref: (b_tile, H+2, W+2, CP) f32 zero-bordered halo scratch.
        # Re-zero every step (see header note); interior is rewritten below
        # before any conv reads it, the border provides 'same' padding.
        pad_ref[...] = jnp.zeros_like(pad_ref)

        def to_scratch(y_f32):
            pad_ref[:, 1:H + 1, 1:W + 1, :] = y_f32.reshape(b_tile, H, W, CP)

        def conv3x3(get_w):
            """'same' 3x3 conv of the scratch interior -> (M, Cout_of_w) f32.

            im2col per kernel row dh: the three dw-shifted 128-lane taps are
            concatenated on the lane axis (128-aligned, shuffle-free), cast to
            bf16 once, and contracted in a single K=384 MXU dot per row.
            """
            acc = None
            for dh in range(3):
                taps = [pad_ref[:, dh:dh + H, dw:dw + W, :] for dw in range(3)]
                patch = (jnp.concatenate(taps, axis=-1)
                         .reshape(M, K3).astype(jnp.bfloat16))
                d = jnp.dot(patch, get_w(dh),
                            preferred_element_type=jnp.float32)
                acc = d if acc is None else acc + d
            return acc

        # ---- all three branch 1x1 convs as ONE (M,Cin)x(Cin,128) matmul ----
        lhs = x_ref[...].reshape(M, Cin).astype(jnp.bfloat16)
        to_scratch(jnp.dot(lhs, w1_ref[...], preferred_element_type=jnp.float32))
        # scratch lanes now: [branch1 s1 | branch2 s1 | branch3 | 0]

        # ---- stage A: branch1 3x3 #1 and branch2 3x3 fused in one conv;
        #      branch3 rides along via a center-tap identity in the weights.
        to_scratch(conv3x3(lambda dh: wab_ref[0, dh]))
        # scratch lanes now: [branch1 s2 | branch2 out | branch3 | 0]

        # ---- stage B: branch1 3x3 #2; branch2/branch3 identity passthrough.
        to_scratch(conv3x3(lambda dh: wab_ref[1, dh]))
        # scratch lanes now hold the 96-ch concat [b1 out | b2 out | b3 | 0]

        # ---- final 3x3 conv (96->256) with the residual add fused in -------
        out = conv3x3(lambda dh: wf_ref[dh]) + x_ref[...].reshape(M, Cin)
        o_ref[...] = out.reshape(b_tile, H, W, Cout).astype(o_ref.dtype)

    return kernel


def pack_params(params):
    """One-time repack of the HWIO module weights into the fused, lane-aligned
    bf16 matrices the kernel consumes.  Call once at init, not per forward."""
    Cin = params["b1_1"].shape[2]
    Cout = params["conv"].shape[3]
    f32 = jnp.float32

    # 1x1 stage: (Cin, 128) = [b1_1 | b2_1 | b3_1 | 0] — one matmul, 3 branches.
    w1 = jnp.zeros((Cin, CP), f32)
    w1 = w1.at[:, 0:32].set(params["b1_1"][0, 0])
    w1 = w1.at[:, 32:64].set(params["b2_1"][0, 0])
    w1 = w1.at[:, 64:96].set(params["b3_1"][0, 0])

    def pack_im2col(tap_fn, cout):
        # -> (3, 3*CP, cout): per kernel row dh, K rows ordered [dw0|dw1|dw2]*CP.
        w = jnp.zeros((3, 3 * CP, cout), f32)
        for dh in range(3):
            for dw in range(3):
                w = w.at[dh, dw * CP:(dw + 1) * CP, :].set(tap_fn(dh, dw))
        return w

    def tap_a(dh, dw):   # [b1s1|b2s1|b3|0] -> [b1s2|b2s2|b3|0]
        t = jnp.zeros((CP, CP), f32)
        t = t.at[0:32, 0:32].set(params["b1_2"][dh, dw])
        t = t.at[32:64, 32:64].set(params["b2_2"][dh, dw])
        if dh == 1 and dw == 1:                       # carry branch3 through
            t = t.at[64:96, 64:96].set(jnp.eye(32, dtype=f32))
        return t

    def tap_b(dh, dw):   # [b1s2|b2s2|b3|0] -> [b1s3|b2s2|b3|0]
        t = jnp.zeros((CP, CP), f32)
        t = t.at[0:32, 0:32].set(params["b1_3"][dh, dw])
        if dh == 1 and dw == 1:                       # carry branch2+3 through
            t = t.at[32:96, 32:96].set(jnp.eye(64, dtype=f32))
        return t

    def tap_f(dh, dw):   # 96-ch concat (lane-padded to 128) -> 256
        t = jnp.zeros((CP, Cout), f32)
        t = t.at[0:96, :].set(params["conv"][dh, dw])
        return t

    bf = jnp.bfloat16
    return {
        "w1": w1.astype(bf),                                       # (Cin, 128)
        "wab": jnp.stack([pack_im2col(tap_a, CP),
                          pack_im2col(tap_b, CP)]).astype(bf),     # (2,3,384,128)
        "wf": pack_im2col(tap_f, Cout).astype(bf),                 # (3,384,256)
    }


def inception_block_a(x_nchw, packed, *, batch_tile=1):
    """Matches InceptionBlockA.forward; input/output are NCHW like PyTorch."""
    N, C, H, W = x_nchw.shape
    Cout = packed["wf"].shape[-1]
    assert C == Cout, "the residual add (out + x) requires in_ch == 256"
    assert N % batch_tile == 0

    # Public interface matches the PyTorch module (NCHW).  If the surrounding
    # model is NHWC end-to-end, call the pallas_call directly and drop these.
    x = jnp.transpose(x_nchw, (0, 2, 3, 1))          # NCHW -> NHWC, once

    out = pl.pallas_call(
        _make_block_kernel(H, W, C, Cout, batch_tile),
        out_shape=jax.ShapeDtypeStruct((N, H, W, Cout), x.dtype),
        grid=(N // batch_tile,),
        in_specs=[
            pl.BlockSpec((batch_tile, H, W, C), lambda n: (n, 0, 0, 0)),
            pl.BlockSpec((C, CP), lambda n: (0, 0)),
            pl.BlockSpec((2, 3, 3 * CP, CP), lambda n: (0, 0, 0, 0)),
            pl.BlockSpec((3, 3 * CP, Cout), lambda n: (0, 0, 0)),
        ],
        out_specs=pl.BlockSpec((batch_tile, H, W, Cout),
                               lambda n: (n, 0, 0, 0)),
        scratch_shapes=[pltpu.VMEM((batch_tile, H + 2, W + 2, CP),
                                   jnp.float32)],
        compiler_params=pltpu.CompilerParams(
            dimension_semantics=("parallel",)),
    )(x, packed["w1"], packed["wab"], packed["wf"])

    return jnp.transpose(out, (0, 3, 1, 2))          # NHWC -> NCHW


def init_params(key, in_ch):
    """Deterministic synthetic weights matching the nn.Module shapes (HWIO, f32)."""

    def w(k, cout, cin, ksize):
        scale = (cin * ksize * ksize) ** -0.5
        return scale * jax.random.normal(k, (ksize, ksize, cin, cout),
                                         jnp.float32)

    keys = jax.random.split(key, 7)
    return {
        "b1_1": w(keys[0], 32, in_ch, 1),
        "b1_2": w(keys[1], 32, 32, 3),
        "b1_3": w(keys[2], 32, 32, 3),
        "b2_1": w(keys[3], 32, in_ch, 1),
        "b2_2": w(keys[4], 32, 32, 3),
        "b3_1": w(keys[5], 32, in_ch, 1),
        "conv": w(keys[6], 256, 96, 3),
    }


# ----------------------- pure-JAX reference (for checking) ------------------
def _ref_conv(x_nhwc, w_hwio):
    # Mirrors the kernel's bf16 MXU inputs with f32 accumulation.
    pad = w_hwio.shape[0] // 2
    return jax.lax.conv_general_dilated(
        x_nhwc.astype(jnp.bfloat16), w_hwio.astype(jnp.bfloat16),
        window_strides=(1, 1), padding=[(pad, pad), (pad, pad)],
        dimension_numbers=("NHWC", "HWIO", "NHWC"),
        preferred_element_type=jnp.float32)


def _reference(x_nchw, params):
    x = jnp.transpose(x_nchw, (0, 2, 3, 1))
    b1 = _ref_conv(_ref_conv(_ref_conv(x, params["b1_1"]), params["b1_2"]),
                   params["b1_3"])
    b2 = _ref_conv(_ref_conv(x, params["b2_1"]), params["b2_2"])
    b3 = _ref_conv(x, params["b3_1"])
    cat = jnp.concatenate([b1, b2, b3], axis=-1)
    out = _ref_conv(cat, params["conv"]) + x
    return jnp.transpose(out, (0, 3, 1, 2))


if __name__ == "__main__":
    # The residual `out + x` requires in_ch == 256 (final conv has 256 outputs).
    N, C, H, W = 2, 256, 8, 8
    key = jax.random.PRNGKey(0)
    kx, kp = jax.random.split(key)
    x = jax.random.normal(kx, (N, C, H, W), jnp.float32)
    params = init_params(kp, C)
    packed = pack_params(params)       # one-time weight repack (hoisted out of fwd)

    out = jax.block_until_ready(jax.jit(inception_block_a)(x, packed))
    ref = jax.block_until_ready(_reference(x, params))

    assert out.shape == (N, 256, H, W), out.shape
    max_err = float(jnp.max(jnp.abs(out - ref)))
    assert jnp.allclose(out, ref, rtol=1e-2, atol=1e-2), max_err

    print("KERNEL_OK")
</pallas_src>

<mosaic_0001>
module attributes {stable_mosaic.version = 11 : i64} {
  func.func @kernel(%arg0: i32, %arg1: memref<1x8x8x256xf32, #tpu.memory_space<vmem>>, %arg2: memref<256x128xbf16, #tpu.memory_space<vmem>>, %arg3: memref<2x3x384x128xbf16, #tpu.memory_space<vmem>>, %arg4: memref<3x384x256xbf16, #tpu.memory_space<vmem>>, %arg5: memref<1x8x8x256xf32, #tpu.memory_space<vmem>>, %arg6: memref<1x10x10x128xf32, #tpu.memory_space<vmem>>) attributes {dimension_semantics = [#tpu.dimension_semantics<parallel>], iteration_bounds = array<i64: 2>, scalar_prefetch = 0 : i64, scratch_operands = 1 : i64, tpu.core_type = #tpu.core_type<tc>, window_params = [{transform_indices = @transform_0, window_bounds = array<i64: 1, 8, 8, 256>}, {pipeline_mode = #tpu.pipeline_mode<synchronous>, transform_indices = @transform_1, window_bounds = array<i64: 256, 128>}, {pipeline_mode = #tpu.pipeline_mode<synchronous>, transform_indices = @transform_2, window_bounds = array<i64: 2, 3, 384, 128>}, {pipeline_mode = #tpu.pipeline_mode<synchronous>, transform_indices = @transform_3, window_bounds = array<i64: 3, 384, 256>}, {transform_indices = @transform_4, window_bounds = array<i64: 1, 8, 8, 256>}]} {
    %cst = arith.constant 0.000000e+00 : f32
    %0 = vector.broadcast %cst : f32 to vector<1x10x10x128xf32>
    %c0 = arith.constant 0 : index
    %c0_0 = arith.constant 0 : index
    %c0_1 = arith.constant 0 : index
    %c0_2 = arith.constant 0 : index
    %1 = vector.load %arg6[%c0, %c0_0, %c0_1, %c0_2] : memref<1x10x10x128xf32, #tpu.memory_space<vmem>>, vector<1x10x10x128xf32>
    tpu.vector_store %arg6[%c0, %c0_0, %c0_1, %c0_2], %0 {strides = array<i32>} : memref<1x10x10x128xf32, #tpu.memory_space<vmem>>, vector<1x10x10x128xf32>,
    %c0_3 = arith.constant 0 : index
    %c0_4 = arith.constant 0 : index
    %c0_5 = arith.constant 0 : index
    %c0_6 = arith.constant 0 : index
    %2 = vector.load %arg1[%c0_3, %c0_4, %c0_5, %c0_6] : memref<1x8x8x256xf32, #tpu.memory_space<vmem>>, vector<1x8x8x256xf32>
    %3 = vector.shape_cast %2 : vector<1x8x8x256xf32> to vector<64x256xf32>
    %4 = arith.truncf %3 : vector<64x256xf32> to vector<64x256xbf16>
    %c0_7 = arith.constant 0 : index
    %c0_8 = arith.constant 0 : index
    %5 = vector.load %arg2[%c0_7, %c0_8] : memref<256x128xbf16, #tpu.memory_space<vmem>>, vector<256x128xbf16>
    %cst_9 = arith.constant dense<0.000000e+00> : vector<64x128xf32>
    %6 = tpu.matmul %4, %5, %cst_9 {dimension_numbers = #tpu.dot_dimension_numbers<[1], [0], [0], [1], [0, 0, 1, 1], [], []>} : vector<64x256xbf16>, vector<256x128xbf16>, vector<64x128xf32> -> vector<64x128xf32>
    %7 = vector.shape_cast %6 : vector<64x128xf32> to vector<1x8x8x128xf32>
    %c0_10 = arith.constant 0 : index
    %c1 = arith.constant 1 : index
    %c1_11 = arith.constant 1 : index
    %c0_12 = arith.constant 0 : index
    %8 = vector.load %arg6[%c0_10, %c1, %c1_11, %c0_12] : memref<1x10x10x128xf32, #tpu.memory_space<vmem>>, vector<1x8x8x128xf32>
    tpu.vector_store %arg6[%c0_10, %c1, %c1_11, %c0_12], %7 {strides = array<i32>} : memref<1x10x10x128xf32, #tpu.memory_space<vmem>>, vector<1x8x8x128xf32>,
    %c0_13 = arith.constant 0 : index
    %c0_14 = arith.constant 0 : index
    %c0_15 = arith.constant 0 : index
    %c0_16 = arith.constant 0 : index
    %9 = vector.load %arg6[%c0_13, %c0_14, %c0_15, %c0_16] : memref<1x10x10x128xf32, #tpu.memory_space<vmem>>, vector<1x8x8x128xf32>
    %c0_17 = arith.constant 0 : index
    %c0_18 = arith.constant 0 : index
    %c1_19 = arith.constant 1 : index
    %c0_20 = arith.constant 0 : index
    %10 = vector.load %arg6[%c0_17, %c0_18, %c1_19, %c0_20] : memref<1x10x10x128xf32, #tpu.memory_space<vmem>>, vector<1x8x8x128xf32>
    %c0_21 = arith.constant 0 : index
    %c0_22 = arith.constant 0 : index
    %c2 = arith.constant 2 : index
    %c0_23 = arith.constant 0 : index
    %11 = vector.load %arg6[%c0_21, %c0_22, %c2, %c0_23] : memref<1x10x10x128xf32, #tpu.memory_space<vmem>>, vector<1x8x8x128xf32>
    %12 = tpu.concatenate %9, %10, %11 in 3 : vector<1x8x8x128xf32>, vector<1x8x8x128xf32>, vector<1x8x8x128xf32> -> vector<1x8x8x384xf32>
    %13 = vector.shape_cast %12 : vector<1x8x8x384xf32> to vector<64x384xf32>
    %14 = arith.truncf %13 : vector<64x384xf32> to vector<64x384xbf16>
    %c0_24 = arith.constant 0 : index
    %c0_25 = arith.constant 0 : index
    %c0_26 = arith.constant 0 : index
    %c0_27 = arith.constant 0 : index
    %15 = vector.load %arg3[%c0_24, %c0_25, %c0_26, %c0_27] : memref<2x3x384x128xbf16, #tpu.memory_space<vmem>>, vector<1x1x384x128xbf16>
    %16 = vector.shape_cast %15 : vector<1x1x384x128xbf16> to vector<384x128xbf16>
    %cst_28 = arith.constant dense<0.000000e+00> : vector<64x128xf32>
    %17 = tpu.matmul %14, %16, %cst_28 {dimension_numbers = #tpu.dot_dimension_numbers<[1], [0], [0], [1], [0, 0, 1, 1], [], []>} : vector<64x384xbf16>, vector<384x128xbf16>, vector<64x128xf32> -> vector<64x128xf32>
    %c0_29 = arith.constant 0 : index
    %c1_30 = arith.constant 1 : index
    %c0_31 = arith.constant 0 : index
    %c0_32 = arith.constant 0 : index
    %18 = vector.load %arg6[%c0_29, %c1_30, %c0_31, %c0_32] : memref<1x10x10x128xf32, #tpu.memory_space<vmem>>, vector<1x8x8x128xf32>
    %c0_33 = arith.constant 0 : index
    %c1_34 = arith.constant 1 : index
    %c1_35 = arith.constant 1 : index
    %c0_36 = arith.constant 0 : index
    %19 = vector.load %arg6[%c0_33, %c1_34, %c1_35, %c0_36] : memref<1x10x10x128xf32, #tpu.memory_space<vmem>>, vector<1x8x8x128xf32>
    %c0_37 = arith.constant 0 : index
    %c1_38 = arith.constant 1 : index
    %c2_39 = arith.constant 2 : index
    %c0_40 = arith.constant 0 : index
    %20 = vector.load %arg6[%c0_37, %c1_38, %c2_39, %c0_40] : memref<1x10x10x128xf32, #tpu.memory_space<vmem>>, vector<1x8x8x128xf32>
    %21 = tpu.concatenate %18, %19, %20 in 3 : vector<1x8x8x128xf32>, vector<1x8x8x128xf32>, vector<1x8x8x128xf32> -> vector<1x8x8x384xf32>
    %22 = vector.shape_cast %21 : vector<1x8x8x384xf32> to vector<64x384xf32>
    %23 = arith.truncf %22 : vector<64x384xf32> to vector<64x384xbf16>
    %c0_41 = arith.constant 0 : index
    %c1_42 = arith.constant 1 : index
    %c0_43 = arith.constant 0 : index
    %c0_44 = arith.constant 0 : index
    %24 = vector.load %arg3[%c0_41, %c1_42, %c0_43, %c0_44] : memref<2x3x384x128xbf16, #tpu.memory_space<vmem>>, vector<1x1x384x128xbf16>
    %25 = vector.shape_cast %24 : vector<1x1x384x128xbf16> to vector<384x128xbf16>
    %cst_45 = arith.constant dense<0.000000e+00> : vector<64x128xf32>
    %26 = tpu.matmul %23, %25, %cst_45 {dimension_numbers = #tpu.dot_dimension_numbers<[1], [0], [0], [1], [0, 0, 1, 1], [], []>} : vector<64x384xbf16>, vector<384x128xbf16>, vector<64x128xf32> -> vector<64x128xf32>
    %27 = arith.addf %17, %26 : vector<64x128xf32>
    %c0_46 = arith.constant 0 : index
    %c2_47 = arith.constant 2 : index
    %c0_48 = arith.constant 0 : index
    %c0_49 = arith.constant 0 : index
    %28 = vector.load %arg6[%c0_46, %c2_47, %c0_48, %c0_49] : memref<1x10x10x128xf32, #tpu.memory_space<vmem>>, vector<1x8x8x128xf32>
    %c0_50 = arith.constant 0 : index
    %c2_51 = arith.constant 2 : index
    %c1_52 = arith.constant 1 : index
    %c0_53 = arith.constant 0 : index
    %29 = vector.load %arg6[%c0_50, %c2_51, %c1_52, %c0_53] : memref<1x10x10x128xf32, #tpu.memory_space<vmem>>, vector<1x8x8x128xf32>
    %c0_54 = arith.constant 0 : index
    %c2_55 = arith.constant 2 : index
    %c2_56 = arith.constant 2 : index
    %c0_57 = arith.constant 0 : index
    %30 = vector.load %arg6[%c0_54, %c2_55, %c2_56, %c0_57] : memref<1x10x10x128xf32, #tpu.memory_space<vmem>>, vector<1x8x8x128xf32>
    %31 = tpu.concatenate %28, %29, %30 in 3 : vector<1x8x8x128xf32>, vector<1x8x8x128xf32>, vector<1x8x8x128xf32> -> vector<1x8x8x384xf32>
    %32 = vector.shape_cast %31 : vector<1x8x8x384xf32> to vector<64x384xf32>
    %33 = arith.truncf %32 : vector<64x384xf32> to vector<64x384xbf16>
    %c0_58 = arith.constant 0 : index
    %c2_59 = arith.constant 2 : index
    %c0_60 = arith.constant 0 : index
    %c0_61 = arith.constant 0 : index
    %34 = vector.load %arg3[%c0_58, %c2_59, %c0_60, %c0_61] : memref<2x3x384x128xbf16, #tpu.memory_space<vmem>>, vector<1x1x384x128xbf16>
    %35 = vector.shape_cast %34 : vector<1x1x384x128xbf16> to vector<384x128xbf16>
    %cst_62 = arith.constant dense<0.000000e+00> : vector<64x128xf32>
    %36 = tpu.matmul %33, %35, %cst_62 {dimension_numbers = #tpu.dot_dimension_numbers<[1], [0], [0], [1], [0, 0, 1, 1], [], []>} : vector<64x384xbf16>, vector<384x128xbf16>, vector<64x128xf32> -> vector<64x128xf32>
    %37 = arith.addf %27, %36 : vector<64x128xf32>
    %38 = vector.shape_cast %37 : vector<64x128xf32> to vector<1x8x8x128xf32>
    %c0_63 = arith.constant 0 : index
    %c1_64 = arith.constant 1 : index
    %c1_65 = arith.constant 1 : index
    %c0_66 = arith.constant 0 : index
    %39 = vector.load %arg6[%c0_63, %c1_64, %c1_65, %c0_66] : memref<1x10x10x128xf32, #tpu.memory_space<vmem>>, vector<1x8x8x128xf32>
    tpu.vector_store %arg6[%c0_63, %c1_64, %c1_65, %c0_66], %38 {strides = array<i32>} : memref<1x10x10x128xf32, #tpu.memory_space<vmem>>, vector<1x8x8x128xf32>,
    %c0_67 = arith.constant 0 : index
    %c0_68 = arith.constant 0 : index
    %c0_69 = arith.constant 0 : index
    %c0_70 = arith.constant 0 : index
    %40 = vector.load %arg6[%c0_67, %c0_68, %c0_69, %c0_70] : memref<1x10x10x128xf32, #tpu.memory_space<vmem>>, vector<1x8x8x128xf32>
    %c0_71 = arith.constant 0 : index
    %c0_72 = arith.constant 0 : index
    %c1_73 = arith.constant 1 : index
    %c0_74 = arith.constant 0 : index
    %41 = vector.load %arg6[%c0_71, %c0_72, %c1_73, %c0_74] : memref<1x10x10x128xf32, #tpu.memory_space<vmem>>, vector<1x8x8x128xf32>
    %c0_75 = arith.constant 0 : index
    %c0_76 = arith.constant 0 : index
    %c2_77 = arith.constant 2 : index
    %c0_78 = arith.constant 0 : index
    %42 = vector.load %arg6[%c0_75, %c0_76, %c2_77, %c0_78] : memref<1x10x10x128xf32, #tpu.memory_space<vmem>>, vector<1x8x8x128xf32>
    %43 = tpu.concatenate %40, %41, %42 in 3 : vector<1x8x8x128xf32>, vector<1x8x8x128xf32>, vector<1x8x8x128xf32> -> vector<1x8x8x384xf32>
    %44 = vector.shape_cast %43 : vector<1x8x8x384xf32> to vector<64x384xf32>
    %45 = arith.truncf %44 : vector<64x384xf32> to vector<64x384xbf16>
    %c1_79 = arith.constant 1 : index
    %c0_80 = arith.constant 0 : index
    %c0_81 = arith.constant 0 : index
    %c0_82 = arith.constant 0 : index
    %46 = vector.load %arg3[%c1_79, %c0_80, %c0_81, %c0_82] : memref<2x3x384x128xbf16, #tpu.memory_space<vmem>>, vector<1x1x384x128xbf16>
    %47 = vector.shape_cast %46 : vector<1x1x384x128xbf16> to vector<384x128xbf16>
    %cst_83 = arith.constant dense<0.000000e+00> : vector<64x128xf32>
    %48 = tpu.matmul %45, %47, %cst_83 {dimension_numbers = #tpu.dot_dimension_numbers<[1], [0], [0], [1], [0, 0, 1, 1], [], []>} : vector<64x384xbf16>, vector<384x128xbf16>, vector<64x128xf32> -> vector<64x128xf32>
    %c0_84 = arith.constant 0 : index
    %c1_85 = arith.constant 1 : index
    %c0_86 = arith.constant 0 : index
    %c0_87 = arith.constant 0 : index
    %49 = vector.load %arg6[%c0_84, %c1_85, %c0_86, %c0_87] : memref<1x10x10x128xf32, #tpu.memory_space<vmem>>, vector<1x8x8x128xf32>
    %c0_88 = arith.constant 0 : index
    %c1_89 = arith.constant 1 : index
    %c1_90 = arith.constant 1 : index
    %c0_91 = arith.constant 0 : index
    %50 = vector.load %arg6[%c0_88, %c1_89, %c1_90, %c0_91] : memref<1x10x10x128xf32, #tpu.memory_space<vmem>>, vector<1x8x8x128xf32>
    %c0_92 = arith.constant 0 : index
    %c1_93 = arith.constant 1 : index
    %c2_94 = arith.constant 2 : index
    %c0_95 = arith.constant 0 : index
    %51 = vector.load %arg6[%c0_92, %c1_93, %c2_94, %c0_95] : memref<1x10x10x128xf32, #tpu.memory_space<vmem>>, vector<1x8x8x128xf32>
    %52 = tpu.concatenate %49, %50, %51 in 3 : vector<1x8x8x128xf32>, vector<1x8x8x128xf32>, vector<1x8x8x128xf32> -> vector<1x8x8x384xf32>
    %53 = vector.shape_cast %52 : vector<1x8x8x384xf32> to vector<64x384xf32>
    %54 = arith.truncf %53 : vector<64x384xf32> to vector<64x384xbf16>
    %c1_96 = arith.constant 1 : index
    %c1_97 = arith.constant 1 : index
    %c0_98 = arith.constant 0 : index
    %c0_99 = arith.constant 0 : index
    %55 = vector.load %arg3[%c1_96, %c1_97, %c0_98, %c0_99] : memref<2x3x384x128xbf16, #tpu.memory_space<vmem>>, vector<1x1x384x128xbf16>
    %56 = vector.shape_cast %55 : vector<1x1x384x128xbf16> to vector<384x128xbf16>
    %cst_100 = arith.constant dense<0.000000e+00> : vector<64x128xf32>
    %57 = tpu.matmul %54, %56, %cst_100 {dimension_numbers = #tpu.dot_dimension_numbers<[1], [0], [0], [1], [0, 0, 1, 1], [], []>} : vector<64x384xbf16>, vector<384x128xbf16>, vector<64x128xf32> -> vector<64x128xf32>
    %58 = arith.addf %48, %57 : vector<64x128xf32>
    %c0_101 = arith.constant 0 : index
    %c2_102 = arith.constant 2 : index
    %c0_103 = arith.constant 0 : index
    %c0_104 = arith.constant 0 : index
    %59 = vector.load %arg6[%c0_101, %c2_102, %c0_103, %c0_104] : memref<1x10x10x128xf32, #tpu.memory_space<vmem>>, vector<1x8x8x128xf32>
    %c0_105 = arith.constant 0 : index
    %c2_106 = arith.constant 2 : index
    %c1_107 = arith.constant 1 : index
    %c0_108 = arith.constant 0 : index
    %60 = vector.load %arg6[%c0_105, %c2_106, %c1_107, %c0_108] : memref<1x10x10x128xf32, #tpu.memory_space<vmem>>, vector<1x8x8x128xf32>
    %c0_109 = arith.constant 0 : index
    %c2_110 = arith.constant 2 : index
    %c2_111 = arith.constant 2 : index
    %c0_112 = arith.constant 0 : index
    %61 = vector.load %arg6[%c0_109, %c2_110, %c2_111, %c0_112] : memref<1x10x10x128xf32, #tpu.memory_space<vmem>>, vector<1x8x8x128xf32>
    %62 = tpu.concatenate %59, %60, %61 in 3 : vector<1x8x8x128xf32>, vector<1x8x8x128xf32>, vector<1x8x8x128xf32> -> vector<1x8x8x384xf32>
    %63 = vector.shape_cast %62 : vector<1x8x8x384xf32> to vector<64x384xf32>
    %64 = arith.truncf %63 : vector<64x384xf32> to vector<64x384xbf16>
    %c1_113 = arith.constant 1 : index
    %c2_114 = arith.constant 2 : index
    %c0_115 = arith.constant 0 : index
    %c0_116 = arith.constant 0 : index
    %65 = vector.load %arg3[%c1_113, %c2_114, %c0_115, %c0_116] : memref<2x3x384x128xbf16, #tpu.memory_space<vmem>>, vector<1x1x384x128xbf16>
    %66 = vector.shape_cast %65 : vector<1x1x384x128xbf16> to vector<384x128xbf16>
    %cst_117 = arith.constant dense<0.000000e+00> : vector<64x128xf32>
    %67 = tpu.matmul %64, %66, %cst_117 {dimension_numbers = #tpu.dot_dimension_numbers<[1], [0], [0], [1], [0, 0, 1, 1], [], []>} : vector<64x384xbf16>, vector<384x128xbf16>, vector<64x128xf32> -> vector<64x128xf32>
    %68 = arith.addf %58, %67 : vector<64x128xf32>
    %69 = vector.shape_cast %68 : vector<64x128xf32> to vector<1x8x8x128xf32>
    %c0_118 = arith.constant 0 : index
    %c1_119 = arith.constant 1 : index
    %c1_120 = arith.constant 1 : index
    %c0_121 = arith.constant 0 : index
    %70 = vector.load %arg6[%c0_118, %c1_119, %c1_120, %c0_121] : memref<1x10x10x128xf32, #tpu.memory_space<vmem>>, vector<1x8x8x128xf32>
    tpu.vector_store %arg6[%c0_118, %c1_119, %c1_120, %c0_121], %69 {strides = array<i32>} : memref<1x10x10x128xf32, #tpu.memory_space<vmem>>, vector<1x8x8x128xf32>,
    %c0_122 = arith.constant 0 : index
    %c0_123 = arith.constant 0 : index
    %c0_124 = arith.constant 0 : index
    %c0_125 = arith.constant 0 : index
    %71 = vector.load %arg6[%c0_122, %c0_123, %c0_124, %c0_125] : memref<1x10x10x128xf32, #tpu.memory_space<vmem>>, vector<1x8x8x128xf32>
    %c0_126 = arith.constant 0 : index
    %c0_127 = arith.constant 0 : index
    %c1_128 = arith.constant 1 : index
    %c0_129 = arith.constant 0 : index
    %72 = vector.load %arg6[%c0_126, %c0_127, %c1_128, %c0_129] : memref<1x10x10x128xf32, #tpu.memory_space<vmem>>, vector<1x8x8x128xf32>
    %c0_130 = arith.constant 0 : index
    %c0_131 = arith.constant 0 : index
    %c2_132 = arith.constant 2 : index
    %c0_133 = arith.constant 0 : index
    %73 = vector.load %arg6[%c0_130, %c0_131, %c2_132, %c0_133] : memref<1x10x10x128xf32, #tpu.memory_space<vmem>>, vector<1x8x8x128xf32>
    %74 = tpu.concatenate %71, %72, %73 in 3 : vector<1x8x8x128xf32>, vector<1x8x8x128xf32>, vector<1x8x8x128xf32> -> vector<1x8x8x384xf32>
    %75 = vector.shape_cast %74 : vector<1x8x8x384xf32> to vector<64x384xf32>
    %76 = arith.truncf %75 : vector<64x384xf32> to vector<64x384xbf16>
    %c0_134 = arith.constant 0 : index
    %c0_135 = arith.constant 0 : index
    %c0_136 = arith.constant 0 : index
    %77 = vector.load %arg4[%c0_134, %c0_135, %c0_136] : memref<3x384x256xbf16, #tpu.memory_space<vmem>>, vector<1x384x256xbf16>
    %78 = vector.shape_cast %77 : vector<1x384x256xbf16> to vector<384x256xbf16>
    %cst_137 = arith.constant dense<0.000000e+00> : vector<64x256xf32>
    %79 = tpu.matmul %76, %78, %cst_137 {dimension_numbers = #tpu.dot_dimension_numbers<[1], [0], [0], [1], [0, 0, 1, 1], [], []>} : vector<64x384xbf16>, vector<384x256xbf16>, vector<64x256xf32> -> vector<64x256xf32>
    %c0_138 = arith.constant 0 : index
    %c1_139 = arith.constant 1 : index
    %c0_140 = arith.constant 0 : index
    %c0_141 = arith.constant 0 : index
    %80 = vector.load %arg6[%c0_138, %c1_139, %c0_140, %c0_141] : memref<1x10x10x128xf32, #tpu.memory_space<vmem>>, vector<1x8x8x128xf32>
    %c0_142 = arith.constant 0 : index
    %c1_143 = arith.constant 1 : index
    %c1_144 = arith.constant 1 : index
    %c0_145 = arith.constant 0 : index
    %81 = vector.load %arg6[%c0_142, %c1_143, %c1_144, %c0_145] : memref<1x10x10x128xf32, #tpu.memory_space<vmem>>, vector<1x8x8x128xf32>
    %c0_146 = arith.constant 0 : index
    %c1_147 = arith.constant 1 : index
    %c2_148 = arith.constant 2 : index
    %c0_149 = arith.constant 0 : index
    %82 = vector.load %arg6[%c0_146, %c1_147, %c2_148, %c0_149] : memref<1x10x10x128xf32, #tpu.memory_space<vmem>>, vector<1x8x8x128xf32>
    %83 = tpu.concatenate %80, %81, %82 in 3 : vector<1x8x8x128xf32>, vector<1x8x8x128xf32>, vector<1x8x8x128xf32> -> vector<1x8x8x384xf32>
    %84 = vector.shape_cast %83 : vector<1x8x8x384xf32> to vector<64x384xf32>
    %85 = arith.truncf %84 : vector<64x384xf32> to vector<64x384xbf16>
    %c1_150 = arith.constant 1 : index
    %c0_151 = arith.constant 0 : index
    %c0_152 = arith.constant 0 : index
    %86 = vector.load %arg4[%c1_150, %c0_151, %c0_152] : memref<3x384x256xbf16, #tpu.memory_space<vmem>>, vector<1x384x256xbf16>
    %87 = vector.shape_cast %86 : vector<1x384x256xbf16> to vector<384x256xbf16>
    %cst_153 = arith.constant dense<0.000000e+00> : vector<64x256xf32>
    %88 = tpu.matmul %85, %87, %cst_153 {dimension_numbers = #tpu.dot_dimension_numbers<[1], [0], [0], [1], [0, 0, 1, 1], [], []>} : vector<64x384xbf16>, vector<384x256xbf16>, vector<64x256xf32> -> vector<64x256xf32>
    %89 = arith.addf %79, %88 : vector<64x256xf32>
    %c0_154 = arith.constant 0 : index
    %c2_155 = arith.constant 2 : index
    %c0_156 = arith.constant 0 : index
    %c0_157 = arith.constant 0 : index
    %90 = vector.load %arg6[%c0_154, %c2_155, %c0_156, %c0_157] : memref<1x10x10x128xf32, #tpu.memory_space<vmem>>, vector<1x8x8x128xf32>
    %c0_158 = arith.constant 0 : index
    %c2_159 = arith.constant 2 : index
    %c1_160 = arith.constant 1 : index
    %c0_161 = arith.constant 0 : index
    %91 = vector.load %arg6[%c0_158, %c2_159, %c1_160, %c0_161] : memref<1x10x10x128xf32, #tpu.memory_space<vmem>>, vector<1x8x8x128xf32>
    %c0_162 = arith.constant 0 : index
    %c2_163 = arith.constant 2 : index
    %c2_164 = arith.constant 2 : index
    %c0_165 = arith.constant 0 : index
    %92 = vector.load %arg6[%c0_162, %c2_163, %c2_164, %c0_165] : memref<1x10x10x128xf32, #tpu.memory_space<vmem>>, vector<1x8x8x128xf32>
    %93 = tpu.concatenate %90, %91, %92 in 3 : vector<1x8x8x128xf32>, vector<1x8x8x128xf32>, vector<1x8x8x128xf32> -> vector<1x8x8x384xf32>
    %94 = vector.shape_cast %93 : vector<1x8x8x384xf32> to vector<64x384xf32>
    %95 = arith.truncf %94 : vector<64x384xf32> to vector<64x384xbf16>
    %c2_166 = arith.constant 2 : index
    %c0_167 = arith.constant 0 : index
    %c0_168 = arith.constant 0 : index
    %96 = vector.load %arg4[%c2_166, %c0_167, %c0_168] : memref<3x384x256xbf16, #tpu.memory_space<vmem>>, vector<1x384x256xbf16>
    %97 = vector.shape_cast %96 : vector<1x384x256xbf16> to vector<384x256xbf16>
    %cst_169 = arith.constant dense<0.000000e+00> : vector<64x256xf32>
    %98 = tpu.matmul %95, %97, %cst_169 {dimension_numbers = #tpu.dot_dimension_numbers<[1], [0], [0], [1], [0, 0, 1, 1], [], []>} : vector<64x384xbf16>, vector<384x256xbf16>, vector<64x256xf32> -> vector<64x256xf32>
    %99 = arith.addf %89, %98 : vector<64x256xf32>
    %c0_170 = arith.constant 0 : index
    %c0_171 = arith.constant 0 : index
    %c0_172 = arith.constant 0 : index
    %c0_173 = arith.constant 0 : index
    %100 = vector.load %arg1[%c0_170, %c0_171, %c0_172, %c0_173] : memref<1x8x8x256xf32, #tpu.memory_space<vmem>>, vector<1x8x8x256xf32>
    %101 = vector.shape_cast %100 : vector<1x8x8x256xf32> to vector<64x256xf32>
    %102 = arith.addf %99, %101 : vector<64x256xf32>
    %103 = vector.shape_cast %102 : vector<64x256xf32> to vector<1x8x8x256xf32>
    %c0_174 = arith.constant 0 : index
    %c0_175 = arith.constant 0 : index
    %c0_176 = arith.constant 0 : index
    %c0_177 = arith.constant 0 : index
    %104 = vector.load %arg5[%c0_174, %c0_175, %c0_176, %c0_177] : memref<1x8x8x256xf32, #tpu.memory_space<vmem>>, vector<1x8x8x256xf32>
    tpu.vector_store %arg5[%c0_174, %c0_175, %c0_176, %c0_177], %103 {strides = array<i32>} : memref<1x8x8x256xf32, #tpu.memory_space<vmem>>, vector<1x8x8x256xf32>,
    return
  }
  func.func @transform_0(%arg0: i32) -> (i32, i32, i32, i32) {
    %c0_i32 = arith.constant 0 : i32
    %c0_i32_0 = arith.constant 0 : i32
    %c0_i32_1 = arith.constant 0 : i32
    %c0_i32_2 = arith.constant 0 : i32
    return %arg0, %c0_i32, %c0_i32_0, %c0_i32_1 : i32, i32, i32, i32
  }
  func.func @transform_1(%arg0: i32) -> (i32, i32) {
    %c0_i32 = arith.constant 0 : i32
    %c0_i32_0 = arith.constant 0 : i32
    %c0_i32_1 = arith.constant 0 : i32
    return %c0_i32, %c0_i32_0 : i32, i32
  }
  func.func @transform_2(%arg0: i32) -> (i32, i32, i32, i32) {
    %c0_i32 = arith.constant 0 : i32
    %c0_i32_0 = arith.constant 0 : i32
    %c0_i32_1 = arith.constant 0 : i32
    %c0_i32_2 = arith.constant 0 : i32
    %c0_i32_3 = arith.constant 0 : i32
    return %c0_i32, %c0_i32_0, %c0_i32_1, %c0_i32_2 : i32, i32, i32, i32
  }
  func.func @transform_3(%arg0: i32) -> (i32, i32, i32) {
    %c0_i32 = arith.constant 0 : i32
    %c0_i32_0 = arith.constant 0 : i32
    %c0_i32_1 = arith.constant 0 : i32
    %c0_i32_2 = arith.constant 0 : i32
    return %c0_i32, %c0_i32_0, %c0_i32_1 : i32, i32, i32
  }
  func.func @transform_4(%arg0: i32) -> (i32, i32, i32, i32) {
    %c0_i32 = arith.constant 0 : i32
    %c0_i32_0 = arith.constant 0 : i32
    %c0_i32_1 = arith.constant 0 : i32
    %c0_i32_2 = arith.constant 0 : i32
    return %arg0, %c0_i32, %c0_i32_0, %c0_i32_1 : i32, i32, i32, i32
  }
}

</mosaic_0001>

<llo_original>
// kernel: inception_block_a.1
$region0: #{inception_block_a.1}
  #allocation0 [shape = 'u32[]', space=smem, size = 0x4, offset = 0x4, fixed_abs, tag = 'smem constant byte address 0x4 - core index']
  #allocation1 [shape = 'u32[144,128]{1,0:T(1,128)}', space=vmem, size = 0x12000, scoped, tag = 'internal scratch']
  #allocation2 [shape = 'f32[1,10,10,128]{3,2,1,0:T(8,128)}', space=vmem, size = 0x14000, scoped, tag = 'scratch operand']
  %s0 = inlined_call_operand.hbm [shape: f32[2,8,8,256], index: 0, kind: input, shape index: {}]
  %s1 = inlined_call_operand.hbm [shape: bf16[256,128], index: 1, kind: input, shape index: {}]
  %s2 = inlined_call_operand.hbm [shape: bf16[2,3,384,128], index: 2, kind: input, shape index: {}]
  %s3 = inlined_call_operand.hbm [shape: bf16[3,384,256], index: 3, kind: input, shape index: {}]
  %s4 = inlined_call_operand.hbm [shape: f32[2,8,8,256], index: 4, kind: output, shape index: {}]
  %s5 = sld [smem:[#allocation0]]
  $region65: #{inception_block_a.1} parent=0
    _
  %s7 = ssub.s32 1, %s5
  %s8 = scalar_select 0, %s7, %s5
  $region1: #{inception_block_a.1} parent=0
    #allocation3 [shape = 'u8[131072]{0}', space=vmem, size = 0x20000, scoped, tag = 'input window, operand 0']
    #allocation4 [shape = 's32[2]{0}', space=sflag, size = 0x8, scoped, tag = 'scoped memory for inception_block_a.1']
    #allocation5 [shape = 's32[2]{0}', space=sflag, size = 0x8, scoped, tag = 'scoped memory for inception_block_a.1']
    #allocation6 [shape = 'u8[65536]{0}', space=vmem, size = 0x10000, scoped, tag = 'input window, operand 1, single buffered']
    #allocation7 [shape = 's32[1]{0}', space=sflag, size = 0x4, scoped, tag = 'scoped memory for inception_block_a.1']
    #allocation8 [shape = 'u8[589824]{0}', space=vmem, size = 0x90000, scoped, tag = 'input window, operand 2, single buffered']
    #allocation9 [shape = 'u8[589824]{0}', space=vmem, size = 0x90000, scoped, tag = 'input window, operand 3, single buffered']
    #allocation10 [shape = 's32[1]{0}', space=sflag, size = 0x4, scoped, tag = 'scoped memory for inception_block_a.1']
    #allocation11 [shape = 'u8[131072]{0}', space=vmem, size = 0x20000, scoped, tag = 'output window, operand 0']
    %9 = vsyncpa [#allocation4], 0
    %s10 = scalar_lea.sflag [#allocation4], 1
    %11 = vsyncpa %s10, 0
    %12 = vsyncpa [#allocation7], 0
    %13 = vsyncpa [#allocation10], 0
    %14 = vsyncpa [#allocation5], 0
    %s15 = scalar_lea.sflag [#allocation5], 1
    %16 = vsyncpa %s15, 0
    loop: start=0, step=1, limit=4
    $region2: #{inception_block_a.1} parent=1 // loop_pre_header
      _
    $region3: #{inception_block_a.1} parent=1 // loop_header
      %s18 = sphi 0, %s22
      %p19 = scmp.ge.s32.totalorder %s18, 4
      %s28 = sphi 0, %s30
      %s31 = sphi 0, %s28
      %s32 = sphi 0, %s31
      %s48 = sphi 0, %s32
      %s52 = sphi 0, %s52
      %s54 = sphi 0, %s52
      %s55 = sphi 0, %s54
      %s69 = sphi 0, %s55
      %s73 = sphi 0, %s73
      %s75 = sphi 0, %s73
      %s76 = sphi 0, %s75
      %s90 = sphi 0, %s76
      %s94 = sphi 0, %s94
      %s96 = sphi 0, %s94
      %s97 = sphi 0, %s96
      %s111 = sphi 0, %s97
      %s117 = sphi 0, %s119
      %s120 = sphi 0, %s117
      %s121 = sphi 0, %s120
      %s137 = sphi 0, %s121
    $region4: #{inception_block_a.1} parent=1 // loop_header_branch
      %21 = sbr.rel (%p19) target = $region8
    $region5: #{inception_block_a.1} parent=1 // loop_body
      %s23 = ssub.s32 %s18, 1
      %s24 = ssub.s32 %s18, 2
      %s25 = sadd.s32 %s18, 1
      %s26 = ssub.s32 %s18, %s25
      %p27 = scmp.eq.s32.totalorder %s26, 0
      %s29 = sadd.s32 %s28, 1
      %s30 = scalar_select %p27, %s28, %s29
      %p33 = pneg %p27
      %p34 = scmp.eq.s32.totalorder %s18, 1
      %p35 = por %p33, %p34
      %p36 = scmp.ne.s32.totalorder %s28, %s31
      %p37 = scmp.eq.s32.totalorder %s18, 0
      %p38 = por %p36, %p37
      %p39 = scmp.ne.s32.totalorder %s28, %s31
      %p40 = scmp.eq.s32.totalorder %s23, 1
      %p41 = por %p39, %p40
      %p42 = scmp.ne.s32.totalorder %s31, %s32
      %p43 = scmp.eq.s32.totalorder %s23, 0
      %p44 = por %p42, %p43
      %p45 = scmp.ne.s32.totalorder %s31, %s32
      %p46 = scmp.eq.s32.totalorder %s24, 1
      %p47 = por %p45, %p46
      %p49 = scmp.ne.s32.totalorder %s32, %s48
      %p50 = scmp.eq.s32.totalorder %s24, 0
      %p51 = por %p49, %p50
      %s53 = sadd.s32 %s52, 1
      %p56 = scmp.eq.s32.totalorder %s18, 1
      %p57 = scmp.ne.s32.totalorder %s52, %s54
      %p58 = scmp.eq.s32.totalorder %s18, 0
      %p59 = por %p57, %p58
      %p60 = scmp.ne.s32.totalorder %s52, %s54
      %p61 = scmp.eq.s32.totalorder %s23, 1
      %p62 = por %p60, %p61
      %p63 = scmp.ne.s32.totalorder %s54, %s55
      %p64 = scmp.eq.s32.totalorder %s23, 0
      %p65 = por %p63, %p64
      %p66 = scmp.ne.s32.totalorder %s54, %s55
      %p67 = scmp.eq.s32.totalorder %s24, 1
      %p68 = por %p66, %p67
      %p70 = scmp.ne.s32.totalorder %s55, %s69
      %p71 = scmp.eq.s32.totalorder %s24, 0
      %p72 = por %p70, %p71
      %s74 = sadd.s32 %s73, 1
      %p77 = scmp.eq.s32.totalorder %s18, 1
      %p78 = scmp.ne.s32.totalorder %s73, %s75
      %p79 = scmp.eq.s32.totalorder %s18, 0
      %p80 = por %p78, %p79
      %p81 = scmp.ne.s32.totalorder %s73, %s75
      %p82 = scmp.eq.s32.totalorder %s23, 1
      %p83 = por %p81, %p82
      %p84 = scmp.ne.s32.totalorder %s75, %s76
      %p85 = scmp.eq.s32.totalorder %s23, 0
      %p86 = por %p84, %p85
      %p87 = scmp.ne.s32.totalorder %s75, %s76
      %p88 = scmp.eq.s32.totalorder %s24, 1
      %p89 = por %p87, %p88
      %p91 = scmp.ne.s32.totalorder %s76, %s90
      %p92 = scmp.eq.s32.totalorder %s24, 0
      %p93 = por %p91, %p92
      %s95 = sadd.s32 %s94, 1
      %p98 = scmp.eq.s32.totalorder %s18, 1
      %p99 = scmp.ne.s32.totalorder %s94, %s96
      %p100 = scmp.eq.s32.totalorder %s18, 0
      %p101 = por %p99, %p100
      %p102 = scmp.ne.s32.totalorder %s94, %s96
      %p103 = scmp.eq.s32.totalorder %s23, 1
      %p104 = por %p102, %p103
      %p105 = scmp.ne.s32.totalorder %s96, %s97
      %p106 = scmp.eq.s32.totalorder %s23, 0
      %p107 = por %p105, %p106
      %p108 = scmp.ne.s32.totalorder %s96, %s97
      %p109 = scmp.eq.s32.totalorder %s24, 1
      %p110 = por %p108, %p109
      %p112 = scmp.ne.s32.totalorder %s97, %s111
      %p113 = scmp.eq.s32.totalorder %s24, 0
      %p114 = por %p112, %p113
      %s115 = ssub.s32 %s18, %s25
      %p116 = scmp.eq.s32.totalorder %s115, 0
      %s118 = sadd.s32 %s117, 1
      %s119 = scalar_select %p116, %s117, %s118
      %p122 = pneg %p116
      %p123 = scmp.eq.s32.totalorder %s18, 1
      %p124 = por %p122, %p123
      %p125 = scmp.ne.s32.totalorder %s117, %s120
      %p126 = scmp.eq.s32.totalorder %s18, 0
      %p127 = por %p125, %p126
      %p128 = scmp.ne.s32.totalorder %s117, %s120
      %p129 = scmp.eq.s32.totalorder %s23, 1
      %p130 = por %p128, %p129
      %p131 = scmp.ne.s32.totalorder %s120, %s121
      %p132 = scmp.eq.s32.totalorder %s23, 0
      %p133 = por %p131, %p132
      %p134 = scmp.ne.s32.totalorder %s120, %s121
      %p135 = scmp.eq.s32.totalorder %s24, 1
      %p136 = por %p134, %p135
      %p138 = scmp.ne.s32.totalorder %s121, %s137
      %p139 = scmp.eq.s32.totalorder %s24, 0
      %p140 = por %p138, %p139
      %p141 = scmp.le.s32.totalorder 1, %s18
      %p142 = scmp.lt.s32.totalorder %s18, 3
      %p143 = pnand %p141, %p142
      %p144 = pneg %p143
      // Predicated region
      $region9: #{inception_block_a.1} parent=5 // pred_check
        _
      $region10: #{inception_block_a.1} parent=5 // pred_check_branch
        %146 = sbr.rel (%p143) target = $region12
      $region11: #{inception_block_a.1} parent=5 // pred_region
        %s147 = ssub.s32 %s18, 1
        // Predicated region
        $region13: #{inception_block_a.1} parent=11 // pred_check
          %p148 = pneg %p65
        $region14: #{inception_block_a.1} parent=11 // pred_check_branch
          %150 = sbr.rel (%p148) target = $region16
        $region15: #{inception_block_a.1} parent=11 // pred_region
          %s152 = ssub.s32 2048, 2048
          %153 = vsyncadd [#allocation7], %s152
          %s154 = sshll.u32 [#allocation6], 4
          %s155 = int_to_ptr.vmem [resolvable:$true] %s154
          %160 = dma.hbm_to_vmem [thread:$0]  %s1, 2048, %s155, [#allocation7], 64, 64, 4
        $region16: #{inception_block_a.1} parent=11 // pred_fallthru
          _
        // Predicated region
        $region17: #{inception_block_a.1} parent=11 // pred_check
          %p161 = pneg %p86
        $region18: #{inception_block_a.1} parent=11 // pred_check_branch
          %163 = sbr.rel (%p161) target = $region20
        $region19: #{inception_block_a.1} parent=11 // pred_region
          %s165 = ssub.s32 18432, 18432
          %166 = vsyncadd [#allocation7], %s165
          %s167 = sshll.u32 [#allocation8], 4
          %s168 = int_to_ptr.vmem [resolvable:$true] %s167
          %173 = dma.hbm_to_vmem [thread:$0]  %s2, 18432, %s168, [#allocation7], 64, 64, 4
        $region20: #{inception_block_a.1} parent=11 // pred_fallthru
          _
        // Predicated region
        $region21: #{inception_block_a.1} parent=11 // pred_check
          %p174 = pneg %p107
        $region22: #{inception_block_a.1} parent=11 // pred_check_branch
          %176 = sbr.rel (%p174) target = $region24
        $region23: #{inception_block_a.1} parent=11 // pred_region
          %s178 = ssub.s32 18432, 18432
          %179 = vsyncadd [#allocation10], %s178
          %s180 = sshll.u32 [#allocation9], 4
          %s181 = int_to_ptr.vmem [resolvable:$true] %s180
          %186 = dma.hbm_to_vmem [thread:$0]  %s3, 18432, %s181, [#allocation10], 128, 128, 8
        $region24: #{inception_block_a.1} parent=11 // pred_fallthru
          _
      $region12: #{inception_block_a.1} parent=5 // pred_fallthru
        _
      %p187 = scmp.lt.s32.totalorder %s18, 2
      // Predicated region
      $region25: #{inception_block_a.1} parent=5 // pred_check
        %p188 = pneg %p187
      $region26: #{inception_block_a.1} parent=5 // pred_check_branch
        %190 = sbr.rel (%p188) target = $region28
      $region27: #{inception_block_a.1} parent=5 // pred_region
        // Predicated region
        $region29: #{inception_block_a.1} parent=27 // pred_check
          %p191 = pneg %p38
        $region30: #{inception_block_a.1} parent=27 // pred_check_branch
          %193 = sbr.rel (%p191) target = $region32
        $region31: #{inception_block_a.1} parent=27 // pred_region
          %s194 = sand.u32 %s28, 1
          %s195 = scalar_lea.sflag [#allocation4], %s194
          %s196 = sand.u32 %s28, 1
          %s197 = smul.addr %s196, 128
          %s198 = scalar_lea.vmem [#allocation3], %s197
          %s200 = ssub.s32 2048, 2048
          %201 = vsyncadd %s195, %s200
          %s202 = smul.addr %s18, 16
          %s203 = smul.addr %s202, 128
          %s204 = scalar_lea.hbm %s0, %s203
          %s205 = sshll.u32 %s198, 4
          %s206 = int_to_ptr.vmem [resolvable:$true] %s205
          %211 = dma.hbm_to_vmem [thread:$0]  %s204, 2048, %s206, %s195, 256, 256, 16
        $region32: #{inception_block_a.1} parent=27 // pred_fallthru
          _
      $region28: #{inception_block_a.1} parent=5 // pred_fallthru
        _
      %p212 = scmp.le.s32.totalorder 1, %s18
      %p213 = scmp.lt.s32.totalorder %s18, 3
      %p214 = pnand %p212, %p213
      %p215 = pneg %p214
      // Predicated region
      $region33: #{inception_block_a.1} parent=5 // pred_check
        _
      $region34: #{inception_block_a.1} parent=5 // pred_check_branch
        %217 = sbr.rel (%p214) target = $region36
      $region35: #{inception_block_a.1} parent=5 // pred_region
        %s218 = ssub.s32 %s18, 1
        %s219 = sand.u32 %s31, 1
        %s220 = scalar_lea.sflag [#allocation4], %s219
        %s221 = sand.u32 %s31, 1
        %s222 = smul.addr %s221, 128
        %s223 = scalar_lea.vmem [#allocation3], %s222
        // Predicated region
        $region37: #{inception_block_a.1} parent=35 // pred_check
          %p224 = pneg %p44
        $region38: #{inception_block_a.1} parent=35 // pred_check_branch
          %226 = sbr.rel (%p224) target = $region40
        $region39: #{inception_block_a.1} parent=35 // pred_region
          %227 = dma.done %s220, 2048
        $region40: #{inception_block_a.1} parent=35 // pred_fallthru
          _
        // Predicated region
        $region41: #{inception_block_a.1} parent=35 // pred_check
          %p228 = pneg %p65
        $region42: #{inception_block_a.1} parent=35 // pred_check_branch
          %230 = sbr.rel (%p228) target = $region44
        $region43: #{inception_block_a.1} parent=35 // pred_region
          %231 = dma.done [#allocation7], 2048
        $region44: #{inception_block_a.1} parent=35 // pred_fallthru
          _
        // Predicated region
        $region45: #{inception_block_a.1} parent=35 // pred_check
          %p232 = pneg %p86
        $region46: #{inception_block_a.1} parent=35 // pred_check_branch
          %234 = sbr.rel (%p232) target = $region48
        $region47: #{inception_block_a.1} parent=35 // pred_region
          %235 = dma.done [#allocation7], 18432
        $region48: #{inception_block_a.1} parent=35 // pred_fallthru
          _
        // Predicated region
        $region49: #{inception_block_a.1} parent=35 // pred_check
          %p236 = pneg %p107
        $region50: #{inception_block_a.1} parent=35 // pred_check_branch
          %238 = sbr.rel (%p236) target = $region52
        $region51: #{inception_block_a.1} parent=35 // pred_region
          %239 = dma.done [#allocation10], 18432
        $region52: #{inception_block_a.1} parent=35 // pred_fallthru
          _
        %s240 = sand.u32 %s31, 1
        %s241 = scalar_lea.sflag [#allocation4], %s240
        %s242 = sand.u32 %s31, 1
        %s243 = smul.addr %s242, 128
        %s244 = scalar_lea.vmem [#allocation3], %s243
        %p245 = pneg %p44
        %p246 = pneg %p41
        %p247 = pneg %p65
        %p248 = pneg %p62
        %p249 = pneg %p86
        %p250 = pneg %p83
        %p251 = pneg %p107
        %p252 = pneg %p104
        %p253 = pneg %p133
        %p254 = pneg %p130
        %s255 = sand.u32 %s120, 1
        %s256 = scalar_lea.sflag [#allocation5], %s255
        %s257 = sand.u32 %s120, 1
        %s258 = smul.addr %s257, 128
        %s259 = scalar_lea.vmem [#allocation11], %s258
        %261 = vst [vmem:[#allocation2] sm:$0xff] 0.0
        %262 = vst [vmem:[#allocation2 + $0x8] sm:$0x3] 0.0
        %263 = vst [vmem:[#allocation2 + $0x10] sm:$0xff] 0.0
        %264 = vst [vmem:[#allocation2 + $0x18] sm:$0x3] 0.0
        %265 = vst [vmem:[#allocation2 + $0x20] sm:$0xff] 0.0
        %266 = vst [vmem:[#allocation2 + $0x28] sm:$0x3] 0.0
        %267 = vst [vmem:[#allocation2 + $0x30] sm:$0xff] 0.0
        %268 = vst [vmem:[#allocation2 + $0x38] sm:$0x3] 0.0
        %269 = vst [vmem:[#allocation2 + $0x40] sm:$0xff] 0.0
        %270 = vst [vmem:[#allocation2 + $0x48] sm:$0x3] 0.0
        %271 = vst [vmem:[#allocation2 + $0x50] sm:$0xff] 0.0
        %272 = vst [vmem:[#allocation2 + $0x58] sm:$0x3] 0.0
        %273 = vst [vmem:[#allocation2 + $0x60] sm:$0xff] 0.0
        %274 = vst [vmem:[#allocation2 + $0x68] sm:$0x3] 0.0
        %275 = vst [vmem:[#allocation2 + $0x70] sm:$0xff] 0.0
        %276 = vst [vmem:[#allocation2 + $0x78] sm:$0x3] 0.0
        %277 = vst [vmem:[#allocation2 + $0x80] sm:$0xff] 0.0
        %278 = vst [vmem:[#allocation2 + $0x88] sm:$0x3] 0.0
        %279 = vst [vmem:[#allocation2 + $0x90] sm:$0xff] 0.0
        %280 = vst [vmem:[#allocation2 + $0x98] sm:$0x3] 0.0
        %v281 = vld [vmem:[%s223] sm:$0xff]
        %v282 = vld [vmem:[%s223 + $0x8] sm:$0xff]
        %v283 = vld [vmem:[%s223 + $0x10] sm:$0xff]
        %v284 = vld [vmem:[%s223 + $0x18] sm:$0xff]
        %v285 = vld [vmem:[%s223 + $0x20] sm:$0xff]
        %v286 = vld [vmem:[%s223 + $0x28] sm:$0xff]
        %v287 = vld [vmem:[%s223 + $0x30] sm:$0xff]
        %v288 = vld [vmem:[%s223 + $0x38] sm:$0xff]
        %v289 = vld [vmem:[%s223 + $0x40] sm:$0xff]
        %v290 = vld [vmem:[%s223 + $0x48] sm:$0xff]
        %v291 = vld [vmem:[%s223 + $0x50] sm:$0xff]
        %v292 = vld [vmem:[%s223 + $0x58] sm:$0xff]
        %v293 = vld [vmem:[%s223 + $0x60] sm:$0xff]
        %v294 = vld [vmem:[%s223 + $0x68] sm:$0xff]
        %v295 = vld [vmem:[%s223 + $0x70] sm:$0xff]
        %v296 = vld [vmem:[%s223 + $0x78] sm:$0xff]
        %v297 = vpack.c.bf16 %v283, %v281
        %v298 = vpack.c.bf16 %v284, %v282
        %v299 = vpack.c.bf16 %v287, %v285
        %v300 = vpack.c.bf16 %v288, %v286
        %v301 = vpack.c.bf16 %v291, %v289
        %v302 = vpack.c.bf16 %v292, %v290
        %v303 = vpack.c.bf16 %v295, %v293
        %v304 = vpack.c.bf16 %v296, %v294
        %v305 = vld [vmem:[#allocation6] sm:$0xf]
        %v306 = vld [vmem:[#allocation6 + $0x4] sm:$0xf]
        %v307 = vld [vmem:[#allocation6 + $0x8] sm:$0xf]
        %v308 = vld [vmem:[#allocation6 + $0xc] sm:$0xf]
        %v309 = vld [vmem:[#allocation6 + $0x10] sm:$0xf]
        %v310 = vld [vmem:[#allocation6 + $0x14] sm:$0xf]
        %v311 = vld [vmem:[#allocation6 + $0x18] sm:$0xf]
        %v312 = vld [vmem:[#allocation6 + $0x1c] sm:$0xf]
        %v313 = vld [vmem:[#allocation6 + $0x20] sm:$0xf]
        %v314 = vld [vmem:[#allocation6 + $0x24] sm:$0xf]
        %v315 = vld [vmem:[#allocation6 + $0x28] sm:$0xf]
        %v316 = vld [vmem:[#allocation6 + $0x2c] sm:$0xf]
        %v317 = vld [vmem:[#allocation6 + $0x30] sm:$0xf]
        %v318 = vld [vmem:[#allocation6 + $0x34] sm:$0xf]
        %v319 = vld [vmem:[#allocation6 + $0x38] sm:$0xf]
        %v320 = vld [vmem:[#allocation6 + $0x3c] sm:$0xf]
        %v321 = vld [vmem:[#allocation6 + $0x40] sm:$0xf]
        %v322 = vld [vmem:[#allocation6 + $0x44] sm:$0xf]
        %v323 = vld [vmem:[#allocation6 + $0x48] sm:$0xf]
        %v324 = vld [vmem:[#allocation6 + $0x4c] sm:$0xf]
        %v325 = vld [vmem:[#allocation6 + $0x50] sm:$0xf]
        %v326 = vld [vmem:[#allocation6 + $0x54] sm:$0xf]
        %v327 = vld [vmem:[#allocation6 + $0x58] sm:$0xf]
        %v328 = vld [vmem:[#allocation6 + $0x5c] sm:$0xf]
        %v329 = vld [vmem:[#allocation6 + $0x60] sm:$0xf]
        %v330 = vld [vmem:[#allocation6 + $0x64] sm:$0xf]
        %v331 = vld [vmem:[#allocation6 + $0x68] sm:$0xf]
        %v332 = vld [vmem:[#allocation6 + $0x6c] sm:$0xf]
        %v333 = vld [vmem:[#allocation6 + $0x70] sm:$0xf]
        %v334 = vld [vmem:[#allocation6 + $0x74] sm:$0xf]
        %v335 = vld [vmem:[#allocation6 + $0x78] sm:$0xf]
        %v336 = vld [vmem:[#allocation6 + $0x7c] sm:$0xf]
        %v369 = vunpack.c.l.b16 %v305
        %v370 = vunpack.c.l.b16 %v306
        %v371 = vunpack.c.l.b16 %v307
        %v372 = vunpack.c.l.b16 %v308
        %v373 = vunpack.c.l.b16 %v309
        %v374 = vunpack.c.l.b16 %v310
        %v375 = vunpack.c.l.b16 %v311
        %v376 = vunpack.c.l.b16 %v312
        %v377 = vunpack.c.l.b16 %v313
        %v378 = vunpack.c.l.b16 %v314
        %v379 = vunpack.c.l.b16 %v315
        %v380 = vunpack.c.l.b16 %v316
        %v381 = vunpack.c.l.b16 %v317
        %v382 = vunpack.c.l.b16 %v318
        %v383 = vunpack.c.l.b16 %v319
        %v384 = vunpack.c.l.b16 %v320
        %v385 = vunpack.c.l.b16 %v321
        %v386 = vunpack.c.l.b16 %v322
        %v387 = vunpack.c.l.b16 %v323
        %v388 = vunpack.c.l.b16 %v324
        %v389 = vunpack.c.l.b16 %v325
        %v390 = vunpack.c.l.b16 %v326
        %v391 = vunpack.c.l.b16 %v327
        %v392 = vunpack.c.l.b16 %v328
        %v393 = vunpack.c.l.b16 %v329
        %v394 = vunpack.c.l.b16 %v330
        %v395 = vunpack.c.l.b16 %v331
        %v396 = vunpack.c.l.b16 %v332
        %v397 = vunpack.c.l.b16 %v333
        %v398 = vunpack.c.l.b16 %v334
        %v399 = vunpack.c.l.b16 %v335
        %v400 = vunpack.c.l.b16 %v336
        %v401 = vpack.c.b16 %v370, %v369
        %v402 = vpack.c.b16 %v372, %v371
        %v403 = vpack.c.b16 %v374, %v373
        %v404 = vpack.c.b16 %v376, %v375
        %v405 = vpack.c.b16 %v378, %v377
        %v406 = vpack.c.b16 %v380, %v379
        %v407 = vpack.c.b16 %v382, %v381
        %v408 = vpack.c.b16 %v384, %v383
        %v409 = vpack.c.b16 %v386, %v385
        %v410 = vpack.c.b16 %v388, %v387
        %v411 = vpack.c.b16 %v390, %v389
        %v412 = vpack.c.b16 %v392, %v391
        %v413 = vpack.c.b16 %v394, %v393
        %v414 = vpack.c.b16 %v396, %v395
        %v415 = vpack.c.b16 %v398, %v397
        %v416 = vpack.c.b16 %v400, %v399
        %433 = vmatprep.subr.bf16.mxu0 0
        %434 = vmatpush1.bf16.msra.mxu0 %v401
        %435 = vmatprep.subr.bf16.mxu0 0
        %436 = vmatpush1.bf16.msra.mxu0 %v402
        %437 = vmatprep.subr.bf16.mxu0 0
        %438 = vmatpush1.bf16.msra.mxu0 %v403
        %439 = vmatprep.subr.bf16.mxu0 0
        %440 = vmatpush1.bf16.msra.mxu0 %v404
        %441 = vmatprep.subr.bf16.mxu0 0
        %442 = vmatpush1.bf16.msra.mxu0 %v405
        %443 = vmatprep.subr.bf16.mxu0 0
        %444 = vmatpush1.bf16.msra.mxu0 %v406
        %445 = vmatprep.subr.bf16.mxu0 0
        %446 = vmatpush1.bf16.msra.mxu0 %v407
        %447 = vmatprep.subr.bf16.mxu0 0
        %448 = vmatpush1.bf16.msra.mxu0 %v408
        %449 = vmatprep.subr.bf16.mxu0 0
        %450 = vmatpush1.bf16.msra.mxu0 %v409
        %451 = vmatprep.subr.bf16.mxu0 0
        %452 = vmatpush1.bf16.msra.mxu0 %v410
        %453 = vmatprep.subr.bf16.mxu0 0
        %454 = vmatpush1.bf16.msra.mxu0 %v411
        %455 = vmatprep.subr.bf16.mxu0 0
        %456 = vmatpush1.bf16.msra.mxu0 %v412
        %457 = vmatprep.subr.bf16.mxu0 0
        %458 = vmatpush1.bf16.msra.mxu0 %v413
        %459 = vmatprep.subr.bf16.mxu0 0
        %460 = vmatpush1.bf16.msra.mxu0 %v414
        %461 = vmatprep.subr.bf16.mxu0 0
        %462 = vmatpush1.bf16.msra.mxu0 %v415
        %463 = vmatprep.subr.bf16.mxu0 0
        %464 = vmatpush1.bf16.msra.mxu0 %v416
        %465 = vmatprep.mubr.bf16.mxu0 %v298
        %466 = vmatmul.mubr.bf16.gmra.mrb[0].mxu0 %v297
        %v467 = vpop.f32.mrb[0].mxu0
        %v468 = vadd.f32 0.0, %v467
        %v469 = vpop.f32.mrb[0].mxu0
        %v470 = vpop.f32.mrb[0].mxu0
        %v471 = vadd.f32 0.0, %v470
        %v472 = vpop.f32.mrb[0].mxu0
        %473 = vmatprep.mubr.bf16.mxu0 %v300
        %474 = vmatmul.mubr.bf16.gmra.mrb[0].mxu0 %v299
        %v475 = vpop.f32.mrb[0].mxu0
        %v476 = vadd.f32 0.0, %v475
        %v477 = vpop.f32.mrb[0].mxu0
        %v478 = vpop.f32.mrb[0].mxu0
        %v479 = vadd.f32 0.0, %v478
        %v480 = vpop.f32.mrb[0].mxu0
        %481 = vmatprep.mubr.bf16.mxu0 %v302
        %482 = vmatmul.mubr.bf16.gmra.mrb[0].mxu0 %v301
        %v483 = vpop.f32.mrb[0].mxu0
        %v484 = vadd.f32 0.0, %v483
        %v485 = vpop.f32.mrb[0].mxu0
        %v486 = vpop.f32.mrb[0].mxu0
        %v487 = vadd.f32 0.0, %v486
        %v488 = vpop.f32.mrb[0].mxu0
        %489 = vmatprep.mubr.bf16.mxu0 %v304
        %490 = vmatmul.mubr.bf16.gmra.mrb[0].mxu0 %v303
        %v491 = vpop.f32.mrb[0].mxu0
        %v492 = vadd.f32 0.0, %v491
        %v493 = vpop.f32.mrb[0].mxu0
        %v494 = vpop.f32.mrb[0].mxu0
        %v495 = vadd.f32 0.0, %v494
        %v496 = vpop.f32.mrb[0].mxu0
        %497 = vdwg.mxu0
        %s498 = scalar_lea.vmem [#allocation2], 16
        %499 = vst [vmem:[%s498 + $0x1] sm:$0xff] %v468
        %500 = vst [vmem:[%s498 + $0x11] sm:$0xff] %v471
        %501 = vst [vmem:[%s498 + $0x21] sm:$0xff] %v476
        %502 = vst [vmem:[%s498 + $0x31] sm:$0xff] %v479
        %503 = vst [vmem:[%s498 + $0x41] sm:$0xff] %v484
        %504 = vst [vmem:[%s498 + $0x51] sm:$0xff] %v487
        %505 = vst [vmem:[%s498 + $0x61] sm:$0xff] %v492
        %506 = vst [vmem:[%s498 + $0x71] sm:$0xff] %v495
        %v507 = vld [vmem:[#allocation2] sm:$0xff]
        %v508 = vld [vmem:[#allocation2 + $0x10] sm:$0xff]
        %v509 = vld [vmem:[#allocation2 + $0x20] sm:$0xff]
        %v510 = vld [vmem:[#allocation2 + $0x30] sm:$0xff]
        %v511 = vld [vmem:[#allocation2 + $0x40] sm:$0xff]
        %v512 = vld [vmem:[#allocation2 + $0x50] sm:$0xff]
        %v513 = vld [vmem:[#allocation2 + $0x60] sm:$0xff]
        %v514 = vld [vmem:[#allocation2 + $0x70] sm:$0xff]
        %v515 = vld [vmem:[#allocation2 + $0x1] sm:$0xff]
        %v516 = vld [vmem:[#allocation2 + $0x11] sm:$0xff]
        %v517 = vld [vmem:[#allocation2 + $0x21] sm:$0xff]
        %v518 = vld [vmem:[#allocation2 + $0x31] sm:$0xff]
        %v519 = vld [vmem:[#allocation2 + $0x41] sm:$0xff]
        %v520 = vld [vmem:[#allocation2 + $0x51] sm:$0xff]
        %v521 = vld [vmem:[#allocation2 + $0x61] sm:$0xff]
        %v522 = vld [vmem:[#allocation2 + $0x71] sm:$0xff]
        %v523 = vld [vmem:[#allocation2 + $0x2] sm:$0xff]
        %v524 = vld [vmem:[#allocation2 + $0x12] sm:$0xff]
        %v525 = vld [vmem:[#allocation2 + $0x22] sm:$0xff]
        %v526 = vld [vmem:[#allocation2 + $0x32] sm:$0xff]
        %v527 = vld [vmem:[#allocation2 + $0x42] sm:$0xff]
        %v528 = vld [vmem:[#allocation2 + $0x52] sm:$0xff]
        %v529 = vld [vmem:[#allocation2 + $0x62] sm:$0xff]
        %v530 = vld [vmem:[#allocation2 + $0x72] sm:$0xff]
        %v531 = vpack.c.bf16 %v508, %v507
        %v532 = vpack.c.bf16 %v516, %v515
        %v533 = vpack.c.bf16 %v524, %v523
        %v534 = vpack.c.bf16 %v510, %v509
        %v535 = vpack.c.bf16 %v518, %v517
        %v536 = vpack.c.bf16 %v526, %v525
        %v537 = vpack.c.bf16 %v512, %v511
        %v538 = vpack.c.bf16 %v520, %v519
        %v539 = vpack.c.bf16 %v528, %v527
        %v540 = vpack.c.bf16 %v514, %v513
        %v541 = vpack.c.bf16 %v522, %v521
        %v542 = vpack.c.bf16 %v530, %v529
        %v543 = vld [vmem:[#allocation8] sm:$0xf]
        %v544 = vld [vmem:[#allocation8 + $0x4] sm:$0xf]
        %v545 = vld [vmem:[#allocation8 + $0x8] sm:$0xf]
        %v546 = vld [vmem:[#allocation8 + $0xc] sm:$0xf]
        %v547 = vld [vmem:[#allocation8 + $0x10] sm:$0xf]
        %v548 = vld [vmem:[#allocation8 + $0x14] sm:$0xf]
        %v549 = vld [vmem:[#allocation8 + $0x18] sm:$0xf]
        %v550 = vld [vmem:[#allocation8 + $0x1c] sm:$0xf]
        %v551 = vld [vmem:[#allocation8 + $0x20] sm:$0xf]
        %v552 = vld [vmem:[#allocation8 + $0x24] sm:$0xf]
        %v553 = vld [vmem:[#allocation8 + $0x28] sm:$0xf]
        %v554 = vld [vmem:[#allocation8 + $0x2c] sm:$0xf]
        %v555 = vld [vmem:[#allocation8 + $0x30] sm:$0xf]
        %v556 = vld [vmem:[#allocation8 + $0x34] sm:$0xf]
        %v557 = vld [vmem:[#allocation8 + $0x38] sm:$0xf]
        %v558 = vld [vmem:[#allocation8 + $0x3c] sm:$0xf]
        %v559 = vld [vmem:[#allocation8 + $0x40] sm:$0xf]
        %v560 = vld [vmem:[#allocation8 + $0x44] sm:$0xf]
        %v561 = vld [vmem:[#allocation8 + $0x48] sm:$0xf]
        %v562 = vld [vmem:[#allocation8 + $0x4c] sm:$0xf]
        %v563 = vld [vmem:[#allocation8 + $0x50] sm:$0xf]
        %v564 = vld [vmem:[#allocation8 + $0x54] sm:$0xf]
        %v565 = vld [vmem:[#allocation8 + $0x58] sm:$0xf]
        %v566 = vld [vmem:[#allocation8 + $0x5c] sm:$0xf]
        %v567 = vld [vmem:[#allocation8 + $0x60] sm:$0xf]
        %v568 = vld [vmem:[#allocation8 + $0x64] sm:$0xf]
        %v569 = vld [vmem:[#allocation8 + $0x68] sm:$0xf]
        %v570 = vld [vmem:[#allocation8 + $0x6c] sm:$0xf]
        %v571 = vld [vmem:[#allocation8 + $0x70] sm:$0xf]
        %v572 = vld [vmem:[#allocation8 + $0x74] sm:$0xf]
        %v573 = vld [vmem:[#allocation8 + $0x78] sm:$0xf]
        %v574 = vld [vmem:[#allocation8 + $0x7c] sm:$0xf]
        %v575 = vld [vmem:[#allocation8 + $0x80] sm:$0xf]
        %v576 = vld [vmem:[#allocation8 + $0x84] sm:$0xf]
        %v577 = vld [vmem:[#allocation8 + $0x88] sm:$0xf]
        %v578 = vld [vmem:[#allocation8 + $0x8c] sm:$0xf]
        %v579 = vld [vmem:[#allocation8 + $0x90] sm:$0xf]
        %v580 = vld [vmem:[#allocation8 + $0x94] sm:$0xf]
        %v581 = vld [vmem:[#allocation8 + $0x98] sm:$0xf]
        %v582 = vld [vmem:[#allocation8 + $0x9c] sm:$0xf]
        %v583 = vld [vmem:[#allocation8 + $0xa0] sm:$0xf]
        %v584 = vld [vmem:[#allocation8 + $0xa4] sm:$0xf]
        %v585 = vld [vmem:[#allocation8 + $0xa8] sm:$0xf]
        %v586 = vld [vmem:[#allocation8 + $0xac] sm:$0xf]
        %v587 = vld [vmem:[#allocation8 + $0xb0] sm:$0xf]
        %v588 = vld [vmem:[#allocation8 + $0xb4] sm:$0xf]
        %v589 = vld [vmem:[#allocation8 + $0xb8] sm:$0xf]
        %v590 = vld [vmem:[#allocation8 + $0xbc] sm:$0xf]
        %v591 = vld [vmem:[%s498] sm:$0xff]
        %v592 = vld [vmem:[%s498 + $0x10] sm:$0xff]
        %v593 = vld [vmem:[%s498 + $0x20] sm:$0xff]
        %v594 = vld [vmem:[%s498 + $0x30] sm:$0xff]
        %v595 = vld [vmem:[%s498 + $0x40] sm:$0xff]
        %v596 = vld [vmem:[%s498 + $0x50] sm:$0xff]
        %v597 = vld [vmem:[%s498 + $0x60] sm:$0xff]
        %v598 = vld [vmem:[%s498 + $0x70] sm:$0xff]
        %v599 = vld [vmem:[%s498 + $0x1] sm:$0xff]
        %v600 = vld [vmem:[%s498 + $0x11] sm:$0xff]
        %v601 = vld [vmem:[%s498 + $0x21] sm:$0xff]
        %v602 = vld [vmem:[%s498 + $0x31] sm:$0xff]
        %v603 = vld [vmem:[%s498 + $0x41] sm:$0xff]
        %v604 = vld [vmem:[%s498 + $0x51] sm:$0xff]
        %v605 = vld [vmem:[%s498 + $0x61] sm:$0xff]
        %v606 = vld [vmem:[%s498 + $0x71] sm:$0xff]
        %v607 = vld [vmem:[%s498 + $0x2] sm:$0xff]
        %v608 = vld [vmem:[%s498 + $0x12] sm:$0xff]
        %v609 = vld [vmem:[%s498 + $0x22] sm:$0xff]
        %v610 = vld [vmem:[%s498 + $0x32] sm:$0xff]
        %v611 = vld [vmem:[%s498 + $0x42] sm:$0xff]
        %v612 = vld [vmem:[%s498 + $0x52] sm:$0xff]
        %v613 = vld [vmem:[%s498 + $0x62] sm:$0xff]
        %v614 = vld [vmem:[%s498 + $0x72] sm:$0xff]
        %v615 = vpack.c.bf16 %v592, %v591
        %v616 = vpack.c.bf16 %v600, %v599
        %v617 = vpack.c.bf16 %v608, %v607
        %v618 = vpack.c.bf16 %v594, %v593
        %v619 = vpack.c.bf16 %v602, %v601
        %v620 = vpack.c.bf16 %v610, %v609
        %v621 = vpack.c.bf16 %v596, %v595
        %v622 = vpack.c.bf16 %v604, %v603
        %v623 = vpack.c.bf16 %v612, %v611
        %v624 = vpack.c.bf16 %v598, %v597
        %v625 = vpack.c.bf16 %v606, %v605
        %v626 = vpack.c.bf16 %v614, %v613
        %s627 = scalar_lea.vmem [#allocation8], 192
        %v628 = vld [vmem:[%s627] sm:$0xf]
        %v629 = vld [vmem:[%s627 + $0x4] sm:$0xf]
        %v630 = vld [vmem:[%s627 + $0x8] sm:$0xf]
        %v631 = vld [vmem:[%s627 + $0xc] sm:$0xf]
        %v632 = vld [vmem:[%s627 + $0x10] sm:$0xf]
        %v633 = vld [vmem:[%s627 + $0x14] sm:$0xf]
        %v634 = vld [vmem:[%s627 + $0x18] sm:$0xf]
        %v635 = vld [vmem:[%s627 + $0x1c] sm:$0xf]
        %v636 = vld [vmem:[%s627 + $0x20] sm:$0xf]
        %v637 = vld [vmem:[%s627 + $0x24] sm:$0xf]
        %v638 = vld [vmem:[%s627 + $0x28] sm:$0xf]
        %v639 = vld [vmem:[%s627 + $0x2c] sm:$0xf]
        %v640 = vld [vmem:[%s627 + $0x30] sm:$0xf]
        %v641 = vld [vmem:[%s627 + $0x34] sm:$0xf]
        %v642 = vld [vmem:[%s627 + $0x38] sm:$0xf]
        %v643 = vld [vmem:[%s627 + $0x3c] sm:$0xf]
        %v644 = vld [vmem:[%s627 + $0x40] sm:$0xf]
        %v645 = vld [vmem:[%s627 + $0x44] sm:$0xf]
        %v646 = vld [vmem:[%s627 + $0x48] sm:$0xf]
        %v647 = vld [vmem:[%s627 + $0x4c] sm:$0xf]
        %v648 = vld [vmem:[%s627 + $0x50] sm:$0xf]
        %v649 = vld [vmem:[%s627 + $0x54] sm:$0xf]
        %v650 = vld [vmem:[%s627 + $0x58] sm:$0xf]
        %v651 = vld [vmem:[%s627 + $0x5c] sm:$0xf]
        %v652 = vld [vmem:[%s627 + $0x60] sm:$0xf]
        %v653 = vld [vmem:[%s627 + $0x64] sm:$0xf]
        %v654 = vld [vmem:[%s627 + $0x68] sm:$0xf]
        %v655 = vld [vmem:[%s627 + $0x6c] sm:$0xf]
        %v656 = vld [vmem:[%s627 + $0x70] sm:$0xf]
        %v657 = vld [vmem:[%s627 + $0x74] sm:$0xf]
        %v658 = vld [vmem:[%s627 + $0x78] sm:$0xf]
        %v659 = vld [vmem:[%s627 + $0x7c] sm:$0xf]
        %v660 = vld [vmem:[%s627 + $0x80] sm:$0xf]
        %v661 = vld [vmem:[%s627 + $0x84] sm:$0xf]
        %v662 = vld [vmem:[%s627 + $0x88] sm:$0xf]
        %v663 = vld [vmem:[%s627 + $0x8c] sm:$0xf]
        %v664 = vld [vmem:[%s627 + $0x90] sm:$0xf]
        %v665 = vld [vmem:[%s627 + $0x94] sm:$0xf]
        %v666 = vld [vmem:[%s627 + $0x98] sm:$0xf]
        %v667 = vld [vmem:[%s627 + $0x9c] sm:$0xf]
        %v668 = vld [vmem:[%s627 + $0xa0] sm:$0xf]
        %v669 = vld [vmem:[%s627 + $0xa4] sm:$0xf]
        %v670 = vld [vmem:[%s627 + $0xa8] sm:$0xf]
        %v671 = vld [vmem:[%s627 + $0xac] sm:$0xf]
        %v672 = vld [vmem:[%s627 + $0xb0] sm:$0xf]
        %v673 = vld [vmem:[%s627 + $0xb4] sm:$0xf]
        %v674 = vld [vmem:[%s627 + $0xb8] sm:$0xf]
        %v675 = vld [vmem:[%s627 + $0xbc] sm:$0xf]
        %v724 = vunpack.c.l.b16 %v628
        %v725 = vunpack.c.l.b16 %v629
        %v726 = vunpack.c.l.b16 %v630
        %v727 = vunpack.c.l.b16 %v631
        %v728 = vunpack.c.l.b16 %v632
        %v729 = vunpack.c.l.b16 %v633
        %v730 = vunpack.c.l.b16 %v634
        %v731 = vunpack.c.l.b16 %v635
        %v732 = vunpack.c.l.b16 %v636
        %v733 = vunpack.c.l.b16 %v637
        %v734 = vunpack.c.l.b16 %v638
        %v735 = vunpack.c.l.b16 %v639
        %v736 = vunpack.c.l.b16 %v640
        %v737 = vunpack.c.l.b16 %v641
        %v738 = vunpack.c.l.b16 %v642
        %v739 = vunpack.c.l.b16 %v643
        %v740 = vunpack.c.l.b16 %v644
        %v741 = vunpack.c.l.b16 %v645
        %v742 = vunpack.c.l.b16 %v646
        %v743 = vunpack.c.l.b16 %v647
        %v744 = vunpack.c.l.b16 %v648
        %v745 = vunpack.c.l.b16 %v649
        %v746 = vunpack.c.l.b16 %v650
        %v747 = vunpack.c.l.b16 %v651
        %v748 = vunpack.c.l.b16 %v652
        %v749 = vunpack.c.l.b16 %v653
        %v750 = vunpack.c.l.b16 %v654
        %v751 = vunpack.c.l.b16 %v655
        %v752 = vunpack.c.l.b16 %v656
        %v753 = vunpack.c.l.b16 %v657
        %v754 = vunpack.c.l.b16 %v658
        %v755 = vunpack.c.l.b16 %v659
        %v756 = vunpack.c.l.b16 %v660
        %v757 = vunpack.c.l.b16 %v661
        %v758 = vunpack.c.l.b16 %v662
        %v759 = vunpack.c.l.b16 %v663
        %v760 = vunpack.c.l.b16 %v664
        %v761 = vunpack.c.l.b16 %v665
        %v762 = vunpack.c.l.b16 %v666
        %v763 = vunpack.c.l.b16 %v667
        %v764 = vunpack.c.l.b16 %v668
        %v765 = vunpack.c.l.b16 %v669
        %v766 = vunpack.c.l.b16 %v670
        %v767 = vunpack.c.l.b16 %v671
        %v768 = vunpack.c.l.b16 %v672
        %v769 = vunpack.c.l.b16 %v673
        %v770 = vunpack.c.l.b16 %v674
        %v771 = vunpack.c.l.b16 %v675
        %v772 = vpack.c.b16 %v725, %v724
        %v773 = vpack.c.b16 %v727, %v726
        %v774 = vpack.c.b16 %v729, %v728
        %v775 = vpack.c.b16 %v731, %v730
        %v776 = vpack.c.b16 %v733, %v732
        %v777 = vpack.c.b16 %v735, %v734
        %v778 = vpack.c.b16 %v737, %v736
        %v779 = vpack.c.b16 %v739, %v738
        %v780 = vpack.c.b16 %v741, %v740
        %v781 = vpack.c.b16 %v743, %v742
        %v782 = vpack.c.b16 %v745, %v744
        %v783 = vpack.c.b16 %v747, %v746
        %v784 = vpack.c.b16 %v749, %v748
        %v785 = vpack.c.b16 %v751, %v750
        %v786 = vpack.c.b16 %v753, %v752
        %v787 = vpack.c.b16 %v755, %v754
        %v788 = vpack.c.b16 %v757, %v756
        %v789 = vpack.c.b16 %v759, %v758
        %v790 = vpack.c.b16 %v761, %v760
        %v791 = vpack.c.b16 %v763, %v762
        %v792 = vpack.c.b16 %v765, %v764
        %v793 = vpack.c.b16 %v767, %v766
        %v794 = vpack.c.b16 %v769, %v768
        %v795 = vpack.c.b16 %v771, %v770
        %820 = vmatprep.subr.bf16.mxu0 0
        %821 = vmatpush1.bf16.msra.mxu0 %v772
        %822 = vmatprep.subr.bf16.mxu0 0
        %823 = vmatpush1.bf16.msra.mxu0 %v773
        %824 = vmatprep.subr.bf16.mxu0 0
        %825 = vmatpush1.bf16.msra.mxu0 %v774
        %826 = vmatprep.subr.bf16.mxu0 0
        %827 = vmatpush1.bf16.msra.mxu0 %v775
        %828 = vmatprep.subr.bf16.mxu0 0
        %829 = vmatpush1.bf16.msra.mxu0 %v776
        %830 = vmatprep.subr.bf16.mxu0 0
        %831 = vmatpush1.bf16.msra.mxu0 %v777
        %832 = vmatprep.subr.bf16.mxu0 0
        %833 = vmatpush1.bf16.msra.mxu0 %v778
        %834 = vmatprep.subr.bf16.mxu0 0
        %835 = vmatpush1.bf16.msra.mxu0 %v779
        %836 = vmatprep.subr.bf16.mxu0 0
        %837 = vmatpush1.bf16.msra.mxu0 %v780
        %838 = vmatprep.subr.bf16.mxu0 0
        %839 = vmatpush1.bf16.msra.mxu0 %v781
        %840 = vmatprep.subr.bf16.mxu0 0
        %841 = vmatpush1.bf16.msra.mxu0 %v782
        %842 = vmatprep.subr.bf16.mxu0 0
        %843 = vmatpush1.bf16.msra.mxu0 %v783
        %844 = vmatprep.subr.bf16.mxu0 0
        %845 = vmatpush1.bf16.msra.mxu0 %v784
        %846 = vmatprep.subr.bf16.mxu0 0
        %847 = vmatpush1.bf16.msra.mxu0 %v785
        %848 = vmatprep.subr.bf16.mxu0 0
        %849 = vmatpush1.bf16.msra.mxu0 %v786
        %850 = vmatprep.subr.bf16.mxu0 0
        %851 = vmatpush1.bf16.msra.mxu0 %v787
        %852 = vmatprep.mubr.bf16.mxu0 %v616
        %853 = vmatmul.mubr.bf16.gmra.mrb[0].mxu0 %v615
        %v854 = vpop.f32.mrb[0].mxu0
        %v855 = vadd.f32 0.0, %v854
        %v856 = vpop.f32.mrb[0].mxu0
        %v857 = vpop.f32.mrb[0].mxu0
        %v858 = vadd.f32 0.0, %v857
        %v859 = vpop.f32.mrb[0].mxu0
        %860 = vmatprep.mubr.bf16.mxu0 %v619
        %861 = vmatmul.mubr.bf16.gmra.mrb[0].mxu0 %v618
        %v862 = vpop.f32.mrb[0].mxu0
        %v863 = vadd.f32 0.0, %v862
        %v864 = vpop.f32.mrb[0].mxu0
        %v865 = vpop.f32.mrb[0].mxu0
        %v866 = vadd.f32 0.0, %v865
        %v867 = vpop.f32.mrb[0].mxu0
        %868 = vmatprep.mubr.bf16.mxu0 %v622
        %869 = vmatmul.mubr.bf16.gmra.mrb[0].mxu0 %v621
        %v870 = vpop.f32.mrb[0].mxu0
        %v871 = vadd.f32 0.0, %v870
        %v872 = vpop.f32.mrb[0].mxu0
        %v873 = vpop.f32.mrb[0].mxu0
        %v874 = vadd.f32 0.0, %v873
        %v875 = vpop.f32.mrb[0].mxu0
        %876 = vmatprep.mubr.bf16.mxu0 %v625
        %877 = vmatmul.mubr.bf16.gmra.mrb[0].mxu0 %v624
        %v878 = vpop.f32.mrb[0].mxu0
        %v879 = vadd.f32 0.0, %v878
        %v880 = vpop.f32.mrb[0].mxu0
        %v881 = vpop.f32.mrb[0].mxu0
        %v882 = vadd.f32 0.0, %v881
        %v883 = vpop.f32.mrb[0].mxu0
        %884 = vdwg.mxu0
        %885 = vmatprep.subr.bf16.mxu0 0
        %886 = vmatpush1.bf16.msra.mxu0 %v788
        %887 = vmatprep.subr.bf16.mxu0 0
        %888 = vmatpush1.bf16.msra.mxu0 %v789
        %889 = vmatprep.subr.bf16.mxu0 0
        %890 = vmatpush1.bf16.msra.mxu0 %v790
        %891 = vmatprep.subr.bf16.mxu0 0
        %892 = vmatpush1.bf16.msra.mxu0 %v791
        %893 = vmatprep.subr.bf16.mxu0 0
        %894 = vmatpush1.bf16.msra.mxu0 %v792
        %895 = vmatprep.subr.bf16.mxu0 0
        %896 = vmatpush1.bf16.msra.mxu0 %v793
        %897 = vmatprep.subr.bf16.mxu0 0
        %898 = vmatpush1.bf16.msra.mxu0 %v794
        %899 = vmatprep.subr.bf16.mxu0 0
        %900 = vmatpush1.bf16.msra.mxu0 %v795
        %901 = vmatprep.subr.bf16.mxu0 0
        %902 = vmatpush1.bf16.msra.mxu0 0
        %903 = vmatprep.subr.bf16.mxu0 0
        %904 = vmatpush1.bf16.msra.mxu0 0
        %905 = vmatprep.subr.bf16.mxu0 0
        %906 = vmatpush1.bf16.msra.mxu0 0
        %907 = vmatprep.subr.bf16.mxu0 0
        %908 = vmatpush1.bf16.msra.mxu0 0
        %909 = vmatprep.subr.bf16.mxu0 0
        %910 = vmatpush1.bf16.msra.mxu0 0
        %911 = vmatprep.subr.bf16.mxu0 0
        %912 = vmatpush1.bf16.msra.mxu0 0
        %913 = vmatprep.subr.bf16.mxu0 0
        %914 = vmatpush1.bf16.msra.mxu0 0
        %915 = vmatprep.subr.bf16.mxu0 0
        %916 = vmatpush1.bf16.msra.mxu0 0
        %917 = vmatprep.mubr.bf16.mxu0 0
        %918 = vmatmul.mubr.bf16.gmra.mrb[0].mxu0 %v617
        %v919 = vpop.f32.mrb[0].mxu0
        %v920 = vadd.f32 %v855, %v919
        %v921 = vpop.f32.mrb[0].mxu0
        %v922 = vpop.f32.mrb[0].mxu0
        %v923 = vadd.f32 %v858, %v922
        %v924 = vpop.f32.mrb[0].mxu0
        %925 = vmatprep.mubr.bf16.mxu0 0
        %926 = vmatmul.mubr.bf16.gmra.mrb[0].mxu0 %v620
        %v927 = vpop.f32.mrb[0].mxu0
        %v928 = vadd.f32 %v863, %v927
        %v929 = vpop.f32.mrb[0].mxu0
        %v930 = vpop.f32.mrb[0].mxu0
        %v931 = vadd.f32 %v866, %v930
        %v932 = vpop.f32.mrb[0].mxu0
        %933 = vmatprep.mubr.bf16.mxu0 0
        %934 = vmatmul.mubr.bf16.gmra.mrb[0].mxu0 %v623
        %v935 = vpop.f32.mrb[0].mxu0
        %v936 = vadd.f32 %v871, %v935
        %v937 = vpop.f32.mrb[0].mxu0
        %v938 = vpop.f32.mrb[0].mxu0
        %v939 = vadd.f32 %v874, %v938
        %v940 = vpop.f32.mrb[0].mxu0
        %941 = vmatprep.mubr.bf16.mxu0 0
        %942 = vmatmul.mubr.bf16.gmra.mrb[0].mxu0 %v626
        %v943 = vpop.f32.mrb[0].mxu0
        %v944 = vadd.f32 %v879, %v943
        %v945 = vpop.f32.mrb[0].mxu0
        %v946 = vpop.f32.mrb[0].mxu0
        %v947 = vadd.f32 %v882, %v946
        %v948 = vpop.f32.mrb[0].mxu0
        %949 = vdwg.mxu0
        %v998 = vunpack.c.l.b16 %v543
        %v999 = vunpack.c.l.b16 %v544
        %v1000 = vunpack.c.l.b16 %v545
        %v1001 = vunpack.c.l.b16 %v546
        %v1002 = vunpack.c.l.b16 %v547
        %v1003 = vunpack.c.l.b16 %v548
        %v1004 = vunpack.c.l.b16 %v549
        %v1005 = vunpack.c.l.b16 %v550
        %v1006 = vunpack.c.l.b16 %v551
        %v1007 = vunpack.c.l.b16 %v552
        %v1008 = vunpack.c.l.b16 %v553
        %v1009 = vunpack.c.l.b16 %v554
        %v1010 = vunpack.c.l.b16 %v555
        %v1011 = vunpack.c.l.b16 %v556
        %v1012 = vunpack.c.l.b16 %v557
        %v1013 = vunpack.c.l.b16 %v558
        %v1014 = vunpack.c.l.b16 %v559
        %v1015 = vunpack.c.l.b16 %v560
        %v1016 = vunpack.c.l.b16 %v561
        %v1017 = vunpack.c.l.b16 %v562
        %v1018 = vunpack.c.l.b16 %v563
        %v1019 = vunpack.c.l.b16 %v564
        %v1020 = vunpack.c.l.b16 %v565
        %v1021 = vunpack.c.l.b16 %v566
        %v1022 = vunpack.c.l.b16 %v567
        %v1023 = vunpack.c.l.b16 %v568
        %v1024 = vunpack.c.l.b16 %v569
        %v1025 = vunpack.c.l.b16 %v570
        %v1026 = vunpack.c.l.b16 %v571
        %v1027 = vunpack.c.l.b16 %v572
        %v1028 = vunpack.c.l.b16 %v573
        %v1029 = vunpack.c.l.b16 %v574
        %v1030 = vunpack.c.l.b16 %v575
        %v1031 = vunpack.c.l.b16 %v576
        %v1032 = vunpack.c.l.b16 %v577
        %v1033 = vunpack.c.l.b16 %v578
        %v1034 = vunpack.c.l.b16 %v579
        %v1035 = vunpack.c.l.b16 %v580
        %v1036 = vunpack.c.l.b16 %v581
        %v1037 = vunpack.c.l.b16 %v582
        %v1038 = vunpack.c.l.b16 %v583
        %v1039 = vunpack.c.l.b16 %v584
        %v1040 = vunpack.c.l.b16 %v585
        %v1041 = vunpack.c.l.b16 %v586
        %v1042 = vunpack.c.l.b16 %v587
        %v1043 = vunpack.c.l.b16 %v588
        %v1044 = vunpack.c.l.b16 %v589
        %v1045 = vunpack.c.l.b16 %v590
        %v1046 = vpack.c.b16 %v999, %v998
        %v1047 = vpack.c.b16 %v1001, %v1000
        %v1048 = vpack.c.b16 %v1003, %v1002
        %v1049 = vpack.c.b16 %v1005, %v1004
        %v1050 = vpack.c.b16 %v1007, %v1006
        %v1051 = vpack.c.b16 %v1009, %v1008
        %v1052 = vpack.c.b16 %v1011, %v1010
        %v1053 = vpack.c.b16 %v1013, %v1012
        %v1054 = vpack.c.b16 %v1015, %v1014
        %v1055 = vpack.c.b16 %v1017, %v1016
        %v1056 = vpack.c.b16 %v1019, %v1018
        %v1057 = vpack.c.b16 %v1021, %v1020
        %v1058 = vpack.c.b16 %v1023, %v1022
        %v1059 = vpack.c.b16 %v1025, %v1024
        %v1060 = vpack.c.b16 %v1027, %v1026
        %v1061 = vpack.c.b16 %v1029, %v1028
        %v1062 = vpack.c.b16 %v1031, %v1030
        %v1063 = vpack.c.b16 %v1033, %v1032
        %v1064 = vpack.c.b16 %v1035, %v1034
        %v1065 = vpack.c.b16 %v1037, %v1036
        %v1066 = vpack.c.b16 %v1039, %v1038
        %v1067 = vpack.c.b16 %v1041, %v1040
        %v1068 = vpack.c.b16 %v1043, %v1042
        %v1069 = vpack.c.b16 %v1045, %v1044
        %1094 = vmatprep.subr.bf16.mxu0 0
        %1095 = vmatpush1.bf16.msra.mxu0 %v1046
        %1096 = vmatprep.subr.bf16.mxu0 0
        %1097 = vmatpush1.bf16.msra.mxu0 %v1047
        %1098 = vmatprep.subr.bf16.mxu0 0
        %1099 = vmatpush1.bf16.msra.mxu0 %v1048
        %1100 = vmatprep.subr.bf16.mxu0 0
        %1101 = vmatpush1.bf16.msra.mxu0 %v1049
        %1102 = vmatprep.subr.bf16.mxu0 0
        %1103 = vmatpush1.bf16.msra.mxu0 %v1050
        %1104 = vmatprep.subr.bf16.mxu0 0
        %1105 = vmatpush1.bf16.msra.mxu0 %v1051
        %1106 = vmatprep.subr.bf16.mxu0 0
        %1107 = vmatpush1.bf16.msra.mxu0 %v1052
        %1108 = vmatprep.subr.bf16.mxu0 0
        %1109 = vmatpush1.bf16.msra.mxu0 %v1053
        %1110 = vmatprep.subr.bf16.mxu0 0
        %1111 = vmatpush1.bf16.msra.mxu0 %v1054
        %1112 = vmatprep.subr.bf16.mxu0 0
        %1113 = vmatpush1.bf16.msra.mxu0 %v1055
        %1114 = vmatprep.subr.bf16.mxu0 0
        %1115 = vmatpush1.bf16.msra.mxu0 %v1056
        %1116 = vmatprep.subr.bf16.mxu0 0
        %1117 = vmatpush1.bf16.msra.mxu0 %v1057
        %1118 = vmatprep.subr.bf16.mxu0 0
        %1119 = vmatpush1.bf16.msra.mxu0 %v1058
        %1120 = vmatprep.subr.bf16.mxu0 0
        %1121 = vmatpush1.bf16.msra.mxu0 %v1059
        %1122 = vmatprep.subr.bf16.mxu0 0
        %1123 = vmatpush1.bf16.msra.mxu0 %v1060
        %1124 = vmatprep.subr.bf16.mxu0 0
        %1125 = vmatpush1.bf16.msra.mxu0 %v1061
        %1126 = vmatprep.mubr.bf16.mxu0 %v532
        %1127 = vmatmul.mubr.bf16.gmra.mrb[0].mxu0 %v531
        %v1128 = vpop.f32.mrb[0].mxu0
        %v1129 = vadd.f32 %v920, %v1128
        %v1130 = vpop.f32.mrb[0].mxu0
        %v1131 = vpop.f32.mrb[0].mxu0
        %v1132 = vadd.f32 %v923, %v1131
        %v1133 = vpop.f32.mrb[0].mxu0
        %1134 = vmatprep.mubr.bf16.mxu0 %v535
        %1135 = vmatmul.mubr.bf16.gmra.mrb[0].mxu0 %v534
        %v1136 = vpop.f32.mrb[0].mxu0
        %v1137 = vadd.f32 %v928, %v1136
        %v1138 = vpop.f32.mrb[0].mxu0
        %v1139 = vpop.f32.mrb[0].mxu0
        %v1140 = vadd.f32 %v931, %v1139
        %v1141 = vpop.f32.mrb[0].mxu0
        %1142 = vmatprep.mubr.bf16.mxu0 %v538
        %1143 = vmatmul.mubr.bf16.gmra.mrb[0].mxu0 %v537
        %v1144 = vpop.f32.mrb[0].mxu0
        %v1145 = vadd.f32 %v936, %v1144
        %v1146 = vpop.f32.mrb[0].mxu0
        %v1147 = vpop.f32.mrb[0].mxu0
        %v1148 = vadd.f32 %v939, %v1147
        %v1149 = vpop.f32.mrb[0].mxu0
        %1150 = vmatprep.mubr.bf16.mxu0 %v541
        %1151 = vmatmul.mubr.bf16.gmra.mrb[0].mxu0 %v540
        %v1152 = vpop.f32.mrb[0].mxu0
        %v1153 = vadd.f32 %v944, %v1152
        %v1154 = vpop.f32.mrb[0].mxu0
        %v1155 = vpop.f32.mrb[0].mxu0
        %v1156 = vadd.f32 %v947, %v1155
        %v1157 = vpop.f32.mrb[0].mxu0
        %1158 = vdwg.mxu0
        %1159 = vmatprep.subr.bf16.mxu0 0
        %1160 = vmatpush1.bf16.msra.mxu0 %v1062
        %1161 = vmatprep.subr.bf16.mxu0 0
        %1162 = vmatpush1.bf16.msra.mxu0 %v1063
        %1163 = vmatprep.subr.bf16.mxu0 0
        %1164 = vmatpush1.bf16.msra.mxu0 %v1064
        %1165 = vmatprep.subr.bf16.mxu0 0
        %1166 = vmatpush1.bf16.msra.mxu0 %v1065
        %1167 = vmatprep.subr.bf16.mxu0 0
        %1168 = vmatpush1.bf16.msra.mxu0 %v1066
        %1169 = vmatprep.subr.bf16.mxu0 0
        %1170 = vmatpush1.bf16.msra.mxu0 %v1067
        %1171 = vmatprep.subr.bf16.mxu0 0
        %1172 = vmatpush1.bf16.msra.mxu0 %v1068
        %1173 = vmatprep.subr.bf16.mxu0 0
        %1174 = vmatpush1.bf16.msra.mxu0 %v1069
        %1175 = vmatprep.subr.bf16.mxu0 0
        %1176 = vmatpush1.bf16.msra.mxu0 0
        %1177 = vmatprep.subr.bf16.mxu0 0
        %1178 = vmatpush1.bf16.msra.mxu0 0
        %1179 = vmatprep.subr.bf16.mxu0 0
        %1180 = vmatpush1.bf16.msra.mxu0 0
        %1181 = vmatprep.subr.bf16.mxu0 0
        %1182 = vmatpush1.bf16.msra.mxu0 0
        %1183 = vmatprep.subr.bf16.mxu0 0
        %1184 = vmatpush1.bf16.msra.mxu0 0
        %1185 = vmatprep.subr.bf16.mxu0 0
        %1186 = vmatpush1.bf16.msra.mxu0 0
        %1187 = vmatprep.subr.bf16.mxu0 0
        %1188 = vmatpush1.bf16.msra.mxu0 0
        %1189 = vmatprep.subr.bf16.mxu0 0
        %1190 = vmatpush1.bf16.msra.mxu0 0
        %1191 = vmatprep.mubr.bf16.mxu0 0
        %1192 = vmatmul.mubr.bf16.gmra.mrb[0].mxu0 %v533
        %v1193 = vpop.f32.mrb[0].mxu0
        %v1194 = vadd.f32 %v1129, %v1193
        %v1195 = vpop.f32.mrb[0].mxu0
        %v1196 = vpop.f32.mrb[0].mxu0
        %v1197 = vadd.f32 %v1132, %v1196
        %v1198 = vpop.f32.mrb[0].mxu0
        %1199 = vmatprep.mubr.bf16.mxu0 0
        %1200 = vmatmul.mubr.bf16.gmra.mrb[0].mxu0 %v536
        %v1201 = vpop.f32.mrb[0].mxu0
        %v1202 = vadd.f32 %v1137, %v1201
        %v1203 = vpop.f32.mrb[0].mxu0
        %v1204 = vpop.f32.mrb[0].mxu0
        %v1205 = vadd.f32 %v1140, %v1204
        %v1206 = vpop.f32.mrb[0].mxu0
        %1207 = vmatprep.mubr.bf16.mxu0 0
        %1208 = vmatmul.mubr.bf16.gmra.mrb[0].mxu0 %v539
        %v1209 = vpop.f32.mrb[0].mxu0
        %v1210 = vadd.f32 %v1145, %v1209
        %v1211 = vpop.f32.mrb[0].mxu0
        %v1212 = vpop.f32.mrb[0].mxu0
        %v1213 = vadd.f32 %v1148, %v1212
        %v1214 = vpop.f32.mrb[0].mxu0
        %1215 = vmatprep.mubr.bf16.mxu0 0
        %1216 = vmatmul.mubr.bf16.gmra.mrb[0].mxu0 %v542
        %v1217 = vpop.f32.mrb[0].mxu0
        %v1218 = vadd.f32 %v1153, %v1217
        %v1219 = vpop.f32.mrb[0].mxu0
        %v1220 = vpop.f32.mrb[0].mxu0
        %v1221 = vadd.f32 %v1156, %v1220
        %v1222 = vpop.f32.mrb[0].mxu0
        %1223 = vdwg.mxu0
        %s1224 = scalar_lea.vmem [#allocation2], 32
        %v1225 = vld [vmem:[%s1224] sm:$0xff]
        %v1226 = vld [vmem:[%s1224 + $0x10] sm:$0xff]
        %v1227 = vld [vmem:[%s1224 + $0x20] sm:$0xff]
        %v1228 = vld [vmem:[%s1224 + $0x30] sm:$0xff]
        %v1229 = vld [vmem:[%s1224 + $0x40] sm:$0xff]
        %v1230 = vld [vmem:[%s1224 + $0x50] sm:$0xff]
        %v1231 = vld [vmem:[%s1224 + $0x60] sm:$0xff]
        %v1232 = vld [vmem:[%s1224 + $0x70] sm:$0xff]
        %v1233 = vld [vmem:[%s1224 + $0x1] sm:$0xff]
        %v1234 = vld [vmem:[%s1224 + $0x11] sm:$0xff]
        %v1235 = vld [vmem:[%s1224 + $0x21] sm:$0xff]
        %v1236 = vld [vmem:[%s1224 + $0x31] sm:$0xff]
        %v1237 = vld [vmem:[%s1224 + $0x41] sm:$0xff]
        %v1238 = vld [vmem:[%s1224 + $0x51] sm:$0xff]
        %v1239 = vld [vmem:[%s1224 + $0x61] sm:$0xff]
        %v1240 = vld [vmem:[%s1224 + $0x71] sm:$0xff]
        %v1241 = vld [vmem:[%s1224 + $0x2] sm:$0xff]
        %v1242 = vld [vmem:[%s1224 + $0x12] sm:$0xff]
        %v1243 = vld [vmem:[%s1224 + $0x22] sm:$0xff]
        %v1244 = vld [vmem:[%s1224 + $0x32] sm:$0xff]
        %v1245 = vld [vmem:[%s1224 + $0x42] sm:$0xff]
        %v1246 = vld [vmem:[%s1224 + $0x52] sm:$0xff]
        %v1247 = vld [vmem:[%s1224 + $0x62] sm:$0xff]
        %v1248 = vld [vmem:[%s1224 + $0x72] sm:$0xff]
        %v1249 = vpack.c.bf16 %v1226, %v1225
        %v1250 = vpack.c.bf16 %v1234, %v1233
        %v1251 = vpack.c.bf16 %v1242, %v1241
        %v1252 = vpack.c.bf16 %v1228, %v1227
        %v1253 = vpack.c.bf16 %v1236, %v1235
        %v1254 = vpack.c.bf16 %v1244, %v1243
        %v1255 = vpack.c.bf16 %v1230, %v1229
        %v1256 = vpack.c.bf16 %v1238, %v1237
        %v1257 = vpack.c.bf16 %v1246, %v1245
        %v1258 = vpack.c.bf16 %v1232, %v1231
        %v1259 = vpack.c.bf16 %v1240, %v1239
        %v1260 = vpack.c.bf16 %v1248, %v1247
        %s1261 = scalar_lea.vmem [#allocation8], 384
        %v1262 = vld [vmem:[%s1261] sm:$0xf]
        %v1263 = vld [vmem:[%s1261 + $0x4] sm:$0xf]
        %v1264 = vld [vmem:[%s1261 + $0x8] sm:$0xf]
        %v1265 = vld [vmem:[%s1261 + $0xc] sm:$0xf]
        %v1266 = vld [vmem:[%s1261 + $0x10] sm:$0xf]
        %v1267 = vld [vmem:[%s1261 + $0x14] sm:$0xf]
        %v1268 = vld [vmem:[%s1261 + $0x18] sm:$0xf]
        %v1269 = vld [vmem:[%s1261 + $0x1c] sm:$0xf]
        %v1270 = vld [vmem:[%s1261 + $0x20] sm:$0xf]
        %v1271 = vld [vmem:[%s1261 + $0x24] sm:$0xf]
        %v1272 = vld [vmem:[%s1261 + $0x28] sm:$0xf]
        %v1273 = vld [vmem:[%s1261 + $0x2c] sm:$0xf]
        %v1274 = vld [vmem:[%s1261 + $0x30] sm:$0xf]
        %v1275 = vld [vmem:[%s1261 + $0x34] sm:$0xf]
        %v1276 = vld [vmem:[%s1261 + $0x38] sm:$0xf]
        %v1277 = vld [vmem:[%s1261 + $0x3c] sm:$0xf]
        %v1278 = vld [vmem:[%s1261 + $0x40] sm:$0xf]
        %v1279 = vld [vmem:[%s1261 + $0x44] sm:$0xf]
        %v1280 = vld [vmem:[%s1261 + $0x48] sm:$0xf]
        %v1281 = vld [vmem:[%s1261 + $0x4c] sm:$0xf]
        %v1282 = vld [vmem:[%s1261 + $0x50] sm:$0xf]
        %v1283 = vld [vmem:[%s1261 + $0x54] sm:$0xf]
        %v1284 = vld [vmem:[%s1261 + $0x58] sm:$0xf]
        %v1285 = vld [vmem:[%s1261 + $0x5c] sm:$0xf]
        %v1286 = vld [vmem:[%s1261 + $0x60] sm:$0xf]
        %v1287 = vld [vmem:[%s1261 + $0x64] sm:$0xf]
        %v1288 = vld [vmem:[%s1261 + $0x68] sm:$0xf]
        %v1289 = vld [vmem:[%s1261 + $0x6c] sm:$0xf]
        %v1290 = vld [vmem:[%s1261 + $0x70] sm:$0xf]
        %v1291 = vld [vmem:[%s1261 + $0x74] sm:$0xf]
        %v1292 = vld [vmem:[%s1261 + $0x78] sm:$0xf]
        %v1293 = vld [vmem:[%s1261 + $0x7c] sm:$0xf]
        %v1294 = vld [vmem:[%s1261 + $0x80] sm:$0xf]
        %v1295 = vld [vmem:[%s1261 + $0x84] sm:$0xf]
        %v1296 = vld [vmem:[%s1261 + $0x88] sm:$0xf]
        %v1297 = vld [vmem:[%s1261 + $0x8c] sm:$0xf]
        %v1298 = vld [vmem:[%s1261 + $0x90] sm:$0xf]
        %v1299 = vld [vmem:[%s1261 + $0x94] sm:$0xf]
        %v1300 = vld [vmem:[%s1261 + $0x98] sm:$0xf]
        %v1301 = vld [vmem:[%s1261 + $0x9c] sm:$0xf]
        %v1302 = vld [vmem:[%s1261 + $0xa0] sm:$0xf]
        %v1303 = vld [vmem:[%s1261 + $0xa4] sm:$0xf]
        %v1304 = vld [vmem:[%s1261 + $0xa8] sm:$0xf]
        %v1305 = vld [vmem:[%s1261 + $0xac] sm:$0xf]
        %v1306 = vld [vmem:[%s1261 + $0xb0] sm:$0xf]
        %v1307 = vld [vmem:[%s1261 + $0xb4] sm:$0xf]
        %v1308 = vld [vmem:[%s1261 + $0xb8] sm:$0xf]
        %v1309 = vld [vmem:[%s1261 + $0xbc] sm:$0xf]
        %v1358 = vunpack.c.l.b16 %v1262
        %v1359 = vunpack.c.l.b16 %v1263
        %v1360 = vunpack.c.l.b16 %v1264
        %v1361 = vunpack.c.l.b16 %v1265
        %v1362 = vunpack.c.l.b16 %v1266
        %v1363 = vunpack.c.l.b16 %v1267
        %v1364 = vunpack.c.l.b16 %v1268
        %v1365 = vunpack.c.l.b16 %v1269
        %v1366 = vunpack.c.l.b16 %v1270
        %v1367 = vunpack.c.l.b16 %v1271
        %v1368 = vunpack.c.l.b16 %v1272
        %v1369 = vunpack.c.l.b16 %v1273
        %v1370 = vunpack.c.l.b16 %v1274
        %v1371 = vunpack.c.l.b16 %v1275
        %v1372 = vunpack.c.l.b16 %v1276
        %v1373 = vunpack.c.l.b16 %v1277
        %v1374 = vunpack.c.l.b16 %v1278
        %v1375 = vunpack.c.l.b16 %v1279
        %v1376 = vunpack.c.l.b16 %v1280
        %v1377 = vunpack.c.l.b16 %v1281
        %v1378 = vunpack.c.l.b16 %v1282
        %v1379 = vunpack.c.l.b16 %v1283
        %v1380 = vunpack.c.l.b16 %v1284
        %v1381 = vunpack.c.l.b16 %v1285
        %v1382 = vunpack.c.l.b16 %v1286
        %v1383 = vunpack.c.l.b16 %v1287
        %v1384 = vunpack.c.l.b16 %v1288
        %v1385 = vunpack.c.l.b16 %v1289
        %v1386 = vunpack.c.l.b16 %v1290
        %v1387 = vunpack.c.l.b16 %v1291
        %v1388 = vunpack.c.l.b16 %v1292
        %v1389 = vunpack.c.l.b16 %v1293
        %v1390 = vunpack.c.l.b16 %v1294
        %v1391 = vunpack.c.l.b16 %v1295
        %v1392 = vunpack.c.l.b16 %v1296
        %v1393 = vunpack.c.l.b16 %v1297
        %v1394 = vunpack.c.l.b16 %v1298
        %v1395 = vunpack.c.l.b16 %v1299
        %v1396 = vunpack.c.l.b16 %v1300
        %v1397 = vunpack.c.l.b16 %v1301
        %v1398 = vunpack.c.l.b16 %v1302
        %v1399 = vunpack.c.l.b16 %v1303
        %v1400 = vunpack.c.l.b16 %v1304
        %v1401 = vunpack.c.l.b16 %v1305
        %v1402 = vunpack.c.l.b16 %v1306
        %v1403 = vunpack.c.l.b16 %v1307
        %v1404 = vunpack.c.l.b16 %v1308
        %v1405 = vunpack.c.l.b16 %v1309
        %v1406 = vpack.c.b16 %v1359, %v1358
        %v1407 = vpack.c.b16 %v1361, %v1360
        %v1408 = vpack.c.b16 %v1363, %v1362
        %v1409 = vpack.c.b16 %v1365, %v1364
        %v1410 = vpack.c.b16 %v1367, %v1366
        %v1411 = vpack.c.b16 %v1369, %v1368
        %v1412 = vpack.c.b16 %v1371, %v1370
        %v1413 = vpack.c.b16 %v1373, %v1372
        %v1414 = vpack.c.b16 %v1375, %v1374
        %v1415 = vpack.c.b16 %v1377, %v1376
        %v1416 = vpack.c.b16 %v1379, %v1378
        %v1417 = vpack.c.b16 %v1381, %v1380
        %v1418 = vpack.c.b16 %v1383, %v1382
        %v1419 = vpack.c.b16 %v1385, %v1384
        %v1420 = vpack.c.b16 %v1387, %v1386
        %v1421 = vpack.c.b16 %v1389, %v1388
        %v1422 = vpack.c.b16 %v1391, %v1390
        %v1423 = vpack.c.b16 %v1393, %v1392
        %v1424 = vpack.c.b16 %v1395, %v1394
        %v1425 = vpack.c.b16 %v1397, %v1396
        %v1426 = vpack.c.b16 %v1399, %v1398
        %v1427 = vpack.c.b16 %v1401, %v1400
        %v1428 = vpack.c.b16 %v1403, %v1402
        %v1429 = vpack.c.b16 %v1405, %v1404
        %1454 = vmatprep.subr.bf16.mxu0 0
        %1455 = vmatpush1.bf16.msra.mxu0 %v1406
        %1456 = vmatprep.subr.bf16.mxu0 0
        %1457 = vmatpush1.bf16.msra.mxu0 %v1407
        %1458 = vmatprep.subr.bf16.mxu0 0
        %1459 = vmatpush1.bf16.msra.mxu0 %v1408
        %1460 = vmatprep.subr.bf16.mxu0 0
        %1461 = vmatpush1.bf16.msra.mxu0 %v1409
        %1462 = vmatprep.subr.bf16.mxu0 0
        %1463 = vmatpush1.bf16.msra.mxu0 %v1410
        %1464 = vmatprep.subr.bf16.mxu0 0
        %1465 = vmatpush1.bf16.msra.mxu0 %v1411
        %1466 = vmatprep.subr.bf16.mxu0 0
        %1467 = vmatpush1.bf16.msra.mxu0 %v1412
        %1468 = vmatprep.subr.bf16.mxu0 0
        %1469 = vmatpush1.bf16.msra.mxu0 %v1413
        %1470 = vmatprep.subr.bf16.mxu0 0
        %1471 = vmatpush1.bf16.msra.mxu0 %v1414
        %1472 = vmatprep.subr.bf16.mxu0 0
        %1473 = vmatpush1.bf16.msra.mxu0 %v1415
        %1474 = vmatprep.subr.bf16.mxu0 0
        %1475 = vmatpush1.bf16.msra.mxu0 %v1416
        %1476 = vmatprep.subr.bf16.mxu0 0
        %1477 = vmatpush1.bf16.msra.mxu0 %v1417
        %1478 = vmatprep.subr.bf16.mxu0 0
        %1479 = vmatpush1.bf16.msra.mxu0 %v1418
        %1480 = vmatprep.subr.bf16.mxu0 0
        %1481 = vmatpush1.bf16.msra.mxu0 %v1419
        %1482 = vmatprep.subr.bf16.mxu0 0
        %1483 = vmatpush1.bf16.msra.mxu0 %v1420
        %1484 = vmatprep.subr.bf16.mxu0 0
        %1485 = vmatpush1.bf16.msra.mxu0 %v1421
        %1486 = vmatprep.mubr.bf16.mxu0 %v1250
        %1487 = vmatmul.mubr.bf16.gmra.mrb[0].mxu0 %v1249
        %v1488 = vpop.f32.mrb[0].mxu0
        %v1489 = vadd.f32 0.0, %v1488
        %v1490 = vpop.f32.mrb[0].mxu0
        %v1491 = vpop.f32.mrb[0].mxu0
        %v1492 = vadd.f32 0.0, %v1491
        %v1493 = vpop.f32.mrb[0].mxu0
        %1494 = vmatprep.mubr.bf16.mxu0 %v1253
        %1495 = vmatmul.mubr.bf16.gmra.mrb[0].mxu0 %v1252
        %v1496 = vpop.f32.mrb[0].mxu0
        %v1497 = vadd.f32 0.0, %v1496
        %v1498 = vpop.f32.mrb[0].mxu0
        %v1499 = vpop.f32.mrb[0].mxu0
        %v1500 = vadd.f32 0.0, %v1499
        %v1501 = vpop.f32.mrb[0].mxu0
        %1502 = vmatprep.mubr.bf16.mxu0 %v1256
        %1503 = vmatmul.mubr.bf16.gmra.mrb[0].mxu0 %v1255
        %v1504 = vpop.f32.mrb[0].mxu0
        %v1505 = vadd.f32 0.0, %v1504
        %v1506 = vpop.f32.mrb[0].mxu0
        %v1507 = vpop.f32.mrb[0].mxu0
        %v1508 = vadd.f32 0.0, %v1507
        %v1509 = vpop.f32.mrb[0].mxu0
        %1510 = vmatprep.mubr.bf16.mxu0 %v1259
        %1511 = vmatmul.mubr.bf16.gmra.mrb[0].mxu0 %v1258
        %v1512 = vpop.f32.mrb[0].mxu0
        %v1513 = vadd.f32 0.0, %v1512
        %v1514 = vpop.f32.mrb[0].mxu0
        %v1515 = vpop.f32.mrb[0].mxu0
        %v1516 = vadd.f32 0.0, %v1515
        %v1517 = vpop.f32.mrb[0].mxu0
        %1518 = vdwg.mxu0
        %1519 = vmatprep.subr.bf16.mxu0 0
        %1520 = vmatpush1.bf16.msra.mxu0 %v1422
        %1521 = vmatprep.subr.bf16.mxu0 0
        %1522 = vmatpush1.bf16.msra.mxu0 %v1423
        %1523 = vmatprep.subr.bf16.mxu0 0
        %1524 = vmatpush1.bf16.msra.mxu0 %v1424
        %1525 = vmatprep.subr.bf16.mxu0 0
        %1526 = vmatpush1.bf16.msra.mxu0 %v1425
        %1527 = vmatprep.subr.bf16.mxu0 0
        %1528 = vmatpush1.bf16.msra.mxu0 %v1426
        %1529 = vmatprep.subr.bf16.mxu0 0
        %1530 = vmatpush1.bf16.msra.mxu0 %v1427
        %1531 = vmatprep.subr.bf16.mxu0 0
        %1532 = vmatpush1.bf16.msra.mxu0 %v1428
        %1533 = vmatprep.subr.bf16.mxu0 0
        %1534 = vmatpush1.bf16.msra.mxu0 %v1429
        %1535 = vmatprep.subr.bf16.mxu0 0
        %1536 = vmatpush1.bf16.msra.mxu0 0
        %1537 = vmatprep.subr.bf16.mxu0 0
        %1538 = vmatpush1.bf16.msra.mxu0 0
        %1539 = vmatprep.subr.bf16.mxu0 0
        %1540 = vmatpush1.bf16.msra.mxu0 0
        %1541 = vmatprep.subr.bf16.mxu0 0
        %1542 = vmatpush1.bf16.msra.mxu0 0
        %1543 = vmatprep.subr.bf16.mxu0 0
        %1544 = vmatpush1.bf16.msra.mxu0 0
        %1545 = vmatprep.subr.bf16.mxu0 0
        %1546 = vmatpush1.bf16.msra.mxu0 0
        %1547 = vmatprep.subr.bf16.mxu0 0
        %1548 = vmatpush1.bf16.msra.mxu0 0
        %1549 = vmatprep.subr.bf16.mxu0 0
        %1550 = vmatpush1.bf16.msra.mxu0 0
        %1551 = vmatprep.mubr.bf16.mxu0 0
        %1552 = vmatmul.mubr.bf16.gmra.mrb[0].mxu0 %v1251
        %v1553 = vpop.f32.mrb[0].mxu0
        %v1554 = vadd.f32 %v1489, %v1553
        %v1555 = vpop.f32.mrb[0].mxu0
        %v1556 = vpop.f32.mrb[0].mxu0
        %v1557 = vadd.f32 %v1492, %v1556
        %v1558 = vpop.f32.mrb[0].mxu0
        %1559 = vmatprep.mubr.bf16.mxu0 0
        %1560 = vmatmul.mubr.bf16.gmra.mrb[0].mxu0 %v1254
        %v1561 = vpop.f32.mrb[0].mxu0
        %v1562 = vadd.f32 %v1497, %v1561
        %v1563 = vpop.f32.mrb[0].mxu0
        %v1564 = vpop.f32.mrb[0].mxu0
        %v1565 = vadd.f32 %v1500, %v1564
        %v1566 = vpop.f32.mrb[0].mxu0
        %1567 = vmatprep.mubr.bf16.mxu0 0
        %1568 = vmatmul.mubr.bf16.gmra.mrb[0].mxu0 %v1257
        %v1569 = vpop.f32.mrb[0].mxu0
        %v1570 = vadd.f32 %v1505, %v1569
        %v1571 = vpop.f32.mrb[0].mxu0
        %v1572 = vpop.f32.mrb[0].mxu0
        %v1573 = vadd.f32 %v1508, %v1572
        %v1574 = vpop.f32.mrb[0].mxu0
        %1575 = vmatprep.mubr.bf16.mxu0 0
        %1576 = vmatmul.mubr.bf16.gmra.mrb[0].mxu0 %v1260
        %v1577 = vpop.f32.mrb[0].mxu0
        %v1578 = vadd.f32 %v1513, %v1577
        %v1579 = vpop.f32.mrb[0].mxu0
        %v1580 = vpop.f32.mrb[0].mxu0
        %v1581 = vadd.f32 %v1516, %v1580
        %v1582 = vpop.f32.mrb[0].mxu0
        %1583 = vdwg.mxu0
        %v1584 = vadd.f32 %v1194, %v1554
        %v1585 = vadd.f32 %v1197, %v1557
        %v1586 = vadd.f32 %v1202, %v1562
        %v1587 = vadd.f32 %v1205, %v1565
        %v1588 = vadd.f32 %v1210, %v1570
        %v1589 = vadd.f32 %v1213, %v1573
        %v1590 = vadd.f32 %v1218, %v1578
        %v1591 = vadd.f32 %v1221, %v1581
        %1592 = vst [vmem:[%s498 + $0x1] sm:$0xff] %v1584
        %1593 = vst [vmem:[%s498 + $0x11] sm:$0xff] %v1585
        %1594 = vst [vmem:[%s498 + $0x21] sm:$0xff] %v1586
        %1595 = vst [vmem:[%s498 + $0x31] sm:$0xff] %v1587
        %1596 = vst [vmem:[%s498 + $0x41] sm:$0xff] %v1588
        %1597 = vst [vmem:[%s498 + $0x51] sm:$0xff] %v1589
        %1598 = vst [vmem:[%s498 + $0x61] sm:$0xff] %v1590
        %1599 = vst [vmem:[%s498 + $0x71] sm:$0xff] %v1591
        %v1600 = vld [vmem:[#allocation2] sm:$0xff]
        %v1601 = vld [vmem:[#allocation2 + $0x10] sm:$0xff]
        %v1602 = vld [vmem:[#allocation2 + $0x20] sm:$0xff]
        %v1603 = vld [vmem:[#allocation2 + $0x30] sm:$0xff]
        %v1604 = vld [vmem:[#allocation2 + $0x40] sm:$0xff]
        %v1605 = vld [vmem:[#allocation2 + $0x50] sm:$0xff]
        %v1606 = vld [vmem:[#allocation2 + $0x60] sm:$0xff]
        %v1607 = vld [vmem:[#allocation2 + $0x70] sm:$0xff]
        %v1608 = vld [vmem:[#allocation2 + $0x1] sm:$0xff]
        %v1609 = vld [vmem:[#allocation2 + $0x11] sm:$0xff]
        %v1610 = vld [vmem:[#allocation2 + $0x21] sm:$0xff]
        %v1611 = vld [vmem:[#allocation2 + $0x31] sm:$0xff]
        %v1612 = vld [vmem:[#allocation2 + $0x41] sm:$0xff]
        %v1613 = vld [vmem:[#allocation2 + $0x51] sm:$0xff]
        %v1614 = vld [vmem:[#allocation2 + $0x61] sm:$0xff]
        %v1615 = vld [vmem:[#allocation2 + $0x71] sm:$0xff]
        %v1616 = vld [vmem:[#allocation2 + $0x2] sm:$0xff]
        %v1617 = vld [vmem:[#allocation2 + $0x12] sm:$0xff]
        %v1618 = vld [vmem:[#allocation2 + $0x22] sm:$0xff]
        %v1619 = vld [vmem:[#allocation2 + $0x32] sm:$0xff]
        %v1620 = vld [vmem:[#allocation2 + $0x42] sm:$0xff]
        %v1621 = vld [vmem:[#allocation2 + $0x52] sm:$0xff]
        %v1622 = vld [vmem:[#allocation2 + $0x62] sm:$0xff]
        %v1623 = vld [vmem:[#allocation2 + $0x72] sm:$0xff]
        %v1624 = vpack.c.bf16 %v1601, %v1600
        %v1625 = vpack.c.bf16 %v1609, %v1608
        %v1626 = vpack.c.bf16 %v1617, %v1616
        %v1627 = vpack.c.bf16 %v1603, %v1602
        %v1628 = vpack.c.bf16 %v1611, %v1610
        %v1629 = vpack.c.bf16 %v1619, %v1618
        %v1630 = vpack.c.bf16 %v1605, %v1604
        %v1631 = vpack.c.bf16 %v1613, %v1612
        %v1632 = vpack.c.bf16 %v1621, %v1620
        %v1633 = vpack.c.bf16 %v1607, %v1606
        %v1634 = vpack.c.bf16 %v1615, %v1614
        %v1635 = vpack.c.bf16 %v1623, %v1622
        %s1636 = scalar_lea.vmem [#allocation8], 576
        %v1637 = vld [vmem:[%s1636] sm:$0xf]
        %v1638 = vld [vmem:[%s1636 + $0x4] sm:$0xf]
        %v1639 = vld [vmem:[%s1636 + $0x8] sm:$0xf]
        %v1640 = vld [vmem:[%s1636 + $0xc] sm:$0xf]
        %v1641 = vld [vmem:[%s1636 + $0x10] sm:$0xf]
        %v1642 = vld [vmem:[%s1636 + $0x14] sm:$0xf]
        %v1643 = vld [vmem:[%s1636 + $0x18] sm:$0xf]
        %v1644 = vld [vmem:[%s1636 + $0x1c] sm:$0xf]
        %v1645 = vld [vmem:[%s1636 + $0x20] sm:$0xf]
        %v1646 = vld [vmem:[%s1636 + $0x24] sm:$0xf]
        %v1647 = vld [vmem:[%s1636 + $0x28] sm:$0xf]
        %v1648 = vld [vmem:[%s1636 + $0x2c] sm:$0xf]
        %v1649 = vld [vmem:[%s1636 + $0x30] sm:$0xf]
        %v1650 = vld [vmem:[%s1636 + $0x34] sm:$0xf]
        %v1651 = vld [vmem:[%s1636 + $0x38] sm:$0xf]
        %v1652 = vld [vmem:[%s1636 + $0x3c] sm:$0xf]
        %v1653 = vld [vmem:[%s1636 + $0x40] sm:$0xf]
        %v1654 = vld [vmem:[%s1636 + $0x44] sm:$0xf]
        %v1655 = vld [vmem:[%s1636 + $0x48] sm:$0xf]
        %v1656 = vld [vmem:[%s1636 + $0x4c] sm:$0xf]
        %v1657 = vld [vmem:[%s1636 + $0x50] sm:$0xf]
        %v1658 = vld [vmem:[%s1636 + $0x54] sm:$0xf]
        %v1659 = vld [vmem:[%s1636 + $0x58] sm:$0xf]
        %v1660 = vld [vmem:[%s1636 + $0x5c] sm:$0xf]
        %v1661 = vld [vmem:[%s1636 + $0x60] sm:$0xf]
        %v1662 = vld [vmem:[%s1636 + $0x64] sm:$0xf]
        %v1663 = vld [vmem:[%s1636 + $0x68] sm:$0xf]
        %v1664 = vld [vmem:[%s1636 + $0x6c] sm:$0xf]
        %v1665 = vld [vmem:[%s1636 + $0x70] sm:$0xf]
        %v1666 = vld [vmem:[%s1636 + $0x74] sm:$0xf]
        %v1667 = vld [vmem:[%s1636 + $0x78] sm:$0xf]
        %v1668 = vld [vmem:[%s1636 + $0x7c] sm:$0xf]
        %v1669 = vld [vmem:[%s1636 + $0x80] sm:$0xf]
        %v1670 = vld [vmem:[%s1636 + $0x84] sm:$0xf]
        %v1671 = vld [vmem:[%s1636 + $0x88] sm:$0xf]
        %v1672 = vld [vmem:[%s1636 + $0x8c] sm:$0xf]
        %v1673 = vld [vmem:[%s1636 + $0x90] sm:$0xf]
        %v1674 = vld [vmem:[%s1636 + $0x94] sm:$0xf]
        %v1675 = vld [vmem:[%s1636 + $0x98] sm:$0xf]
        %v1676 = vld [vmem:[%s1636 + $0x9c] sm:$0xf]
        %v1677 = vld [vmem:[%s1636 + $0xa0] sm:$0xf]
        %v1678 = vld [vmem:[%s1636 + $0xa4] sm:$0xf]
        %v1679 = vld [vmem:[%s1636 + $0xa8] sm:$0xf]
        %v1680 = vld [vmem:[%s1636 + $0xac] sm:$0xf]
        %v1681 = vld [vmem:[%s1636 + $0xb0] sm:$0xf]
        %v1682 = vld [vmem:[%s1636 + $0xb4] sm:$0xf]
        %v1683 = vld [vmem:[%s1636 + $0xb8] sm:$0xf]
        %v1684 = vld [vmem:[%s1636 + $0xbc] sm:$0xf]
        %v1685 = vld [vmem:[%s498] sm:$0xff]
        %v1686 = vld [vmem:[%s498 + $0x10] sm:$0xff]
        %v1687 = vld [vmem:[%s498 + $0x20] sm:$0xff]
        %v1688 = vld [vmem:[%s498 + $0x30] sm:$0xff]
        %v1689 = vld [vmem:[%s498 + $0x40] sm:$0xff]
        %v1690 = vld [vmem:[%s498 + $0x50] sm:$0xff]
        %v1691 = vld [vmem:[%s498 + $0x60] sm:$0xff]
        %v1692 = vld [vmem:[%s498 + $0x70] sm:$0xff]
        %v1693 = vld [vmem:[%s498 + $0x1] sm:$0xff]
        %v1694 = vld [vmem:[%s498 + $0x11] sm:$0xff]
        %v1695 = vld [vmem:[%s498 + $0x21] sm:$0xff]
        %v1696 = vld [vmem:[%s498 + $0x31] sm:$0xff]
        %v1697 = vld [vmem:[%s498 + $0x41] sm:$0xff]
        %v1698 = vld [vmem:[%s498 + $0x51] sm:$0xff]
        %v1699 = vld [vmem:[%s498 + $0x61] sm:$0xff]
        %v1700 = vld [vmem:[%s498 + $0x71] sm:$0xff]
        %v1701 = vld [vmem:[%s498 + $0x2] sm:$0xff]
        %v1702 = vld [vmem:[%s498 + $0x12] sm:$0xff]
        %v1703 = vld [vmem:[%s498 + $0x22] sm:$0xff]
        %v1704 = vld [vmem:[%s498 + $0x32] sm:$0xff]
        %v1705 = vld [vmem:[%s498 + $0x42] sm:$0xff]
        %v1706 = vld [vmem:[%s498 + $0x52] sm:$0xff]
        %v1707 = vld [vmem:[%s498 + $0x62] sm:$0xff]
        %v1708 = vld [vmem:[%s498 + $0x72] sm:$0xff]
        %v1709 = vpack.c.bf16 %v1686, %v1685
        %v1710 = vpack.c.bf16 %v1694, %v1693
        %v1711 = vpack.c.bf16 %v1702, %v1701
        %v1712 = vpack.c.bf16 %v1688, %v1687
        %v1713 = vpack.c.bf16 %v1696, %v1695
        %v1714 = vpack.c.bf16 %v1704, %v1703
        %v1715 = vpack.c.bf16 %v1690, %v1689
        %v1716 = vpack.c.bf16 %v1698, %v1697
        %v1717 = vpack.c.bf16 %v1706, %v1705
        %v1718 = vpack.c.bf16 %v1692, %v1691
        %v1719 = vpack.c.bf16 %v1700, %v1699
        %v1720 = vpack.c.bf16 %v1708, %v1707
        %s1721 = scalar_lea.vmem [#allocation8], 768
        %v1722 = vld [vmem:[%s1721] sm:$0xf]
        %v1723 = vld [vmem:[%s1721 + $0x4] sm:$0xf]
        %v1724 = vld [vmem:[%s1721 + $0x8] sm:$0xf]
        %v1725 = vld [vmem:[%s1721 + $0xc] sm:$0xf]
        %v1726 = vld [vmem:[%s1721 + $0x10] sm:$0xf]
        %v1727 = vld [vmem:[%s1721 + $0x14] sm:$0xf]
        %v1728 = vld [vmem:[%s1721 + $0x18] sm:$0xf]
        %v1729 = vld [vmem:[%s1721 + $0x1c] sm:$0xf]
        %v1730 = vld [vmem:[%s1721 + $0x20] sm:$0xf]
        %v1731 = vld [vmem:[%s1721 + $0x24] sm:$0xf]
        %v1732 = vld [vmem:[%s1721 + $0x28] sm:$0xf]
        %v1733 = vld [vmem:[%s1721 + $0x2c] sm:$0xf]
        %v1734 = vld [vmem:[%s1721 + $0x30] sm:$0xf]
        %v1735 = vld [vmem:[%s1721 + $0x34] sm:$0xf]
        %v1736 = vld [vmem:[%s1721 + $0x38] sm:$0xf]
        %v1737 = vld [vmem:[%s1721 + $0x3c] sm:$0xf]
        %v1738 = vld [vmem:[%s1721 + $0x40] sm:$0xf]
        %v1739 = vld [vmem:[%s1721 + $0x44] sm:$0xf]
        %v1740 = vld [vmem:[%s1721 + $0x48] sm:$0xf]
        %v1741 = vld [vmem:[%s1721 + $0x4c] sm:$0xf]
        %v1742 = vld [vmem:[%s1721 + $0x50] sm:$0xf]
        %v1743 = vld [vmem:[%s1721 + $0x54] sm:$0xf]
        %v1744 = vld [vmem:[%s1721 + $0x58] sm:$0xf]
        %v1745 = vld [vmem:[%s1721 + $0x5c] sm:$0xf]
        %v1746 = vld [vmem:[%s1721 + $0x60] sm:$0xf]
        %v1747 = vld [vmem:[%s1721 + $0x64] sm:$0xf]
        %v1748 = vld [vmem:[%s1721 + $0x68] sm:$0xf]
        %v1749 = vld [vmem:[%s1721 + $0x6c] sm:$0xf]
        %v1750 = vld [vmem:[%s1721 + $0x70] sm:$0xf]
        %v1751 = vld [vmem:[%s1721 + $0x74] sm:$0xf]
        %v1752 = vld [vmem:[%s1721 + $0x78] sm:$0xf]
        %v1753 = vld [vmem:[%s1721 + $0x7c] sm:$0xf]
        %v1754 = vld [vmem:[%s1721 + $0x80] sm:$0xf]
        %v1755 = vld [vmem:[%s1721 + $0x84] sm:$0xf]
        %v1756 = vld [vmem:[%s1721 + $0x88] sm:$0xf]
        %v1757 = vld [vmem:[%s1721 + $0x8c] sm:$0xf]
        %v1758 = vld [vmem:[%s1721 + $0x90] sm:$0xf]
        %v1759 = vld [vmem:[%s1721 + $0x94] sm:$0xf]
        %v1760 = vld [vmem:[%s1721 + $0x98] sm:$0xf]
        %v1761 = vld [vmem:[%s1721 + $0x9c] sm:$0xf]
        %v1762 = vld [vmem:[%s1721 + $0xa0] sm:$0xf]
        %v1763 = vld [vmem:[%s1721 + $0xa4] sm:$0xf]
        %v1764 = vld [vmem:[%s1721 + $0xa8] sm:$0xf]
        %v1765 = vld [vmem:[%s1721 + $0xac] sm:$0xf]
        %v1766 = vld [vmem:[%s1721 + $0xb0] sm:$0xf]
        %v1767 = vld [vmem:[%s1721 + $0xb4] sm:$0xf]
        %v1768 = vld [vmem:[%s1721 + $0xb8] sm:$0xf]
        %v1769 = vld [vmem:[%s1721 + $0xbc] sm:$0xf]
        %v1818 = vunpack.c.l.b16 %v1722
        %v1819 = vunpack.c.l.b16 %v1723
        %v1820 = vunpack.c.l.b16 %v1724
        %v1821 = vunpack.c.l.b16 %v1725
        %v1822 = vunpack.c.l.b16 %v1726
        %v1823 = vunpack.c.l.b16 %v1727
        %v1824 = vunpack.c.l.b16 %v1728
        %v1825 = vunpack.c.l.b16 %v1729
        %v1826 = vunpack.c.l.b16 %v1730
        %v1827 = vunpack.c.l.b16 %v1731
        %v1828 = vunpack.c.l.b16 %v1732
        %v1829 = vunpack.c.l.b16 %v1733
        %v1830 = vunpack.c.l.b16 %v1734
        %v1831 = vunpack.c.l.b16 %v1735
        %v1832 = vunpack.c.l.b16 %v1736
        %v1833 = vunpack.c.l.b16 %v1737
        %v1834 = vunpack.c.l.b16 %v1738
        %v1835 = vunpack.c.l.b16 %v1739
        %v1836 = vunpack.c.l.b16 %v1740
        %v1837 = vunpack.c.l.b16 %v1741
        %v1838 = vunpack.c.l.b16 %v1742
        %v1839 = vunpack.c.l.b16 %v1743
        %v1840 = vunpack.c.l.b16 %v1744
        %v1841 = vunpack.c.l.b16 %v1745
        %v1842 = vunpack.c.l.b16 %v1746
        %v1843 = vunpack.c.l.b16 %v1747
        %v1844 = vunpack.c.l.b16 %v1748
        %v1845 = vunpack.c.l.b16 %v1749
        %v1846 = vunpack.c.l.b16 %v1750
        %v1847 = vunpack.c.l.b16 %v1751
        %v1848 = vunpack.c.l.b16 %v1752
        %v1849 = vunpack.c.l.b16 %v1753
        %v1850 = vunpack.c.l.b16 %v1754
        %v1851 = vunpack.c.l.b16 %v1755
        %v1852 = vunpack.c.l.b16 %v1756
        %v1853 = vunpack.c.l.b16 %v1757
        %v1854 = vunpack.c.l.b16 %v1758
        %v1855 = vunpack.c.l.b16 %v1759
        %v1856 = vunpack.c.l.b16 %v1760
        %v1857 = vunpack.c.l.b16 %v1761
        %v1858 = vunpack.c.l.b16 %v1762
        %v1859 = vunpack.c.l.b16 %v1763
        %v1860 = vunpack.c.l.b16 %v1764
        %v1861 = vunpack.c.l.b16 %v1765
        %v1862 = vunpack.c.l.b16 %v1766
        %v1863 = vunpack.c.l.b16 %v1767
        %v1864 = vunpack.c.l.b16 %v1768
        %v1865 = vunpack.c.l.b16 %v1769
        %v1866 = vpack.c.b16 %v1819, %v1818
        %v1867 = vpack.c.b16 %v1821, %v1820
        %v1868 = vpack.c.b16 %v1823, %v1822
        %v1869 = vpack.c.b16 %v1825, %v1824
        %v1870 = vpack.c.b16 %v1827, %v1826
        %v1871 = vpack.c.b16 %v1829, %v1828
        %v1872 = vpack.c.b16 %v1831, %v1830
        %v1873 = vpack.c.b16 %v1833, %v1832
        %v1874 = vpack.c.b16 %v1835, %v1834
        %v1875 = vpack.c.b16 %v1837, %v1836
        %v1876 = vpack.c.b16 %v1839, %v1838
        %v1877 = vpack.c.b16 %v1841, %v1840
        %v1878 = vpack.c.b16 %v1843, %v1842
        %v1879 = vpack.c.b16 %v1845, %v1844
        %v1880 = vpack.c.b16 %v1847, %v1846
        %v1881 = vpack.c.b16 %v1849, %v1848
        %v1882 = vpack.c.b16 %v1851, %v1850
        %v1883 = vpack.c.b16 %v1853, %v1852
        %v1884 = vpack.c.b16 %v1855, %v1854
        %v1885 = vpack.c.b16 %v1857, %v1856
        %v1886 = vpack.c.b16 %v1859, %v1858
        %v1887 = vpack.c.b16 %v1861, %v1860
        %v1888 = vpack.c.b16 %v1863, %v1862
        %v1889 = vpack.c.b16 %v1865, %v1864
        %1914 = vmatprep.subr.bf16.mxu0 0
        %1915 = vmatpush1.bf16.msra.mxu0 %v1866
        %1916 = vmatprep.subr.bf16.mxu0 0
        %1917 = vmatpush1.bf16.msra.mxu0 %v1867
        %1918 = vmatprep.subr.bf16.mxu0 0
        %1919 = vmatpush1.bf16.msra.mxu0 %v1868
        %1920 = vmatprep.subr.bf16.mxu0 0
        %1921 = vmatpush1.bf16.msra.mxu0 %v1869
        %1922 = vmatprep.subr.bf16.mxu0 0
        %1923 = vmatpush1.bf16.msra.mxu0 %v1870
        %1924 = vmatprep.subr.bf16.mxu0 0
        %1925 = vmatpush1.bf16.msra.mxu0 %v1871
        %1926 = vmatprep.subr.bf16.mxu0 0
        %1927 = vmatpush1.bf16.msra.mxu0 %v1872
        %1928 = vmatprep.subr.bf16.mxu0 0
        %1929 = vmatpush1.bf16.msra.mxu0 %v1873
        %1930 = vmatprep.subr.bf16.mxu0 0
        %1931 = vmatpush1.bf16.msra.mxu0 %v1874
        %1932 = vmatprep.subr.bf16.mxu0 0
        %1933 = vmatpush1.bf16.msra.mxu0 %v1875
        %1934 = vmatprep.subr.bf16.mxu0 0
        %1935 = vmatpush1.bf16.msra.mxu0 %v1876
        %1936 = vmatprep.subr.bf16.mxu0 0
        %1937 = vmatpush1.bf16.msra.mxu0 %v1877
        %1938 = vmatprep.subr.bf16.mxu0 0
        %1939 = vmatpush1.bf16.msra.mxu0 %v1878
        %1940 = vmatprep.subr.bf16.mxu0 0
        %1941 = vmatpush1.bf16.msra.mxu0 %v1879
        %1942 = vmatprep.subr.bf16.mxu0 0
        %1943 = vmatpush1.bf16.msra.mxu0 %v1880
        %1944 = vmatprep.subr.bf16.mxu0 0
        %1945 = vmatpush1.bf16.msra.mxu0 %v1881
        %1946 = vmatprep.mubr.bf16.mxu0 %v1710
        %1947 = vmatmul.mubr.bf16.gmra.mrb[0].mxu0 %v1709
        %v1948 = vpop.f32.mrb[0].mxu0
        %v1949 = vadd.f32 0.0, %v1948
        %v1950 = vpop.f32.mrb[0].mxu0
        %v1951 = vpop.f32.mrb[0].mxu0
        %v1952 = vadd.f32 0.0, %v1951
        %v1953 = vpop.f32.mrb[0].mxu0
        %1954 = vmatprep.mubr.bf16.mxu0 %v1713
        %1955 = vmatmul.mubr.bf16.gmra.mrb[0].mxu0 %v1712
        %v1956 = vpop.f32.mrb[0].mxu0
        %v1957 = vadd.f32 0.0, %v1956
        %v1958 = vpop.f32.mrb[0].mxu0
        %v1959 = vpop.f32.mrb[0].mxu0
        %v1960 = vadd.f32 0.0, %v1959
        %v1961 = vpop.f32.mrb[0].mxu0
        %1962 = vmatprep.mubr.bf16.mxu0 %v1716
        %1963 = vmatmul.mubr.bf16.gmra.mrb[0].mxu0 %v1715
        %v1964 = vpop.f32.mrb[0].mxu0
        %v1965 = vadd.f32 0.0, %v1964
        %v1966 = vpop.f32.mrb[0].mxu0
        %v1967 = vpop.f32.mrb[0].mxu0
        %v1968 = vadd.f32 0.0, %v1967
        %v1969 = vpop.f32.mrb[0].mxu0
        %1970 = vmatprep.mubr.bf16.mxu0 %v1719
        %1971 = vmatmul.mubr.bf16.gmra.mrb[0].mxu0 %v1718
        %v1972 = vpop.f32.mrb[0].mxu0
        %v1973 = vadd.f32 0.0, %v1972
        %v1974 = vpop.f32.mrb[0].mxu0
        %v1975 = vpop.f32.mrb[0].mxu0
        %v1976 = vadd.f32 0.0, %v1975
        %v1977 = vpop.f32.mrb[0].mxu0
        %1978 = vdwg.mxu0
        %1979 = vmatprep.subr.bf16.mxu0 0
        %1980 = vmatpush1.bf16.msra.mxu0 %v1882
        %1981 = vmatprep.subr.bf16.mxu0 0
        %1982 = vmatpush1.bf16.msra.mxu0 %v1883
        %1983 = vmatprep.subr.bf16.mxu0 0
        %1984 = vmatpush1.bf16.msra.mxu0 %v1884
        %1985 = vmatprep.subr.bf16.mxu0 0
        %1986 = vmatpush1.bf16.msra.mxu0 %v1885
        %1987 = vmatprep.subr.bf16.mxu0 0
        %1988 = vmatpush1.bf16.msra.mxu0 %v1886
        %1989 = vmatprep.subr.bf16.mxu0 0
        %1990 = vmatpush1.bf16.msra.mxu0 %v1887
        %1991 = vmatprep.subr.bf16.mxu0 0
        %1992 = vmatpush1.bf16.msra.mxu0 %v1888
        %1993 = vmatprep.subr.bf16.mxu0 0
        %1994 = vmatpush1.bf16.msra.mxu0 %v1889
        %1995 = vmatprep.subr.bf16.mxu0 0
        %1996 = vmatpush1.bf16.msra.mxu0 0
        %1997 = vmatprep.subr.bf16.mxu0 0
        %1998 = vmatpush1.bf16.msra.mxu0 0
        %1999 = vmatprep.subr.bf16.mxu0 0
        %2000 = vmatpush1.bf16.msra.mxu0 0
        %2001 = vmatprep.subr.bf16.mxu0 0
        %2002 = vmatpush1.bf16.msra.mxu0 0
        %2003 = vmatprep.subr.bf16.mxu0 0
        %2004 = vmatpush1.bf16.msra.mxu0 0
        %2005 = vmatprep.subr.bf16.mxu0 0
        %2006 = vmatpush1.bf16.msra.mxu0 0
        %2007 = vmatprep.subr.bf16.mxu0 0
        %2008 = vmatpush1.bf16.msra.mxu0 0
        %2009 = vmatprep.subr.bf16.mxu0 0
        %2010 = vmatpush1.bf16.msra.mxu0 0
        %2011 = vmatprep.mubr.bf16.mxu0 0
        %2012 = vmatmul.mubr.bf16.gmra.mrb[0].mxu0 %v1711
        %v2013 = vpop.f32.mrb[0].mxu0
        %v2014 = vadd.f32 %v1949, %v2013
        %v2015 = vpop.f32.mrb[0].mxu0
        %v2016 = vpop.f32.mrb[0].mxu0
        %v2017 = vadd.f32 %v1952, %v2016
        %v2018 = vpop.f32.mrb[0].mxu0
        %2019 = vmatprep.mubr.bf16.mxu0 0
        %2020 = vmatmul.mubr.bf16.gmra.mrb[0].mxu0 %v1714
        %v2021 = vpop.f32.mrb[0].mxu0
        %v2022 = vadd.f32 %v1957, %v2021
        %v2023 = vpop.f32.mrb[0].mxu0
        %v2024 = vpop.f32.mrb[0].mxu0
        %v2025 = vadd.f32 %v1960, %v2024
        %v2026 = vpop.f32.mrb[0].mxu0
        %2027 = vmatprep.mubr.bf16.mxu0 0
        %2028 = vmatmul.mubr.bf16.gmra.mrb[0].mxu0 %v1717
        %v2029 = vpop.f32.mrb[0].mxu0
        %v2030 = vadd.f32 %v1965, %v2029
        %v2031 = vpop.f32.mrb[0].mxu0
        %v2032 = vpop.f32.mrb[0].mxu0
        %v2033 = vadd.f32 %v1968, %v2032
        %v2034 = vpop.f32.mrb[0].mxu0
        %2035 = vmatprep.mubr.bf16.mxu0 0
        %2036 = vmatmul.mubr.bf16.gmra.mrb[0].mxu0 %v1720
        %v2037 = vpop.f32.mrb[0].mxu0
        %v2038 = vadd.f32 %v1973, %v2037
        %v2039 = vpop.f32.mrb[0].mxu0
        %v2040 = vpop.f32.mrb[0].mxu0
        %v2041 = vadd.f32 %v1976, %v2040
        %v2042 = vpop.f32.mrb[0].mxu0
        %2043 = vdwg.mxu0
        %v2092 = vunpack.c.l.b16 %v1637
        %v2093 = vunpack.c.l.b16 %v1638
        %v2094 = vunpack.c.l.b16 %v1639
        %v2095 = vunpack.c.l.b16 %v1640
        %v2096 = vunpack.c.l.b16 %v1641
        %v2097 = vunpack.c.l.b16 %v1642
        %v2098 = vunpack.c.l.b16 %v1643
        %v2099 = vunpack.c.l.b16 %v1644
        %v2100 = vunpack.c.l.b16 %v1645
        %v2101 = vunpack.c.l.b16 %v1646
        %v2102 = vunpack.c.l.b16 %v1647
        %v2103 = vunpack.c.l.b16 %v1648
        %v2104 = vunpack.c.l.b16 %v1649
        %v2105 = vunpack.c.l.b16 %v1650
        %v2106 = vunpack.c.l.b16 %v1651
        %v2107 = vunpack.c.l.b16 %v1652
        %v2108 = vunpack.c.l.b16 %v1653
        %v2109 = vunpack.c.l.b16 %v1654
        %v2110 = vunpack.c.l.b16 %v1655
        %v2111 = vunpack.c.l.b16 %v1656
        %v2112 = vunpack.c.l.b16 %v1657
        %v2113 = vunpack.c.l.b16 %v1658
        %v2114 = vunpack.c.l.b16 %v1659
        %v2115 = vunpack.c.l.b16 %v1660
        %v2116 = vunpack.c.l.b16 %v1661
        %v2117 = vunpack.c.l.b16 %v1662
        %v2118 = vunpack.c.l.b16 %v1663
        %v2119 = vunpack.c.l.b16 %v1664
        %v2120 = vunpack.c.l.b16 %v1665
        %v2121 = vunpack.c.l.b16 %v1666
        %v2122 = vunpack.c.l.b16 %v1667
        %v2123 = vunpack.c.l.b16 %v1668
        %v2124 = vunpack.c.l.b16 %v1669
        %v2125 = vunpack.c.l.b16 %v1670
        %v2126 = vunpack.c.l.b16 %v1671
        %v2127 = vunpack.c.l.b16 %v1672
        %v2128 = vunpack.c.l.b16 %v1673
        %v2129 = vunpack.c.l.b16 %v1674
        %v2130 = vunpack.c.l.b16 %v1675
        %v2131 = vunpack.c.l.b16 %v1676
        %v2132 = vunpack.c.l.b16 %v1677
        %v2133 = vunpack.c.l.b16 %v1678
        %v2134 = vunpack.c.l.b16 %v1679
        %v2135 = vunpack.c.l.b16 %v1680
        %v2136 = vunpack.c.l.b16 %v1681
        %v2137 = vunpack.c.l.b16 %v1682
        %v2138 = vunpack.c.l.b16 %v1683
        %v2139 = vunpack.c.l.b16 %v1684
        %v2140 = vpack.c.b16 %v2093, %v2092
        %v2141 = vpack.c.b16 %v2095, %v2094
        %v2142 = vpack.c.b16 %v2097, %v2096
        %v2143 = vpack.c.b16 %v2099, %v2098
        %v2144 = vpack.c.b16 %v2101, %v2100
        %v2145 = vpack.c.b16 %v2103, %v2102
        %v2146 = vpack.c.b16 %v2105, %v2104
        %v2147 = vpack.c.b16 %v2107, %v2106
        %v2148 = vpack.c.b16 %v2109, %v2108
        %v2149 = vpack.c.b16 %v2111, %v2110
        %v2150 = vpack.c.b16 %v2113, %v2112
        %v2151 = vpack.c.b16 %v2115, %v2114
        %v2152 = vpack.c.b16 %v2117, %v2116
        %v2153 = vpack.c.b16 %v2119, %v2118
        %v2154 = vpack.c.b16 %v2121, %v2120
        %v2155 = vpack.c.b16 %v2123, %v2122
        %v2156 = vpack.c.b16 %v2125, %v2124
        %v2157 = vpack.c.b16 %v2127, %v2126
        %v2158 = vpack.c.b16 %v2129, %v2128
        %v2159 = vpack.c.b16 %v2131, %v2130
        %v2160 = vpack.c.b16 %v2133, %v2132
        %v2161 = vpack.c.b16 %v2135, %v2134
        %v2162 = vpack.c.b16 %v2137, %v2136
        %v2163 = vpack.c.b16 %v2139, %v2138
        %2188 = vmatprep.subr.bf16.mxu0 0
        %2189 = vmatpush1.bf16.msra.mxu0 %v2140
        %2190 = vmatprep.subr.bf16.mxu0 0
        %2191 = vmatpush1.bf16.msra.mxu0 %v2141
        %2192 = vmatprep.subr.bf16.mxu0 0
        %2193 = vmatpush1.bf16.msra.mxu0 %v2142
        %2194 = vmatprep.subr.bf16.mxu0 0
        %2195 = vmatpush1.bf16.msra.mxu0 %v2143
        %2196 = vmatprep.subr.bf16.mxu0 0
        %2197 = vmatpush1.bf16.msra.mxu0 %v2144
        %2198 = vmatprep.subr.bf16.mxu0 0
        %2199 = vmatpush1.bf16.msra.mxu0 %v2145
        %2200 = vmatprep.subr.bf16.mxu0 0
        %2201 = vmatpush1.bf16.msra.mxu0 %v2146
        %2202 = vmatprep.subr.bf16.mxu0 0
        %2203 = vmatpush1.bf16.msra.mxu0 %v2147
        %2204 = vmatprep.subr.bf16.mxu0 0
        %2205 = vmatpush1.bf16.msra.mxu0 %v2148
        %2206 = vmatprep.subr.bf16.mxu0 0
        %2207 = vmatpush1.bf16.msra.mxu0 %v2149
        %2208 = vmatprep.subr.bf16.mxu0 0
        %2209 = vmatpush1.bf16.msra.mxu0 %v2150
        %2210 = vmatprep.subr.bf16.mxu0 0
        %2211 = vmatpush1.bf16.msra.mxu0 %v2151
        %2212 = vmatprep.subr.bf16.mxu0 0
        %2213 = vmatpush1.bf16.msra.mxu0 %v2152
        %2214 = vmatprep.subr.bf16.mxu0 0
        %2215 = vmatpush1.bf16.msra.mxu0 %v2153
        %2216 = vmatprep.subr.bf16.mxu0 0
        %2217 = vmatpush1.bf16.msra.mxu0 %v2154
        %2218 = vmatprep.subr.bf16.mxu0 0
        %2219 = vmatpush1.bf16.msra.mxu0 %v2155
        %2220 = vmatprep.mubr.bf16.mxu0 %v1625
        %2221 = vmatmul.mubr.bf16.gmra.mrb[0].mxu0 %v1624
        %v2222 = vpop.f32.mrb[0].mxu0
        %v2223 = vadd.f32 %v2014, %v2222
        %v2224 = vpop.f32.mrb[0].mxu0
        %v2225 = vpop.f32.mrb[0].mxu0
        %v2226 = vadd.f32 %v2017, %v2225
        %v2227 = vpop.f32.mrb[0].mxu0
        %2228 = vmatprep.mubr.bf16.mxu0 %v1628
        %2229 = vmatmul.mubr.bf16.gmra.mrb[0].mxu0 %v1627
        %v2230 = vpop.f32.mrb[0].mxu0
        %v2231 = vadd.f32 %v2022, %v2230
        %v2232 = vpop.f32.mrb[0].mxu0
        %v2233 = vpop.f32.mrb[0].mxu0
        %v2234 = vadd.f32 %v2025, %v2233
        %v2235 = vpop.f32.mrb[0].mxu0
        %2236 = vmatprep.mubr.bf16.mxu0 %v1631
        %2237 = vmatmul.mubr.bf16.gmra.mrb[0].mxu0 %v1630
        %v2238 = vpop.f32.mrb[0].mxu0
        %v2239 = vadd.f32 %v2030, %v2238
        %v2240 = vpop.f32.mrb[0].mxu0
        %v2241 = vpop.f32.mrb[0].mxu0
        %v2242 = vadd.f32 %v2033, %v2241
        %v2243 = vpop.f32.mrb[0].mxu0
        %2244 = vmatprep.mubr.bf16.mxu0 %v1634
        %2245 = vmatmul.mubr.bf16.gmra.mrb[0].mxu0 %v1633
        %v2246 = vpop.f32.mrb[0].mxu0
        %v2247 = vadd.f32 %v2038, %v2246
        %v2248 = vpop.f32.mrb[0].mxu0
        %v2249 = vpop.f32.mrb[0].mxu0
        %v2250 = vadd.f32 %v2041, %v2249
        %v2251 = vpop.f32.mrb[0].mxu0
        %2252 = vdwg.mxu0
        %2253 = vmatprep.subr.bf16.mxu0 0
        %2254 = vmatpush1.bf16.msra.mxu0 %v2156
        %2255 = vmatprep.subr.bf16.mxu0 0
        %2256 = vmatpush1.bf16.msra.mxu0 %v2157
        %2257 = vmatprep.subr.bf16.mxu0 0
        %2258 = vmatpush1.bf16.msra.mxu0 %v2158
        %2259 = vmatprep.subr.bf16.mxu0 0
        %2260 = vmatpush1.bf16.msra.mxu0 %v2159
        %2261 = vmatprep.subr.bf16.mxu0 0
        %2262 = vmatpush1.bf16.msra.mxu0 %v2160
        %2263 = vmatprep.subr.bf16.mxu0 0
        %2264 = vmatpush1.bf16.msra.mxu0 %v2161
        %2265 = vmatprep.subr.bf16.mxu0 0
        %2266 = vmatpush1.bf16.msra.mxu0 %v2162
        %2267 = vmatprep.subr.bf16.mxu0 0
        %2268 = vmatpush1.bf16.msra.mxu0 %v2163
        %2269 = vmatprep.subr.bf16.mxu0 0
        %2270 = vmatpush1.bf16.msra.mxu0 0
        %2271 = vmatprep.subr.bf16.mxu0 0
        %2272 = vmatpush1.bf16.msra.mxu0 0
        %2273 = vmatprep.subr.bf16.mxu0 0
        %2274 = vmatpush1.bf16.msra.mxu0 0
        %2275 = vmatprep.subr.bf16.mxu0 0
        %2276 = vmatpush1.bf16.msra.mxu0 0
        %2277 = vmatprep.subr.bf16.mxu0 0
        %2278 = vmatpush1.bf16.msra.mxu0 0
        %2279 = vmatprep.subr.bf16.mxu0 0
        %2280 = vmatpush1.bf16.msra.mxu0 0
        %2281 = vmatprep.subr.bf16.mxu0 0
        %2282 = vmatpush1.bf16.msra.mxu0 0
        %2283 = vmatprep.subr.bf16.mxu0 0
        %2284 = vmatpush1.bf16.msra.mxu0 0
        %2285 = vmatprep.mubr.bf16.mxu0 0
        %2286 = vmatmul.mubr.bf16.gmra.mrb[0].mxu0 %v1626
        %v2287 = vpop.f32.mrb[0].mxu0
        %v2288 = vadd.f32 %v2223, %v2287
        %v2289 = vpop.f32.mrb[0].mxu0
        %v2290 = vpop.f32.mrb[0].mxu0
        %v2291 = vadd.f32 %v2226, %v2290
        %v2292 = vpop.f32.mrb[0].mxu0
        %2293 = vmatprep.mubr.bf16.mxu0 0
        %2294 = vmatmul.mubr.bf16.gmra.mrb[0].mxu0 %v1629
        %v2295 = vpop.f32.mrb[0].mxu0
        %v2296 = vadd.f32 %v2231, %v2295
        %v2297 = vpop.f32.mrb[0].mxu0
        %v2298 = vpop.f32.mrb[0].mxu0
        %v2299 = vadd.f32 %v2234, %v2298
        %v2300 = vpop.f32.mrb[0].mxu0
        %2301 = vmatprep.mubr.bf16.mxu0 0
        %2302 = vmatmul.mubr.bf16.gmra.mrb[0].mxu0 %v1632
        %v2303 = vpop.f32.mrb[0].mxu0
        %v2304 = vadd.f32 %v2239, %v2303
        %v2305 = vpop.f32.mrb[0].mxu0
        %v2306 = vpop.f32.mrb[0].mxu0
        %v2307 = vadd.f32 %v2242, %v2306
        %v2308 = vpop.f32.mrb[0].mxu0
        %2309 = vmatprep.mubr.bf16.mxu0 0
        %2310 = vmatmul.mubr.bf16.gmra.mrb[0].mxu0 %v1635
        %v2311 = vpop.f32.mrb[0].mxu0
        %v2312 = vadd.f32 %v2247, %v2311
        %v2313 = vpop.f32.mrb[0].mxu0
        %v2314 = vpop.f32.mrb[0].mxu0
        %v2315 = vadd.f32 %v2250, %v2314
        %v2316 = vpop.f32.mrb[0].mxu0
        %2317 = vdwg.mxu0
        %v2318 = vld [vmem:[%s1224] sm:$0xff]
        %v2319 = vld [vmem:[%s1224 + $0x10] sm:$0xff]
        %v2320 = vld [vmem:[%s1224 + $0x20] sm:$0xff]
        %v2321 = vld [vmem:[%s1224 + $0x30] sm:$0xff]
        %v2322 = vld [vmem:[%s1224 + $0x40] sm:$0xff]
        %v2323 = vld [vmem:[%s1224 + $0x50] sm:$0xff]
        %v2324 = vld [vmem:[%s1224 + $0x60] sm:$0xff]
        %v2325 = vld [vmem:[%s1224 + $0x70] sm:$0xff]
        %v2326 = vld [vmem:[%s1224 + $0x1] sm:$0xff]
        %v2327 = vld [vmem:[%s1224 + $0x11] sm:$0xff]
        %v2328 = vld [vmem:[%s1224 + $0x21] sm:$0xff]
        %v2329 = vld [vmem:[%s1224 + $0x31] sm:$0xff]
        %v2330 = vld [vmem:[%s1224 + $0x41] sm:$0xff]
        %v2331 = vld [vmem:[%s1224 + $0x51] sm:$0xff]
        %v2332 = vld [vmem:[%s1224 + $0x61] sm:$0xff]
        %v2333 = vld [vmem:[%s1224 + $0x71] sm:$0xff]
        %v2334 = vld [vmem:[%s1224 + $0x2] sm:$0xff]
        %v2335 = vld [vmem:[%s1224 + $0x12] sm:$0xff]
        %v2336 = vld [vmem:[%s1224 + $0x22] sm:$0xff]
        %v2337 = vld [vmem:[%s1224 + $0x32] sm:$0xff]
        %v2338 = vld [vmem:[%s1224 + $0x42] sm:$0xff]
        %v2339 = vld [vmem:[%s1224 + $0x52] sm:$0xff]
        %v2340 = vld [vmem:[%s1224 + $0x62] sm:$0xff]
        %v2341 = vld [vmem:[%s1224 + $0x72] sm:$0xff]
        %v2342 = vpack.c.bf16 %v2319, %v2318
        %v2343 = vpack.c.bf16 %v2327, %v2326
        %v2344 = vpack.c.bf16 %v2335, %v2334
        %v2345 = vpack.c.bf16 %v2321, %v2320
        %v2346 = vpack.c.bf16 %v2329, %v2328
        %v2347 = vpack.c.bf16 %v2337, %v2336
        %v2348 = vpack.c.bf16 %v2323, %v2322
        %v2349 = vpack.c.bf16 %v2331, %v2330
        %v2350 = vpack.c.bf16 %v2339, %v2338
        %v2351 = vpack.c.bf16 %v2325, %v2324
        %v2352 = vpack.c.bf16 %v2333, %v2332
        %v2353 = vpack.c.bf16 %v2341, %v2340
        %s2354 = scalar_lea.vmem [#allocation8], 960
        %v2355 = vld [vmem:[%s2354] sm:$0xf]
        %v2356 = vld [vmem:[%s2354 + $0x4] sm:$0xf]
        %v2357 = vld [vmem:[%s2354 + $0x8] sm:$0xf]
        %v2358 = vld [vmem:[%s2354 + $0xc] sm:$0xf]
        %v2359 = vld [vmem:[%s2354 + $0x10] sm:$0xf]
        %v2360 = vld [vmem:[%s2354 + $0x14] sm:$0xf]
        %v2361 = vld [vmem:[%s2354 + $0x18] sm:$0xf]
        %v2362 = vld [vmem:[%s2354 + $0x1c] sm:$0xf]
        %v2363 = vld [vmem:[%s2354 + $0x20] sm:$0xf]
        %v2364 = vld [vmem:[%s2354 + $0x24] sm:$0xf]
        %v2365 = vld [vmem:[%s2354 + $0x28] sm:$0xf]
        %v2366 = vld [vmem:[%s2354 + $0x2c] sm:$0xf]
        %v2367 = vld [vmem:[%s2354 + $0x30] sm:$0xf]
        %v2368 = vld [vmem:[%s2354 + $0x34] sm:$0xf]
        %v2369 = vld [vmem:[%s2354 + $0x38] sm:$0xf]
        %v2370 = vld [vmem:[%s2354 + $0x3c] sm:$0xf]
        %v2371 = vld [vmem:[%s2354 + $0x40] sm:$0xf]
        %v2372 = vld [vmem:[%s2354 + $0x44] sm:$0xf]
        %v2373 = vld [vmem:[%s2354 + $0x48] sm:$0xf]
        %v2374 = vld [vmem:[%s2354 + $0x4c] sm:$0xf]
        %v2375 = vld [vmem:[%s2354 + $0x50] sm:$0xf]
        %v2376 = vld [vmem:[%s2354 + $0x54] sm:$0xf]
        %v2377 = vld [vmem:[%s2354 + $0x58] sm:$0xf]
        %v2378 = vld [vmem:[%s2354 + $0x5c] sm:$0xf]
        %v2379 = vld [vmem:[%s2354 + $0x60] sm:$0xf]
        %v2380 = vld [vmem:[%s2354 + $0x64] sm:$0xf]
        %v2381 = vld [vmem:[%s2354 + $0x68] sm:$0xf]
        %v2382 = vld [vmem:[%s2354 + $0x6c] sm:$0xf]
        %v2383 = vld [vmem:[%s2354 + $0x70] sm:$0xf]
        %v2384 = vld [vmem:[%s2354 + $0x74] sm:$0xf]
        %v2385 = vld [vmem:[%s2354 + $0x78] sm:$0xf]
        %v2386 = vld [vmem:[%s2354 + $0x7c] sm:$0xf]
        %v2387 = vld [vmem:[%s2354 + $0x80] sm:$0xf]
        %v2388 = vld [vmem:[%s2354 + $0x84] sm:$0xf]
        %v2389 = vld [vmem:[%s2354 + $0x88] sm:$0xf]
        %v2390 = vld [vmem:[%s2354 + $0x8c] sm:$0xf]
        %v2391 = vld [vmem:[%s2354 + $0x90] sm:$0xf]
        %v2392 = vld [vmem:[%s2354 + $0x94] sm:$0xf]
        %v2393 = vld [vmem:[%s2354 + $0x98] sm:$0xf]
        %v2394 = vld [vmem:[%s2354 + $0x9c] sm:$0xf]
        %v2395 = vld [vmem:[%s2354 + $0xa0] sm:$0xf]
        %v2396 = vld [vmem:[%s2354 + $0xa4] sm:$0xf]
        %v2397 = vld [vmem:[%s2354 + $0xa8] sm:$0xf]
        %v2398 = vld [vmem:[%s2354 + $0xac] sm:$0xf]
        %v2399 = vld [vmem:[%s2354 + $0xb0] sm:$0xf]
        %v2400 = vld [vmem:[%s2354 + $0xb4] sm:$0xf]
        %v2401 = vld [vmem:[%s2354 + $0xb8] sm:$0xf]
        %v2402 = vld [vmem:[%s2354 + $0xbc] sm:$0xf]
        %v2451 = vunpack.c.l.b16 %v2355
        %v2452 = vunpack.c.l.b16 %v2356
        %v2453 = vunpack.c.l.b16 %v2357
        %v2454 = vunpack.c.l.b16 %v2358
        %v2455 = vunpack.c.l.b16 %v2359
        %v2456 = vunpack.c.l.b16 %v2360
        %v2457 = vunpack.c.l.b16 %v2361
        %v2458 = vunpack.c.l.b16 %v2362
        %v2459 = vunpack.c.l.b16 %v2363
        %v2460 = vunpack.c.l.b16 %v2364
        %v2461 = vunpack.c.l.b16 %v2365
        %v2462 = vunpack.c.l.b16 %v2366
        %v2463 = vunpack.c.l.b16 %v2367
        %v2464 = vunpack.c.l.b16 %v2368
        %v2465 = vunpack.c.l.b16 %v2369
        %v2466 = vunpack.c.l.b16 %v2370
        %v2467 = vunpack.c.l.b16 %v2371
        %v2468 = vunpack.c.l.b16 %v2372
        %v2469 = vunpack.c.l.b16 %v2373
        %v2470 = vunpack.c.l.b16 %v2374
        %v2471 = vunpack.c.l.b16 %v2375
        %v2472 = vunpack.c.l.b16 %v2376
        %v2473 = vunpack.c.l.b16 %v2377
        %v2474 = vunpack.c.l.b16 %v2378
        %v2475 = vunpack.c.l.b16 %v2379
        %v2476 = vunpack.c.l.b16 %v2380
        %v2477 = vunpack.c.l.b16 %v2381
        %v2478 = vunpack.c.l.b16 %v2382
        %v2479 = vunpack.c.l.b16 %v2383
        %v2480 = vunpack.c.l.b16 %v2384
        %v2481 = vunpack.c.l.b16 %v2385
        %v2482 = vunpack.c.l.b16 %v2386
        %v2483 = vunpack.c.l.b16 %v2387
        %v2484 = vunpack.c.l.b16 %v2388
        %v2485 = vunpack.c.l.b16 %v2389
        %v2486 = vunpack.c.l.b16 %v2390
        %v2487 = vunpack.c.l.b16 %v2391
        %v2488 = vunpack.c.l.b16 %v2392
        %v2489 = vunpack.c.l.b16 %v2393
        %v2490 = vunpack.c.l.b16 %v2394
        %v2491 = vunpack.c.l.b16 %v2395
        %v2492 = vunpack.c.l.b16 %v2396
        %v2493 = vunpack.c.l.b16 %v2397
        %v2494 = vunpack.c.l.b16 %v2398
        %v2495 = vunpack.c.l.b16 %v2399
        %v2496 = vunpack.c.l.b16 %v2400
        %v2497 = vunpack.c.l.b16 %v2401
        %v2498 = vunpack.c.l.b16 %v2402
        %v2499 = vpack.c.b16 %v2452, %v2451
        %v2500 = vpack.c.b16 %v2454, %v2453
        %v2501 = vpack.c.b16 %v2456, %v2455
        %v2502 = vpack.c.b16 %v2458, %v2457
        %v2503 = vpack.c.b16 %v2460, %v2459
        %v2504 = vpack.c.b16 %v2462, %v2461
        %v2505 = vpack.c.b16 %v2464, %v2463
        %v2506 = vpack.c.b16 %v2466, %v2465
        %v2507 = vpack.c.b16 %v2468, %v2467
        %v2508 = vpack.c.b16 %v2470, %v2469
        %v2509 = vpack.c.b16 %v2472, %v2471
        %v2510 = vpack.c.b16 %v2474, %v2473
        %v2511 = vpack.c.b16 %v2476, %v2475
        %v2512 = vpack.c.b16 %v2478, %v2477
        %v2513 = vpack.c.b16 %v2480, %v2479
        %v2514 = vpack.c.b16 %v2482, %v2481
        %v2515 = vpack.c.b16 %v2484, %v2483
        %v2516 = vpack.c.b16 %v2486, %v2485
        %v2517 = vpack.c.b16 %v2488, %v2487
        %v2518 = vpack.c.b16 %v2490, %v2489
        %v2519 = vpack.c.b16 %v2492, %v2491
        %v2520 = vpack.c.b16 %v2494, %v2493
        %v2521 = vpack.c.b16 %v2496, %v2495
        %v2522 = vpack.c.b16 %v2498, %v2497
        %2547 = vmatprep.subr.bf16.mxu0 0
        %2548 = vmatpush1.bf16.msra.mxu0 %v2499
        %2549 = vmatprep.subr.bf16.mxu0 0
        %2550 = vmatpush1.bf16.msra.mxu0 %v2500
        %2551 = vmatprep.subr.bf16.mxu0 0
        %2552 = vmatpush1.bf16.msra.mxu0 %v2501
        %2553 = vmatprep.subr.bf16.mxu0 0
        %2554 = vmatpush1.bf16.msra.mxu0 %v2502
        %2555 = vmatprep.subr.bf16.mxu0 0
        %2556 = vmatpush1.bf16.msra.mxu0 %v2503
        %2557 = vmatprep.subr.bf16.mxu0 0
        %2558 = vmatpush1.bf16.msra.mxu0 %v2504
        %2559 = vmatprep.subr.bf16.mxu0 0
        %2560 = vmatpush1.bf16.msra.mxu0 %v2505
        %2561 = vmatprep.subr.bf16.mxu0 0
        %2562 = vmatpush1.bf16.msra.mxu0 %v2506
        %2563 = vmatprep.subr.bf16.mxu0 0
        %2564 = vmatpush1.bf16.msra.mxu0 %v2507
        %2565 = vmatprep.subr.bf16.mxu0 0
        %2566 = vmatpush1.bf16.msra.mxu0 %v2508
        %2567 = vmatprep.subr.bf16.mxu0 0
        %2568 = vmatpush1.bf16.msra.mxu0 %v2509
        %2569 = vmatprep.subr.bf16.mxu0 0
        %2570 = vmatpush1.bf16.msra.mxu0 %v2510
        %2571 = vmatprep.subr.bf16.mxu0 0
        %2572 = vmatpush1.bf16.msra.mxu0 %v2511
        %2573 = vmatprep.subr.bf16.mxu0 0
        %2574 = vmatpush1.bf16.msra.mxu0 %v2512
        %2575 = vmatprep.subr.bf16.mxu0 0
        %2576 = vmatpush1.bf16.msra.mxu0 %v2513
        %2577 = vmatprep.subr.bf16.mxu0 0
        %2578 = vmatpush1.bf16.msra.mxu0 %v2514
        %2579 = vmatprep.mubr.bf16.mxu0 %v2343
        %2580 = vmatmul.mubr.bf16.gmra.mrb[0].mxu0 %v2342
        %v2581 = vpop.f32.mrb[0].mxu0
        %v2582 = vadd.f32 0.0, %v2581
        %v2583 = vpop.f32.mrb[0].mxu0
        %v2584 = vpop.f32.mrb[0].mxu0
        %v2585 = vadd.f32 0.0, %v2584
        %v2586 = vpop.f32.mrb[0].mxu0
        %2587 = vmatprep.mubr.bf16.mxu0 %v2346
        %2588 = vmatmul.mubr.bf16.gmra.mrb[0].mxu0 %v2345
        %v2589 = vpop.f32.mrb[0].mxu0
        %v2590 = vadd.f32 0.0, %v2589
        %v2591 = vpop.f32.mrb[0].mxu0
        %v2592 = vpop.f32.mrb[0].mxu0
        %v2593 = vadd.f32 0.0, %v2592
        %v2594 = vpop.f32.mrb[0].mxu0
        %2595 = vmatprep.mubr.bf16.mxu0 %v2349
        %2596 = vmatmul.mubr.bf16.gmra.mrb[0].mxu0 %v2348
        %v2597 = vpop.f32.mrb[0].mxu0
        %v2598 = vadd.f32 0.0, %v2597
        %v2599 = vpop.f32.mrb[0].mxu0
        %v2600 = vpop.f32.mrb[0].mxu0
        %v2601 = vadd.f32 0.0, %v2600
        %v2602 = vpop.f32.mrb[0].mxu0
        %2603 = vmatprep.mubr.bf16.mxu0 %v2352
        %2604 = vmatmul.mubr.bf16.gmra.mrb[0].mxu0 %v2351
        %v2605 = vpop.f32.mrb[0].mxu0
        %v2606 = vadd.f32 0.0, %v2605
        %v2607 = vpop.f32.mrb[0].mxu0
        %v2608 = vpop.f32.mrb[0].mxu0
        %v2609 = vadd.f32 0.0, %v2608
        %v2610 = vpop.f32.mrb[0].mxu0
        %2611 = vdwg.mxu0
        %2612 = vmatprep.subr.bf16.mxu0 0
        %2613 = vmatpush1.bf16.msra.mxu0 %v2515
        %2614 = vmatprep.subr.bf16.mxu0 0
        %2615 = vmatpush1.bf16.msra.mxu0 %v2516
        %2616 = vmatprep.subr.bf16.mxu0 0
        %2617 = vmatpush1.bf16.msra.mxu0 %v2517
        %2618 = vmatprep.subr.bf16.mxu0 0
        %2619 = vmatpush1.bf16.msra.mxu0 %v2518
        %2620 = vmatprep.subr.bf16.mxu0 0
        %2621 = vmatpush1.bf16.msra.mxu0 %v2519
        %2622 = vmatprep.subr.bf16.mxu0 0
        %2623 = vmatpush1.bf16.msra.mxu0 %v2520
        %2624 = vmatprep.subr.bf16.mxu0 0
        %2625 = vmatpush1.bf16.msra.mxu0 %v2521
        %2626 = vmatprep.subr.bf16.mxu0 0
        %2627 = vmatpush1.bf16.msra.mxu0 %v2522
        %2628 = vmatprep.subr.bf16.mxu0 0
        %2629 = vmatpush1.bf16.msra.mxu0 0
        %2630 = vmatprep.subr.bf16.mxu0 0
        %2631 = vmatpush1.bf16.msra.mxu0 0
        %2632 = vmatprep.subr.bf16.mxu0 0
        %2633 = vmatpush1.bf16.msra.mxu0 0
        %2634 = vmatprep.subr.bf16.mxu0 0
        %2635 = vmatpush1.bf16.msra.mxu0 0
        %2636 = vmatprep.subr.bf16.mxu0 0
        %2637 = vmatpush1.bf16.msra.mxu0 0
        %2638 = vmatprep.subr.bf16.mxu0 0
        %2639 = vmatpush1.bf16.msra.mxu0 0
        %2640 = vmatprep.subr.bf16.mxu0 0
        %2641 = vmatpush1.bf16.msra.mxu0 0
        %2642 = vmatprep.subr.bf16.mxu0 0
        %2643 = vmatpush1.bf16.msra.mxu0 0
        %2644 = vmatprep.mubr.bf16.mxu0 0
        %2645 = vmatmul.mubr.bf16.gmra.mrb[0].mxu0 %v2344
        %v2646 = vpop.f32.mrb[0].mxu0
        %v2647 = vadd.f32 %v2582, %v2646
        %v2648 = vpop.f32.mrb[0].mxu0
        %v2649 = vpop.f32.mrb[0].mxu0
        %v2650 = vadd.f32 %v2585, %v2649
        %v2651 = vpop.f32.mrb[0].mxu0
        %2652 = vmatprep.mubr.bf16.mxu0 0
        %2653 = vmatmul.mubr.bf16.gmra.mrb[0].mxu0 %v2347
        %v2654 = vpop.f32.mrb[0].mxu0
        %v2655 = vadd.f32 %v2590, %v2654
        %v2656 = vpop.f32.mrb[0].mxu0
        %v2657 = vpop.f32.mrb[0].mxu0
        %v2658 = vadd.f32 %v2593, %v2657
        %v2659 = vpop.f32.mrb[0].mxu0
        %2660 = vmatprep.mubr.bf16.mxu0 0
        %2661 = vmatmul.mubr.bf16.gmra.mrb[0].mxu0 %v2350
        %v2662 = vpop.f32.mrb[0].mxu0
        %v2663 = vadd.f32 %v2598, %v2662
        %v2664 = vpop.f32.mrb[0].mxu0
        %v2665 = vpop.f32.mrb[0].mxu0
        %v2666 = vadd.f32 %v2601, %v2665
        %v2667 = vpop.f32.mrb[0].mxu0
        %2668 = vmatprep.mubr.bf16.mxu0 0
        %2669 = vmatmul.mubr.bf16.gmra.mrb[0].mxu0 %v2353
        %v2670 = vpop.f32.mrb[0].mxu0
        %v2671 = vadd.f32 %v2606, %v2670
        %v2672 = vpop.f32.mrb[0].mxu0
        %v2673 = vpop.f32.mrb[0].mxu0
        %v2674 = vadd.f32 %v2609, %v2673
        %v2675 = vpop.f32.mrb[0].mxu0
        %2676 = vdwg.mxu0
        %v2677 = vadd.f32 %v2288, %v2647
        %v2678 = vadd.f32 %v2291, %v2650
        %v2679 = vadd.f32 %v2296, %v2655
        %v2680 = vadd.f32 %v2299, %v2658
        %v2681 = vadd.f32 %v2304, %v2663
        %v2682 = vadd.f32 %v2307, %v2666
        %v2683 = vadd.f32 %v2312, %v2671
        %v2684 = vadd.f32 %v2315, %v2674
        %2685 = vst [vmem:[%s498 + $0x1] sm:$0xff] %v2677
        %2686 = vst [vmem:[%s498 + $0x11] sm:$0xff] %v2678
        %2687 = vst [vmem:[%s498 + $0x21] sm:$0xff] %v2679
        %2688 = vst [vmem:[%s498 + $0x31] sm:$0xff] %v2680
        %2689 = vst [vmem:[%s498 + $0x41] sm:$0xff] %v2681
        %2690 = vst [vmem:[%s498 + $0x51] sm:$0xff] %v2682
        %2691 = vst [vmem:[%s498 + $0x61] sm:$0xff] %v2683
        %2692 = vst [vmem:[%s498 + $0x71] sm:$0xff] %v2684
        %v2693 = vld [vmem:[#allocation2] sm:$0xff]
        %v2694 = vld [vmem:[#allocation2 + $0x10] sm:$0xff]
        %v2695 = vld [vmem:[#allocation2 + $0x20] sm:$0xff]
        %v2696 = vld [vmem:[#allocation2 + $0x30] sm:$0xff]
        %v2697 = vld [vmem:[#allocation2 + $0x40] sm:$0xff]
        %v2698 = vld [vmem:[#allocation2 + $0x50] sm:$0xff]
        %v2699 = vld [vmem:[#allocation2 + $0x60] sm:$0xff]
        %v2700 = vld [vmem:[#allocation2 + $0x70] sm:$0xff]
        %v2701 = vld [vmem:[#allocation2 + $0x1] sm:$0xff]
        %v2702 = vld [vmem:[#allocation2 + $0x11] sm:$0xff]
        %v2703 = vld [vmem:[#allocation2 + $0x21] sm:$0xff]
        %v2704 = vld [vmem:[#allocation2 + $0x31] sm:$0xff]
        %v2705 = vld [vmem:[#allocation2 + $0x41] sm:$0xff]
        %v2706 = vld [vmem:[#allocation2 + $0x51] sm:$0xff]
        %v2707 = vld [vmem:[#allocation2 + $0x61] sm:$0xff]
        %v2708 = vld [vmem:[#allocation2 + $0x71] sm:$0xff]
        %v2709 = vld [vmem:[#allocation2 + $0x2] sm:$0xff]
        %v2710 = vld [vmem:[#allocation2 + $0x12] sm:$0xff]
        %v2711 = vld [vmem:[#allocation2 + $0x22] sm:$0xff]
        %v2712 = vld [vmem:[#allocation2 + $0x32] sm:$0xff]
        %v2713 = vld [vmem:[#allocation2 + $0x42] sm:$0xff]
        %v2714 = vld [vmem:[#allocation2 + $0x52] sm:$0xff]
        %v2715 = vld [vmem:[#allocation2 + $0x62] sm:$0xff]
        %v2716 = vld [vmem:[#allocation2 + $0x72] sm:$0xff]
        %v2717 = vpack.c.bf16 %v2694, %v2693
        %v2718 = vpack.c.bf16 %v2702, %v2701
        %v2719 = vpack.c.bf16 %v2710, %v2709
        %v2720 = vpack.c.bf16 %v2696, %v2695
        %v2721 = vpack.c.bf16 %v2704, %v2703
        %v2722 = vpack.c.bf16 %v2712, %v2711
        %v2723 = vpack.c.bf16 %v2698, %v2697
        %v2724 = vpack.c.bf16 %v2706, %v2705
        %v2725 = vpack.c.bf16 %v2714, %v2713
        %v2726 = vpack.c.bf16 %v2700, %v2699
        %v2727 = vpack.c.bf16 %v2708, %v2707
        %v2728 = vpack.c.bf16 %v2716, %v2715
        %v2729 = vld [vmem:[#allocation9] sm:$0xff]
        %v2730 = vld [vmem:[#allocation9 + $0x8] sm:$0xff]
        %v2731 = vld [vmem:[#allocation9 + $0x10] sm:$0xff]
        %v2732 = vld [vmem:[#allocation9 + $0x18] sm:$0xff]
        %v2733 = vld [vmem:[#allocation9 + $0x20] sm:$0xff]
        %v2734 = vld [vmem:[#allocation9 + $0x28] sm:$0xff]
        %v2735 = vld [vmem:[#allocation9 + $0x30] sm:$0xff]
        %v2736 = vld [vmem:[#allocation9 + $0x38] sm:$0xff]
        %v2737 = vld [vmem:[#allocation9 + $0x40] sm:$0xff]
        %v2738 = vld [vmem:[#allocation9 + $0x48] sm:$0xff]
        %v2739 = vld [vmem:[#allocation9 + $0x50] sm:$0xff]
        %v2740 = vld [vmem:[#allocation9 + $0x58] sm:$0xff]
        %v2741 = vld [vmem:[#allocation9 + $0x60] sm:$0xff]
        %v2742 = vld [vmem:[#allocation9 + $0x68] sm:$0xff]
        %v2743 = vld [vmem:[#allocation9 + $0x70] sm:$0xff]
        %v2744 = vld [vmem:[#allocation9 + $0x78] sm:$0xff]
        %v2745 = vld [vmem:[#allocation9 + $0x80] sm:$0xff]
        %v2746 = vld [vmem:[#allocation9 + $0x88] sm:$0xff]
        %v2747 = vld [vmem:[#allocation9 + $0x90] sm:$0xff]
        %v2748 = vld [vmem:[#allocation9 + $0x98] sm:$0xff]
        %v2749 = vld [vmem:[#allocation9 + $0xa0] sm:$0xff]
        %v2750 = vld [vmem:[#allocation9 + $0xa8] sm:$0xff]
        %v2751 = vld [vmem:[#allocation9 + $0xb0] sm:$0xff]
        %v2752 = vld [vmem:[#allocation9 + $0xb8] sm:$0xff]
        %v2753 = vld [vmem:[#allocation9 + $0xc0] sm:$0xff]
        %v2754 = vld [vmem:[#allocation9 + $0xc8] sm:$0xff]
        %v2755 = vld [vmem:[#allocation9 + $0xd0] sm:$0xff]
        %v2756 = vld [vmem:[#allocation9 + $0xd8] sm:$0xff]
        %v2757 = vld [vmem:[#allocation9 + $0xe0] sm:$0xff]
        %v2758 = vld [vmem:[#allocation9 + $0xe8] sm:$0xff]
        %v2759 = vld [vmem:[#allocation9 + $0xf0] sm:$0xff]
        %v2760 = vld [vmem:[#allocation9 + $0xf8] sm:$0xff]
        %v2761 = vld [vmem:[#allocation9 + $0x100] sm:$0xff]
        %v2762 = vld [vmem:[#allocation9 + $0x108] sm:$0xff]
        %v2763 = vld [vmem:[#allocation9 + $0x110] sm:$0xff]
        %v2764 = vld [vmem:[#allocation9 + $0x118] sm:$0xff]
        %v2765 = vld [vmem:[#allocation9 + $0x120] sm:$0xff]
        %v2766 = vld [vmem:[#allocation9 + $0x128] sm:$0xff]
        %v2767 = vld [vmem:[#allocation9 + $0x130] sm:$0xff]
        %v2768 = vld [vmem:[#allocation9 + $0x138] sm:$0xff]
        %v2769 = vld [vmem:[#allocation9 + $0x140] sm:$0xff]
        %v2770 = vld [vmem:[#allocation9 + $0x148] sm:$0xff]
        %v2771 = vld [vmem:[#allocation9 + $0x150] sm:$0xff]
        %v2772 = vld [vmem:[#allocation9 + $0x158] sm:$0xff]
        %v2773 = vld [vmem:[#allocation9 + $0x160] sm:$0xff]
        %v2774 = vld [vmem:[#allocation9 + $0x168] sm:$0xff]
        %v2775 = vld [vmem:[#allocation9 + $0x170] sm:$0xff]
        %v2776 = vld [vmem:[#allocation9 + $0x178] sm:$0xff]
        %v2777 = vld [vmem:[%s498] sm:$0xff]
        %v2778 = vld [vmem:[%s498 + $0x10] sm:$0xff]
        %v2779 = vld [vmem:[%s498 + $0x20] sm:$0xff]
        %v2780 = vld [vmem:[%s498 + $0x30] sm:$0xff]
        %v2781 = vld [vmem:[%s498 + $0x40] sm:$0xff]
        %v2782 = vld [vmem:[%s498 + $0x50] sm:$0xff]
        %v2783 = vld [vmem:[%s498 + $0x60] sm:$0xff]
        %v2784 = vld [vmem:[%s498 + $0x70] sm:$0xff]
        %v2785 = vld [vmem:[%s498 + $0x1] sm:$0xff]
        %v2786 = vld [vmem:[%s498 + $0x11] sm:$0xff]
        %v2787 = vld [vmem:[%s498 + $0x21] sm:$0xff]
        %v2788 = vld [vmem:[%s498 + $0x31] sm:$0xff]
        %v2789 = vld [vmem:[%s498 + $0x41] sm:$0xff]
        %v2790 = vld [vmem:[%s498 + $0x51] sm:$0xff]
        %v2791 = vld [vmem:[%s498 + $0x61] sm:$0xff]
        %v2792 = vld [vmem:[%s498 + $0x71] sm:$0xff]
        %v2793 = vld [vmem:[%s498 + $0x2] sm:$0xff]
        %v2794 = vld [vmem:[%s498 + $0x12] sm:$0xff]
        %v2795 = vld [vmem:[%s498 + $0x22] sm:$0xff]
        %v2796 = vld [vmem:[%s498 + $0x32] sm:$0xff]
        %v2797 = vld [vmem:[%s498 + $0x42] sm:$0xff]
        %v2798 = vld [vmem:[%s498 + $0x52] sm:$0xff]
        %v2799 = vld [vmem:[%s498 + $0x62] sm:$0xff]
        %v2800 = vld [vmem:[%s498 + $0x72] sm:$0xff]
        %v2801 = vpack.c.bf16 %v2778, %v2777
        %v2802 = vpack.c.bf16 %v2786, %v2785
        %v2803 = vpack.c.bf16 %v2794, %v2793
        %v2804 = vpack.c.bf16 %v2780, %v2779
        %v2805 = vpack.c.bf16 %v2788, %v2787
        %v2806 = vpack.c.bf16 %v2796, %v2795
        %v2807 = vpack.c.bf16 %v2782, %v2781
        %v2808 = vpack.c.bf16 %v2790, %v2789
        %v2809 = vpack.c.bf16 %v2798, %v2797
        %v2810 = vpack.c.bf16 %v2784, %v2783
        %v2811 = vpack.c.bf16 %v2792, %v2791
        %v2812 = vpack.c.bf16 %v2800, %v2799
        %s2813 = scalar_lea.vmem [#allocation9], 384
        %v2814 = vld [vmem:[%s2813] sm:$0xff]
        %v2815 = vld [vmem:[%s2813 + $0x8] sm:$0xff]
        %v2816 = vld [vmem:[%s2813 + $0x10] sm:$0xff]
        %v2817 = vld [vmem:[%s2813 + $0x18] sm:$0xff]
        %v2818 = vld [vmem:[%s2813 + $0x20] sm:$0xff]
        %v2819 = vld [vmem:[%s2813 + $0x28] sm:$0xff]
        %v2820 = vld [vmem:[%s2813 + $0x30] sm:$0xff]
        %v2821 = vld [vmem:[%s2813 + $0x38] sm:$0xff]
        %v2822 = vld [vmem:[%s2813 + $0x40] sm:$0xff]
        %v2823 = vld [vmem:[%s2813 + $0x48] sm:$0xff]
        %v2824 = vld [vmem:[%s2813 + $0x50] sm:$0xff]
        %v2825 = vld [vmem:[%s2813 + $0x58] sm:$0xff]
        %v2826 = vld [vmem:[%s2813 + $0x60] sm:$0xff]
        %v2827 = vld [vmem:[%s2813 + $0x68] sm:$0xff]
        %v2828 = vld [vmem:[%s2813 + $0x70] sm:$0xff]
        %v2829 = vld [vmem:[%s2813 + $0x78] sm:$0xff]
        %v2830 = vld [vmem:[%s2813 + $0x80] sm:$0xff]
        %v2831 = vld [vmem:[%s2813 + $0x88] sm:$0xff]
        %v2832 = vld [vmem:[%s2813 + $0x90] sm:$0xff]
        %v2833 = vld [vmem:[%s2813 + $0x98] sm:$0xff]
        %v2834 = vld [vmem:[%s2813 + $0xa0] sm:$0xff]
        %v2835 = vld [vmem:[%s2813 + $0xa8] sm:$0xff]
        %v2836 = vld [vmem:[%s2813 + $0xb0] sm:$0xff]
        %v2837 = vld [vmem:[%s2813 + $0xb8] sm:$0xff]
        %v2838 = vld [vmem:[%s2813 + $0xc0] sm:$0xff]
        %v2839 = vld [vmem:[%s2813 + $0xc8] sm:$0xff]
        %v2840 = vld [vmem:[%s2813 + $0xd0] sm:$0xff]
        %v2841 = vld [vmem:[%s2813 + $0xd8] sm:$0xff]
        %v2842 = vld [vmem:[%s2813 + $0xe0] sm:$0xff]
        %v2843 = vld [vmem:[%s2813 + $0xe8] sm:$0xff]
        %v2844 = vld [vmem:[%s2813 + $0xf0] sm:$0xff]
        %v2845 = vld [vmem:[%s2813 + $0xf8] sm:$0xff]
        %v2846 = vld [vmem:[%s2813 + $0x100] sm:$0xff]
        %v2847 = vld [vmem:[%s2813 + $0x108] sm:$0xff]
        %v2848 = vld [vmem:[%s2813 + $0x110] sm:$0xff]
        %v2849 = vld [vmem:[%s2813 + $0x118] sm:$0xff]
        %v2850 = vld [vmem:[%s2813 + $0x120] sm:$0xff]
        %v2851 = vld [vmem:[%s2813 + $0x128] sm:$0xff]
        %v2852 = vld [vmem:[%s2813 + $0x130] sm:$0xff]
        %v2853 = vld [vmem:[%s2813 + $0x138] sm:$0xff]
        %v2854 = vld [vmem:[%s2813 + $0x140] sm:$0xff]
        %v2855 = vld [vmem:[%s2813 + $0x148] sm:$0xff]
        %v2856 = vld [vmem:[%s2813 + $0x150] sm:$0xff]
        %v2857 = vld [vmem:[%s2813 + $0x158] sm:$0xff]
        %v2858 = vld [vmem:[%s2813 + $0x160] sm:$0xff]
        %v2859 = vld [vmem:[%s2813 + $0x168] sm:$0xff]
        %v2860 = vld [vmem:[%s2813 + $0x170] sm:$0xff]
        %v2861 = vld [vmem:[%s2813 + $0x178] sm:$0xff]
        %v2910 = vunpack.c.l.b16 %v2814
        %v2911 = vunpack.c.h.b16 %v2814
        %v2912 = vunpack.c.l.b16 %v2815
        %v2913 = vunpack.c.h.b16 %v2815
        %v2914 = vunpack.c.l.b16 %v2816
        %v2915 = vunpack.c.h.b16 %v2816
        %v2916 = vunpack.c.l.b16 %v2817
        %v2917 = vunpack.c.h.b16 %v2817
        %v2918 = vunpack.c.l.b16 %v2818
        %v2919 = vunpack.c.h.b16 %v2818
        %v2920 = vunpack.c.l.b16 %v2819
        %v2921 = vunpack.c.h.b16 %v2819
        %v2922 = vunpack.c.l.b16 %v2820
        %v2923 = vunpack.c.h.b16 %v2820
        %v2924 = vunpack.c.l.b16 %v2821
        %v2925 = vunpack.c.h.b16 %v2821
        %v2926 = vunpack.c.l.b16 %v2822
        %v2927 = vunpack.c.h.b16 %v2822
        %v2928 = vunpack.c.l.b16 %v2823
        %v2929 = vunpack.c.h.b16 %v2823
        %v2930 = vunpack.c.l.b16 %v2824
        %v2931 = vunpack.c.h.b16 %v2824
        %v2932 = vunpack.c.l.b16 %v2825
        %v2933 = vunpack.c.h.b16 %v2825
        %v2934 = vunpack.c.l.b16 %v2826
        %v2935 = vunpack.c.h.b16 %v2826
        %v2936 = vunpack.c.l.b16 %v2827
        %v2937 = vunpack.c.h.b16 %v2827
        %v2938 = vunpack.c.l.b16 %v2828
        %v2939 = vunpack.c.h.b16 %v2828
        %v2940 = vunpack.c.l.b16 %v2829
        %v2941 = vunpack.c.h.b16 %v2829
        %v2942 = vunpack.c.l.b16 %v2830
        %v2943 = vunpack.c.h.b16 %v2830
        %v2944 = vunpack.c.l.b16 %v2831
        %v2945 = vunpack.c.h.b16 %v2831
        %v2946 = vunpack.c.l.b16 %v2832
        %v2947 = vunpack.c.h.b16 %v2832
        %v2948 = vunpack.c.l.b16 %v2833
        %v2949 = vunpack.c.h.b16 %v2833
        %v2950 = vunpack.c.l.b16 %v2834
        %v2951 = vunpack.c.h.b16 %v2834
        %v2952 = vunpack.c.l.b16 %v2835
        %v2953 = vunpack.c.h.b16 %v2835
        %v2954 = vunpack.c.l.b16 %v2836
        %v2955 = vunpack.c.h.b16 %v2836
        %v2956 = vunpack.c.l.b16 %v2837
        %v2957 = vunpack.c.h.b16 %v2837
        %v2958 = vunpack.c.l.b16 %v2838
        %v2959 = vunpack.c.h.b16 %v2838
        %v2960 = vunpack.c.l.b16 %v2839
        %v2961 = vunpack.c.h.b16 %v2839
        %v2962 = vunpack.c.l.b16 %v2840
        %v2963 = vunpack.c.h.b16 %v2840
        %v2964 = vunpack.c.l.b16 %v2841
        %v2965 = vunpack.c.h.b16 %v2841
        %v2966 = vunpack.c.l.b16 %v2842
        %v2967 = vunpack.c.h.b16 %v2842
        %v2968 = vunpack.c.l.b16 %v2843
        %v2969 = vunpack.c.h.b16 %v2843
        %v2970 = vunpack.c.l.b16 %v2844
        %v2971 = vunpack.c.h.b16 %v2844
        %v2972 = vunpack.c.l.b16 %v2845
        %v2973 = vunpack.c.h.b16 %v2845
        %v2974 = vunpack.c.l.b16 %v2846
        %v2975 = vunpack.c.h.b16 %v2846
        %v2976 = vunpack.c.l.b16 %v2847
        %v2977 = vunpack.c.h.b16 %v2847
        %v2978 = vunpack.c.l.b16 %v2848
        %v2979 = vunpack.c.h.b16 %v2848
        %v2980 = vunpack.c.l.b16 %v2849
        %v2981 = vunpack.c.h.b16 %v2849
        %v2982 = vunpack.c.l.b16 %v2850
        %v2983 = vunpack.c.h.b16 %v2850
        %v2984 = vunpack.c.l.b16 %v2851
        %v2985 = vunpack.c.h.b16 %v2851
        %v2986 = vunpack.c.l.b16 %v2852
        %v2987 = vunpack.c.h.b16 %v2852
        %v2988 = vunpack.c.l.b16 %v2853
        %v2989 = vunpack.c.h.b16 %v2853
        %v2990 = vunpack.c.l.b16 %v2854
        %v2991 = vunpack.c.h.b16 %v2854
        %v2992 = vunpack.c.l.b16 %v2855
        %v2993 = vunpack.c.h.b16 %v2855
        %v2994 = vunpack.c.l.b16 %v2856
        %v2995 = vunpack.c.h.b16 %v2856
        %v2996 = vunpack.c.l.b16 %v2857
        %v2997 = vunpack.c.h.b16 %v2857
        %v2998 = vunpack.c.l.b16 %v2858
        %v2999 = vunpack.c.h.b16 %v2858
        %v3000 = vunpack.c.l.b16 %v2859
        %v3001 = vunpack.c.h.b16 %v2859
        %v3002 = vunpack.c.l.b16 %v2860
        %v3003 = vunpack.c.h.b16 %v2860
        %v3004 = vunpack.c.l.b16 %v2861
        %v3005 = vunpack.c.h.b16 %v2861
        %v3006 = vpack.c.b16 %v2912, %v2910
        %v3007 = vpack.c.b16 %v2913, %v2911
        %v3008 = vpack.c.b16 %v2916, %v2914
        %v3009 = vpack.c.b16 %v2917, %v2915
        %v3010 = vpack.c.b16 %v2920, %v2918
        %v3011 = vpack.c.b16 %v2921, %v2919
        %v3012 = vpack.c.b16 %v2924, %v2922
        %v3013 = vpack.c.b16 %v2925, %v2923
        %v3014 = vpack.c.b16 %v2928, %v2926
        %v3015 = vpack.c.b16 %v2929, %v2927
        %v3016 = vpack.c.b16 %v2932, %v2930
        %v3017 = vpack.c.b16 %v2933, %v2931
        %v3018 = vpack.c.b16 %v2936, %v2934
        %v3019 = vpack.c.b16 %v2937, %v2935
        %v3020 = vpack.c.b16 %v2940, %v2938
        %v3021 = vpack.c.b16 %v2941, %v2939
        %v3022 = vpack.c.b16 %v2944, %v2942
        %v3023 = vpack.c.b16 %v2945, %v2943
        %v3024 = vpack.c.b16 %v2948, %v2946
        %v3025 = vpack.c.b16 %v2949, %v2947
        %v3026 = vpack.c.b16 %v2952, %v2950
        %v3027 = vpack.c.b16 %v2953, %v2951
        %v3028 = vpack.c.b16 %v2956, %v2954
        %v3029 = vpack.c.b16 %v2957, %v2955
        %v3030 = vpack.c.b16 %v2960, %v2958
        %v3031 = vpack.c.b16 %v2961, %v2959
        %v3032 = vpack.c.b16 %v2964, %v2962
        %v3033 = vpack.c.b16 %v2965, %v2963
        %v3034 = vpack.c.b16 %v2968, %v2966
        %v3035 = vpack.c.b16 %v2969, %v2967
        %v3036 = vpack.c.b16 %v2972, %v2970
        %v3037 = vpack.c.b16 %v2973, %v2971
        %v3038 = vpack.c.b16 %v2976, %v2974
        %v3039 = vpack.c.b16 %v2977, %v2975
        %v3040 = vpack.c.b16 %v2980, %v2978
        %v3041 = vpack.c.b16 %v2981, %v2979
        %v3042 = vpack.c.b16 %v2984, %v2982
        %v3043 = vpack.c.b16 %v2985, %v2983
        %v3044 = vpack.c.b16 %v2988, %v2986
        %v3045 = vpack.c.b16 %v2989, %v2987
        %v3046 = vpack.c.b16 %v2992, %v2990
        %v3047 = vpack.c.b16 %v2993, %v2991
        %v3048 = vpack.c.b16 %v2996, %v2994
        %v3049 = vpack.c.b16 %v2997, %v2995
        %v3050 = vpack.c.b16 %v3000, %v2998
        %v3051 = vpack.c.b16 %v3001, %v2999
        %v3052 = vpack.c.b16 %v3004, %v3002
        %v3053 = vpack.c.b16 %v3005, %v3003
        %3102 = vmatprep.subr.bf16.mxu0 %v3007
        %3103 = vmatpush1.bf16.msra.mxu0 %v3006
        %3104 = vmatprep.subr.bf16.mxu0 %v3009
        %3105 = vmatpush1.bf16.msra.mxu0 %v3008
        %3106 = vmatprep.subr.bf16.mxu0 %v3011
        %3107 = vmatpush1.bf16.msra.mxu0 %v3010
        %3108 = vmatprep.subr.bf16.mxu0 %v3013
        %3109 = vmatpush1.bf16.msra.mxu0 %v3012
        %3110 = vmatprep.subr.bf16.mxu0 %v3015
        %3111 = vmatpush1.bf16.msra.mxu0 %v3014
        %3112 = vmatprep.subr.bf16.mxu0 %v3017
        %3113 = vmatpush1.bf16.msra.mxu0 %v3016
        %3114 = vmatprep.subr.bf16.mxu0 %v3019
        %3115 = vmatpush1.bf16.msra.mxu0 %v3018
        %3116 = vmatprep.subr.bf16.mxu0 %v3021
        %3117 = vmatpush1.bf16.msra.mxu0 %v3020
        %3118 = vmatprep.subr.bf16.mxu0 %v3023
        %3119 = vmatpush1.bf16.msra.mxu0 %v3022
        %3120 = vmatprep.subr.bf16.mxu0 %v3025
        %3121 = vmatpush1.bf16.msra.mxu0 %v3024
        %3122 = vmatprep.subr.bf16.mxu0 %v3027
        %3123 = vmatpush1.bf16.msra.mxu0 %v3026
        %3124 = vmatprep.subr.bf16.mxu0 %v3029
        %3125 = vmatpush1.bf16.msra.mxu0 %v3028
        %3126 = vmatprep.subr.bf16.mxu0 %v3031
        %3127 = vmatpush1.bf16.msra.mxu0 %v3030
        %3128 = vmatprep.subr.bf16.mxu0 %v3033
        %3129 = vmatpush1.bf16.msra.mxu0 %v3032
        %3130 = vmatprep.subr.bf16.mxu0 %v3035
        %3131 = vmatpush1.bf16.msra.mxu0 %v3034
        %3132 = vmatprep.subr.bf16.mxu0 %v3037
        %3133 = vmatpush1.bf16.msra.mxu0 %v3036
        %3134 = vmatprep.mubr.bf16.mxu0 %v2802
        %3135 = vmatmul.mubr.bf16.gmra.mrb[0].mxu0 %v2801
        %v3136 = vpop.f32.mrb[0].mxu0
        %v3137 = vadd.f32 0.0, %v3136
        %v3138 = vpop.f32.mrb[0].mxu0
        %v3139 = vadd.f32 0.0, %v3138
        %v3140 = vpop.f32.mrb[0].mxu0
        %v3141 = vadd.f32 0.0, %v3140
        %v3142 = vpop.f32.mrb[0].mxu0
        %v3143 = vadd.f32 0.0, %v3142
        %3144 = vmatprep.mubr.bf16.mxu0 %v2805
        %3145 = vmatmul.mubr.bf16.gmra.mrb[0].mxu0 %v2804
        %v3146 = vpop.f32.mrb[0].mxu0
        %v3147 = vadd.f32 0.0, %v3146
        %v3148 = vpop.f32.mrb[0].mxu0
        %v3149 = vadd.f32 0.0, %v3148
        %v3150 = vpop.f32.mrb[0].mxu0
        %v3151 = vadd.f32 0.0, %v3150
        %v3152 = vpop.f32.mrb[0].mxu0
        %v3153 = vadd.f32 0.0, %v3152
        %3154 = vmatprep.mubr.bf16.mxu0 %v2808
        %3155 = vmatmul.mubr.bf16.gmra.mrb[0].mxu0 %v2807
        %v3156 = vpop.f32.mrb[0].mxu0
        %v3157 = vadd.f32 0.0, %v3156
        %v3158 = vpop.f32.mrb[0].mxu0
        %v3159 = vadd.f32 0.0, %v3158
        %v3160 = vpop.f32.mrb[0].mxu0
        %v3161 = vadd.f32 0.0, %v3160
        %v3162 = vpop.f32.mrb[0].mxu0
        %v3163 = vadd.f32 0.0, %v3162
        %3164 = vmatprep.mubr.bf16.mxu0 %v2811
        %3165 = vmatmul.mubr.bf16.gmra.mrb[0].mxu0 %v2810
        %v3166 = vpop.f32.mrb[0].mxu0
        %v3167 = vadd.f32 0.0, %v3166
        %v3168 = vpop.f32.mrb[0].mxu0
        %v3169 = vadd.f32 0.0, %v3168
        %v3170 = vpop.f32.mrb[0].mxu0
        %v3171 = vadd.f32 0.0, %v3170
        %v3172 = vpop.f32.mrb[0].mxu0
        %v3173 = vadd.f32 0.0, %v3172
        %3174 = vdwg.mxu0
        %3175 = vmatprep.subr.bf16.mxu0 %v3039
        %3176 = vmatpush1.bf16.msra.mxu0 %v3038
        %3177 = vmatprep.subr.bf16.mxu0 %v3041
        %3178 = vmatpush1.bf16.msra.mxu0 %v3040
        %3179 = vmatprep.subr.bf16.mxu0 %v3043
        %3180 = vmatpush1.bf16.msra.mxu0 %v3042
        %3181 = vmatprep.subr.bf16.mxu0 %v3045
        %3182 = vmatpush1.bf16.msra.mxu0 %v3044
        %3183 = vmatprep.subr.bf16.mxu0 %v3047
        %3184 = vmatpush1.bf16.msra.mxu0 %v3046
        %3185 = vmatprep.subr.bf16.mxu0 %v3049
        %3186 = vmatpush1.bf16.msra.mxu0 %v3048
        %3187 = vmatprep.subr.bf16.mxu0 %v3051
        %3188 = vmatpush1.bf16.msra.mxu0 %v3050
        %3189 = vmatprep.subr.bf16.mxu0 %v3053
        %3190 = vmatpush1.bf16.msra.mxu0 %v3052
        %3191 = vmatprep.subr.bf16.mxu0 0
        %3192 = vmatpush1.bf16.msra.mxu0 0
        %3193 = vmatprep.subr.bf16.mxu0 0
        %3194 = vmatpush1.bf16.msra.mxu0 0
        %3195 = vmatprep.subr.bf16.mxu0 0
        %3196 = vmatpush1.bf16.msra.mxu0 0
        %3197 = vmatprep.subr.bf16.mxu0 0
        %3198 = vmatpush1.bf16.msra.mxu0 0
        %3199 = vmatprep.subr.bf16.mxu0 0
        %3200 = vmatpush1.bf16.msra.mxu0 0
        %3201 = vmatprep.subr.bf16.mxu0 0
        %3202 = vmatpush1.bf16.msra.mxu0 0
        %3203 = vmatprep.subr.bf16.mxu0 0
        %3204 = vmatpush1.bf16.msra.mxu0 0
        %3205 = vmatprep.subr.bf16.mxu0 0
        %3206 = vmatpush1.bf16.msra.mxu0 0
        %3207 = vmatprep.mubr.bf16.mxu0 0
        %3208 = vmatmul.mubr.bf16.gmra.mrb[0].mxu0 %v2803
        %v3209 = vpop.f32.mrb[0].mxu0
        %v3210 = vadd.f32 %v3137, %v3209
        %v3211 = vpop.f32.mrb[0].mxu0
        %v3212 = vadd.f32 %v3139, %v3211
        %v3213 = vpop.f32.mrb[0].mxu0
        %v3214 = vadd.f32 %v3141, %v3213
        %v3215 = vpop.f32.mrb[0].mxu0
        %v3216 = vadd.f32 %v3143, %v3215
        %3217 = vmatprep.mubr.bf16.mxu0 0
        %3218 = vmatmul.mubr.bf16.gmra.mrb[0].mxu0 %v2806
        %v3219 = vpop.f32.mrb[0].mxu0
        %v3220 = vadd.f32 %v3147, %v3219
        %v3221 = vpop.f32.mrb[0].mxu0
        %v3222 = vadd.f32 %v3149, %v3221
        %v3223 = vpop.f32.mrb[0].mxu0
        %v3224 = vadd.f32 %v3151, %v3223
        %v3225 = vpop.f32.mrb[0].mxu0
        %v3226 = vadd.f32 %v3153, %v3225
        %3227 = vmatprep.mubr.bf16.mxu0 0
        %3228 = vmatmul.mubr.bf16.gmra.mrb[0].mxu0 %v2809
        %v3229 = vpop.f32.mrb[0].mxu0
        %v3230 = vadd.f32 %v3157, %v3229
        %v3231 = vpop.f32.mrb[0].mxu0
        %v3232 = vadd.f32 %v3159, %v3231
        %v3233 = vpop.f32.mrb[0].mxu0
        %v3234 = vadd.f32 %v3161, %v3233
        %v3235 = vpop.f32.mrb[0].mxu0
        %v3236 = vadd.f32 %v3163, %v3235
        %3237 = vmatprep.mubr.bf16.mxu0 0
        %3238 = vmatmul.mubr.bf16.gmra.mrb[0].mxu0 %v2812
        %v3239 = vpop.f32.mrb[0].mxu0
        %v3240 = vadd.f32 %v3167, %v3239
        %v3241 = vpop.f32.mrb[0].mxu0
        %v3242 = vadd.f32 %v3169, %v3241
        %v3243 = vpop.f32.mrb[0].mxu0
        %v3244 = vadd.f32 %v3171, %v3243
        %v3245 = vpop.f32.mrb[0].mxu0
        %v3246 = vadd.f32 %v3173, %v3245
        %3247 = vdwg.mxu0
        %v3296 = vunpack.c.l.b16 %v2729
        %v3297 = vunpack.c.h.b16 %v2729
        %v3298 = vunpack.c.l.b16 %v2730
        %v3299 = vunpack.c.h.b16 %v2730
        %v3300 = vunpack.c.l.b16 %v2731
        %v3301 = vunpack.c.h.b16 %v2731
        %v3302 = vunpack.c.l.b16 %v2732
        %v3303 = vunpack.c.h.b16 %v2732
        %v3304 = vunpack.c.l.b16 %v2733
        %v3305 = vunpack.c.h.b16 %v2733
        %v3306 = vunpack.c.l.b16 %v2734
        %v3307 = vunpack.c.h.b16 %v2734
        %v3308 = vunpack.c.l.b16 %v2735
        %v3309 = vunpack.c.h.b16 %v2735
        %v3310 = vunpack.c.l.b16 %v2736
        %v3311 = vunpack.c.h.b16 %v2736
        %v3312 = vunpack.c.l.b16 %v2737
        %v3313 = vunpack.c.h.b16 %v2737
        %v3314 = vunpack.c.l.b16 %v2738
        %v3315 = vunpack.c.h.b16 %v2738
        %v3316 = vunpack.c.l.b16 %v2739
        %v3317 = vunpack.c.h.b16 %v2739
        %v3318 = vunpack.c.l.b16 %v2740
        %v3319 = vunpack.c.h.b16 %v2740
        %v3320 = vunpack.c.l.b16 %v2741
        %v3321 = vunpack.c.h.b16 %v2741
        %v3322 = vunpack.c.l.b16 %v2742
        %v3323 = vunpack.c.h.b16 %v2742
        %v3324 = vunpack.c.l.b16 %v2743
        %v3325 = vunpack.c.h.b16 %v2743
        %v3326 = vunpack.c.l.b16 %v2744
        %v3327 = vunpack.c.h.b16 %v2744
        %v3328 = vunpack.c.l.b16 %v2745
        %v3329 = vunpack.c.h.b16 %v2745
        %v3330 = vunpack.c.l.b16 %v2746
        %v3331 = vunpack.c.h.b16 %v2746
        %v3332 = vunpack.c.l.b16 %v2747
        %v3333 = vunpack.c.h.b16 %v2747
        %v3334 = vunpack.c.l.b16 %v2748
        %v3335 = vunpack.c.h.b16 %v2748
        %v3336 = vunpack.c.l.b16 %v2749
        %v3337 = vunpack.c.h.b16 %v2749
        %v3338 = vunpack.c.l.b16 %v2750
        %v3339 = vunpack.c.h.b16 %v2750
        %v3340 = vunpack.c.l.b16 %v2751
        %v3341 = vunpack.c.h.b16 %v2751
        %v3342 = vunpack.c.l.b16 %v2752
        %v3343 = vunpack.c.h.b16 %v2752
        %v3344 = vunpack.c.l.b16 %v2753
        %v3345 = vunpack.c.h.b16 %v2753
        %v3346 = vunpack.c.l.b16 %v2754
        %v3347 = vunpack.c.h.b16 %v2754
        %v3348 = vunpack.c.l.b16 %v2755
        %v3349 = vunpack.c.h.b16 %v2755
        %v3350 = vunpack.c.l.b16 %v2756
        %v3351 = vunpack.c.h.b16 %v2756
        %v3352 = vunpack.c.l.b16 %v2757
        %v3353 = vunpack.c.h.b16 %v2757
        %v3354 = vunpack.c.l.b16 %v2758
        %v3355 = vunpack.c.h.b16 %v2758
        %v3356 = vunpack.c.l.b16 %v2759
        %v3357 = vunpack.c.h.b16 %v2759
        %v3358 = vunpack.c.l.b16 %v2760
        %v3359 = vunpack.c.h.b16 %v2760
        %v3360 = vunpack.c.l.b16 %v2761
        %v3361 = vunpack.c.h.b16 %v2761
        %v3362 = vunpack.c.l.b16 %v2762
        %v3363 = vunpack.c.h.b16 %v2762
        %v3364 = vunpack.c.l.b16 %v2763
        %v3365 = vunpack.c.h.b16 %v2763
        %v3366 = vunpack.c.l.b16 %v2764
        %v3367 = vunpack.c.h.b16 %v2764
        %v3368 = vunpack.c.l.b16 %v2765
        %v3369 = vunpack.c.h.b16 %v2765
        %v3370 = vunpack.c.l.b16 %v2766
        %v3371 = vunpack.c.h.b16 %v2766
        %v3372 = vunpack.c.l.b16 %v2767
        %v3373 = vunpack.c.h.b16 %v2767
        %v3374 = vunpack.c.l.b16 %v2768
        %v3375 = vunpack.c.h.b16 %v2768
        %v3376 = vunpack.c.l.b16 %v2769
        %v3377 = vunpack.c.h.b16 %v2769
        %v3378 = vunpack.c.l.b16 %v2770
        %v3379 = vunpack.c.h.b16 %v2770
        %v3380 = vunpack.c.l.b16 %v2771
        %v3381 = vunpack.c.h.b16 %v2771
        %v3382 = vunpack.c.l.b16 %v2772
        %v3383 = vunpack.c.h.b16 %v2772
        %v3384 = vunpack.c.l.b16 %v2773
        %v3385 = vunpack.c.h.b16 %v2773
        %v3386 = vunpack.c.l.b16 %v2774
        %v3387 = vunpack.c.h.b16 %v2774
        %v3388 = vunpack.c.l.b16 %v2775
        %v3389 = vunpack.c.h.b16 %v2775
        %v3390 = vunpack.c.l.b16 %v2776
        %v3391 = vunpack.c.h.b16 %v2776
        %v3392 = vpack.c.b16 %v3298, %v3296
        %v3393 = vpack.c.b16 %v3299, %v3297
        %v3394 = vpack.c.b16 %v3302, %v3300
        %v3395 = vpack.c.b16 %v3303, %v3301
        %v3396 = vpack.c.b16 %v3306, %v3304
        %v3397 = vpack.c.b16 %v3307, %v3305
        %v3398 = vpack.c.b16 %v3310, %v3308
        %v3399 = vpack.c.b16 %v3311, %v3309
        %v3400 = vpack.c.b16 %v3314, %v3312
        %v3401 = vpack.c.b16 %v3315, %v3313
        %v3402 = vpack.c.b16 %v3318, %v3316
        %v3403 = vpack.c.b16 %v3319, %v3317
        %v3404 = vpack.c.b16 %v3322, %v3320
        %v3405 = vpack.c.b16 %v3323, %v3321
        %v3406 = vpack.c.b16 %v3326, %v3324
        %v3407 = vpack.c.b16 %v3327, %v3325
        %v3408 = vpack.c.b16 %v3330, %v3328
        %v3409 = vpack.c.b16 %v3331, %v3329
        %v3410 = vpack.c.b16 %v3334, %v3332
        %v3411 = vpack.c.b16 %v3335, %v3333
        %v3412 = vpack.c.b16 %v3338, %v3336
        %v3413 = vpack.c.b16 %v3339, %v3337
        %v3414 = vpack.c.b16 %v3342, %v3340
        %v3415 = vpack.c.b16 %v3343, %v3341
        %v3416 = vpack.c.b16 %v3346, %v3344
        %v3417 = vpack.c.b16 %v3347, %v3345
        %v3418 = vpack.c.b16 %v3350, %v3348
        %v3419 = vpack.c.b16 %v3351, %v3349
        %v3420 = vpack.c.b16 %v3354, %v3352
        %v3421 = vpack.c.b16 %v3355, %v3353
        %v3422 = vpack.c.b16 %v3358, %v3356
        %v3423 = vpack.c.b16 %v3359, %v3357
        %v3424 = vpack.c.b16 %v3362, %v3360
        %v3425 = vpack.c.b16 %v3363, %v3361
        %v3426 = vpack.c.b16 %v3366, %v3364
        %v3427 = vpack.c.b16 %v3367, %v3365
        %v3428 = vpack.c.b16 %v3370, %v3368
        %v3429 = vpack.c.b16 %v3371, %v3369
        %v3430 = vpack.c.b16 %v3374, %v3372
        %v3431 = vpack.c.b16 %v3375, %v3373
        %v3432 = vpack.c.b16 %v3378, %v3376
        %v3433 = vpack.c.b16 %v3379, %v3377
        %v3434 = vpack.c.b16 %v3382, %v3380
        %v3435 = vpack.c.b16 %v3383, %v3381
        %v3436 = vpack.c.b16 %v3386, %v3384
        %v3437 = vpack.c.b16 %v3387, %v3385
        %v3438 = vpack.c.b16 %v3390, %v3388
        %v3439 = vpack.c.b16 %v3391, %v3389
        %3488 = vmatprep.subr.bf16.mxu0 %v3393
        %3489 = vmatpush1.bf16.msra.mxu0 %v3392
        %3490 = vmatprep.subr.bf16.mxu0 %v3395
        %3491 = vmatpush1.bf16.msra.mxu0 %v3394
        %3492 = vmatprep.subr.bf16.mxu0 %v3397
        %3493 = vmatpush1.bf16.msra.mxu0 %v3396
        %3494 = vmatprep.subr.bf16.mxu0 %v3399
        %3495 = vmatpush1.bf16.msra.mxu0 %v3398
        %3496 = vmatprep.subr.bf16.mxu0 %v3401
        %3497 = vmatpush1.bf16.msra.mxu0 %v3400
        %3498 = vmatprep.subr.bf16.mxu0 %v3403
        %3499 = vmatpush1.bf16.msra.mxu0 %v3402
        %3500 = vmatprep.subr.bf16.mxu0 %v3405
        %3501 = vmatpush1.bf16.msra.mxu0 %v3404
        %3502 = vmatprep.subr.bf16.mxu0 %v3407
        %3503 = vmatpush1.bf16.msra.mxu0 %v3406
        %3504 = vmatprep.subr.bf16.mxu0 %v3409
        %3505 = vmatpush1.bf16.msra.mxu0 %v3408
        %3506 = vmatprep.subr.bf16.mxu0 %v3411
        %3507 = vmatpush1.bf16.msra.mxu0 %v3410
        %3508 = vmatprep.subr.bf16.mxu0 %v3413
        %3509 = vmatpush1.bf16.msra.mxu0 %v3412
        %3510 = vmatprep.subr.bf16.mxu0 %v3415
        %3511 = vmatpush1.bf16.msra.mxu0 %v3414
        %3512 = vmatprep.subr.bf16.mxu0 %v3417
        %3513 = vmatpush1.bf16.msra.mxu0 %v3416
        %3514 = vmatprep.subr.bf16.mxu0 %v3419
        %3515 = vmatpush1.bf16.msra.mxu0 %v3418
        %3516 = vmatprep.subr.bf16.mxu0 %v3421
        %3517 = vmatpush1.bf16.msra.mxu0 %v3420
        %3518 = vmatprep.subr.bf16.mxu0 %v3423
        %3519 = vmatpush1.bf16.msra.mxu0 %v3422
        %3520 = vmatprep.mubr.bf16.mxu0 %v2718
        %3521 = vmatmul.mubr.bf16.gmra.mrb[0].mxu0 %v2717
        %v3522 = vpop.f32.mrb[0].mxu0
        %v3523 = vadd.f32 %v3210, %v3522
        %v3524 = vpop.f32.mrb[0].mxu0
        %v3525 = vadd.f32 %v3212, %v3524
        %v3526 = vpop.f32.mrb[0].mxu0
        %v3527 = vadd.f32 %v3214, %v3526
        %v3528 = vpop.f32.mrb[0].mxu0
        %v3529 = vadd.f32 %v3216, %v3528
        %3530 = vmatprep.mubr.bf16.mxu0 %v2721
        %3531 = vmatmul.mubr.bf16.gmra.mrb[0].mxu0 %v2720
        %v3532 = vpop.f32.mrb[0].mxu0
        %v3533 = vadd.f32 %v3220, %v3532
        %v3534 = vpop.f32.mrb[0].mxu0
        %v3535 = vadd.f32 %v3222, %v3534
        %v3536 = vpop.f32.mrb[0].mxu0
        %v3537 = vadd.f32 %v3224, %v3536
        %v3538 = vpop.f32.mrb[0].mxu0
        %v3539 = vadd.f32 %v3226, %v3538
        %3540 = vmatprep.mubr.bf16.mxu0 %v2724
        %3541 = vmatmul.mubr.bf16.gmra.mrb[0].mxu0 %v2723
        %v3542 = vpop.f32.mrb[0].mxu0
        %v3543 = vadd.f32 %v3230, %v3542
        %v3544 = vpop.f32.mrb[0].mxu0
        %v3545 = vadd.f32 %v3232, %v3544
        %v3546 = vpop.f32.mrb[0].mxu0
        %v3547 = vadd.f32 %v3234, %v3546
        %v3548 = vpop.f32.mrb[0].mxu0
        %v3549 = vadd.f32 %v3236, %v3548
        %3550 = vmatprep.mubr.bf16.mxu0 %v2727
        %3551 = vmatmul.mubr.bf16.gmra.mrb[0].mxu0 %v2726
        %v3552 = vpop.f32.mrb[0].mxu0
        %v3553 = vadd.f32 %v3240, %v3552
        %v3554 = vpop.f32.mrb[0].mxu0
        %v3555 = vadd.f32 %v3242, %v3554
        %v3556 = vpop.f32.mrb[0].mxu0
        %v3557 = vadd.f32 %v3244, %v3556
        %v3558 = vpop.f32.mrb[0].mxu0
        %v3559 = vadd.f32 %v3246, %v3558
        %3560 = vdwg.mxu0
        %3561 = vmatprep.subr.bf16.mxu0 %v3425
        %3562 = vmatpush1.bf16.msra.mxu0 %v3424
        %3563 = vmatprep.subr.bf16.mxu0 %v3427
        %3564 = vmatpush1.bf16.msra.mxu0 %v3426
        %3565 = vmatprep.subr.bf16.mxu0 %v3429
        %3566 = vmatpush1.bf16.msra.mxu0 %v3428
        %3567 = vmatprep.subr.bf16.mxu0 %v3431
        %3568 = vmatpush1.bf16.msra.mxu0 %v3430
        %3569 = vmatprep.subr.bf16.mxu0 %v3433
        %3570 = vmatpush1.bf16.msra.mxu0 %v3432
        %3571 = vmatprep.subr.bf16.mxu0 %v3435
        %3572 = vmatpush1.bf16.msra.mxu0 %v3434
        %3573 = vmatprep.subr.bf16.mxu0 %v3437
        %3574 = vmatpush1.bf16.msra.mxu0 %v3436
        %3575 = vmatprep.subr.bf16.mxu0 %v3439
        %3576 = vmatpush1.bf16.msra.mxu0 %v3438
        %3577 = vmatprep.subr.bf16.mxu0 0
        %3578 = vmatpush1.bf16.msra.mxu0 0
        %3579 = vmatprep.subr.bf16.mxu0 0
        %3580 = vmatpush1.bf16.msra.mxu0 0
        %3581 = vmatprep.subr.bf16.mxu0 0
        %3582 = vmatpush1.bf16.msra.mxu0 0
        %3583 = vmatprep.subr.bf16.mxu0 0
        %3584 = vmatpush1.bf16.msra.mxu0 0
        %3585 = vmatprep.subr.bf16.mxu0 0
        %3586 = vmatpush1.bf16.msra.mxu0 0
        %3587 = vmatprep.subr.bf16.mxu0 0
        %3588 = vmatpush1.bf16.msra.mxu0 0
        %3589 = vmatprep.subr.bf16.mxu0 0
        %3590 = vmatpush1.bf16.msra.mxu0 0
        %3591 = vmatprep.subr.bf16.mxu0 0
        %3592 = vmatpush1.bf16.msra.mxu0 0
        %3593 = vmatprep.mubr.bf16.mxu0 0
        %3594 = vmatmul.mubr.bf16.gmra.mrb[0].mxu0 %v2719
        %v3595 = vpop.f32.mrb[0].mxu0
        %v3596 = vadd.f32 %v3523, %v3595
        %v3597 = vpop.f32.mrb[0].mxu0
        %v3598 = vadd.f32 %v3525, %v3597
        %v3599 = vpop.f32.mrb[0].mxu0
        %v3600 = vadd.f32 %v3527, %v3599
        %v3601 = vpop.f32.mrb[0].mxu0
        %v3602 = vadd.f32 %v3529, %v3601
        %3603 = vmatprep.mubr.bf16.mxu0 0
        %3604 = vmatmul.mubr.bf16.gmra.mrb[0].mxu0 %v2722
        %v3605 = vpop.f32.mrb[0].mxu0
        %v3606 = vadd.f32 %v3533, %v3605
        %v3607 = vpop.f32.mrb[0].mxu0
        %v3608 = vadd.f32 %v3535, %v3607
        %v3609 = vpop.f32.mrb[0].mxu0
        %v3610 = vadd.f32 %v3537, %v3609
        %v3611 = vpop.f32.mrb[0].mxu0
        %v3612 = vadd.f32 %v3539, %v3611
        %3613 = vmatprep.mubr.bf16.mxu0 0
        %3614 = vmatmul.mubr.bf16.gmra.mrb[0].mxu0 %v2725
        %v3615 = vpop.f32.mrb[0].mxu0
        %v3616 = vadd.f32 %v3543, %v3615
        %v3617 = vpop.f32.mrb[0].mxu0
        %v3618 = vadd.f32 %v3545, %v3617
        %v3619 = vpop.f32.mrb[0].mxu0
        %v3620 = vadd.f32 %v3547, %v3619
        %v3621 = vpop.f32.mrb[0].mxu0
        %v3622 = vadd.f32 %v3549, %v3621
        %3623 = vmatprep.mubr.bf16.mxu0 0
        %3624 = vmatmul.mubr.bf16.gmra.mrb[0].mxu0 %v2728
        %v3625 = vpop.f32.mrb[0].mxu0
        %v3626 = vadd.f32 %v3553, %v3625
        %v3627 = vpop.f32.mrb[0].mxu0
        %v3628 = vadd.f32 %v3555, %v3627
        %v3629 = vpop.f32.mrb[0].mxu0
        %v3630 = vadd.f32 %v3557, %v3629
        %v3631 = vpop.f32.mrb[0].mxu0
        %v3632 = vadd.f32 %v3559, %v3631
        %3633 = vdwg.mxu0
        %v3634 = vld [vmem:[%s1224] sm:$0xff]
        %v3635 = vld [vmem:[%s1224 + $0x10] sm:$0xff]
        %v3636 = vld [vmem:[%s1224 + $0x20] sm:$0xff]
        %v3637 = vld [vmem:[%s1224 + $0x30] sm:$0xff]
        %v3638 = vld [vmem:[%s1224 + $0x40] sm:$0xff]
        %v3639 = vld [vmem:[%s1224 + $0x50] sm:$0xff]
        %v3640 = vld [vmem:[%s1224 + $0x60] sm:$0xff]
        %v3641 = vld [vmem:[%s1224 + $0x70] sm:$0xff]
        %v3642 = vld [vmem:[%s1224 + $0x1] sm:$0xff]
        %v3643 = vld [vmem:[%s1224 + $0x11] sm:$0xff]
        %v3644 = vld [vmem:[%s1224 + $0x21] sm:$0xff]
        %v3645 = vld [vmem:[%s1224 + $0x31] sm:$0xff]
        %v3646 = vld [vmem:[%s1224 + $0x41] sm:$0xff]
        %v3647 = vld [vmem:[%s1224 + $0x51] sm:$0xff]
        %v3648 = vld [vmem:[%s1224 + $0x61] sm:$0xff]
        %v3649 = vld [vmem:[%s1224 + $0x71] sm:$0xff]
        %v3650 = vld [vmem:[%s1224 + $0x2] sm:$0xff]
        %v3651 = vld [vmem:[%s1224 + $0x12] sm:$0xff]
        %v3652 = vld [vmem:[%s1224 + $0x22] sm:$0xff]
        %v3653 = vld [vmem:[%s1224 + $0x32] sm:$0xff]
        %v3654 = vld [vmem:[%s1224 + $0x42] sm:$0xff]
        %v3655 = vld [vmem:[%s1224 + $0x52] sm:$0xff]
        %v3656 = vld [vmem:[%s1224 + $0x62] sm:$0xff]
        %v3657 = vld [vmem:[%s1224 + $0x72] sm:$0xff]
        %v3658 = vpack.c.bf16 %v3635, %v3634
        %v3659 = vpack.c.bf16 %v3643, %v3642
        %v3660 = vpack.c.bf16 %v3651, %v3650
        %v3661 = vpack.c.bf16 %v3637, %v3636
        %v3662 = vpack.c.bf16 %v3645, %v3644
        %v3663 = vpack.c.bf16 %v3653, %v3652
        %v3664 = vpack.c.bf16 %v3639, %v3638
        %v3665 = vpack.c.bf16 %v3647, %v3646
        %v3666 = vpack.c.bf16 %v3655, %v3654
        %v3667 = vpack.c.bf16 %v3641, %v3640
        %v3668 = vpack.c.bf16 %v3649, %v3648
        %v3669 = vpack.c.bf16 %v3657, %v3656
        %s3670 = scalar_lea.vmem [#allocation9], 768
        %v3671 = vld [vmem:[%s3670] sm:$0xff]
        %v3672 = vld [vmem:[%s3670 + $0x8] sm:$0xff]
        %v3673 = vld [vmem:[%s3670 + $0x10] sm:$0xff]
        %v3674 = vld [vmem:[%s3670 + $0x18] sm:$0xff]
        %v3675 = vld [vmem:[%s3670 + $0x20] sm:$0xff]
        %v3676 = vld [vmem:[%s3670 + $0x28] sm:$0xff]
        %v3677 = vld [vmem:[%s3670 + $0x30] sm:$0xff]
        %v3678 = vld [vmem:[%s3670 + $0x38] sm:$0xff]
        %v3679 = vld [vmem:[%s3670 + $0x40] sm:$0xff]
        %v3680 = vld [vmem:[%s3670 + $0x48] sm:$0xff]
        %v3681 = vld [vmem:[%s3670 + $0x50] sm:$0xff]
        %v3682 = vld [vmem:[%s3670 + $0x58] sm:$0xff]
        %v3683 = vld [vmem:[%s3670 + $0x60] sm:$0xff]
        %v3684 = vld [vmem:[%s3670 + $0x68] sm:$0xff]
        %v3685 = vld [vmem:[%s3670 + $0x70] sm:$0xff]
        %v3686 = vld [vmem:[%s3670 + $0x78] sm:$0xff]
        %v3687 = vld [vmem:[%s3670 + $0x80] sm:$0xff]
        %v3688 = vld [vmem:[%s3670 + $0x88] sm:$0xff]
        %v3689 = vld [vmem:[%s3670 + $0x90] sm:$0xff]
        %v3690 = vld [vmem:[%s3670 + $0x98] sm:$0xff]
        %v3691 = vld [vmem:[%s3670 + $0xa0] sm:$0xff]
        %v3692 = vld [vmem:[%s3670 + $0xa8] sm:$0xff]
        %v3693 = vld [vmem:[%s3670 + $0xb0] sm:$0xff]
        %v3694 = vld [vmem:[%s3670 + $0xb8] sm:$0xff]
        %v3695 = vld [vmem:[%s3670 + $0xc0] sm:$0xff]
        %v3696 = vld [vmem:[%s3670 + $0xc8] sm:$0xff]
        %v3697 = vld [vmem:[%s3670 + $0xd0] sm:$0xff]
        %v3698 = vld [vmem:[%s3670 + $0xd8] sm:$0xff]
        %v3699 = vld [vmem:[%s3670 + $0xe0] sm:$0xff]
        %v3700 = vld [vmem:[%s3670 + $0xe8] sm:$0xff]
        %v3701 = vld [vmem:[%s3670 + $0xf0] sm:$0xff]
        %v3702 = vld [vmem:[%s3670 + $0xf8] sm:$0xff]
        %v3703 = vld [vmem:[%s3670 + $0x100] sm:$0xff]
        %v3704 = vld [vmem:[%s3670 + $0x108] sm:$0xff]
        %v3705 = vld [vmem:[%s3670 + $0x110] sm:$0xff]
        %v3706 = vld [vmem:[%s3670 + $0x118] sm:$0xff]
        %v3707 = vld [vmem:[%s3670 + $0x120] sm:$0xff]
        %v3708 = vld [vmem:[%s3670 + $0x128] sm:$0xff]
        %v3709 = vld [vmem:[%s3670 + $0x130] sm:$0xff]
        %v3710 = vld [vmem:[%s3670 + $0x138] sm:$0xff]
        %v3711 = vld [vmem:[%s3670 + $0x140] sm:$0xff]
        %v3712 = vld [vmem:[%s3670 + $0x148] sm:$0xff]
        %v3713 = vld [vmem:[%s3670 + $0x150] sm:$0xff]
        %v3714 = vld [vmem:[%s3670 + $0x158] sm:$0xff]
        %v3715 = vld [vmem:[%s3670 + $0x160] sm:$0xff]
        %v3716 = vld [vmem:[%s3670 + $0x168] sm:$0xff]
        %v3717 = vld [vmem:[%s3670 + $0x170] sm:$0xff]
        %v3718 = vld [vmem:[%s3670 + $0x178] sm:$0xff]
        %v3767 = vunpack.c.l.b16 %v3671
        %v3768 = vunpack.c.h.b16 %v3671
        %v3769 = vunpack.c.l.b16 %v3672
        %v3770 = vunpack.c.h.b16 %v3672
        %v3771 = vunpack.c.l.b16 %v3673
        %v3772 = vunpack.c.h.b16 %v3673
        %v3773 = vunpack.c.l.b16 %v3674
        %v3774 = vunpack.c.h.b16 %v3674
        %v3775 = vunpack.c.l.b16 %v3675
        %v3776 = vunpack.c.h.b16 %v3675
        %v3777 = vunpack.c.l.b16 %v3676
        %v3778 = vunpack.c.h.b16 %v3676
        %v3779 = vunpack.c.l.b16 %v3677
        %v3780 = vunpack.c.h.b16 %v3677
        %v3781 = vunpack.c.l.b16 %v3678
        %v3782 = vunpack.c.h.b16 %v3678
        %v3783 = vunpack.c.l.b16 %v3679
        %v3784 = vunpack.c.h.b16 %v3679
        %v3785 = vunpack.c.l.b16 %v3680
        %v3786 = vunpack.c.h.b16 %v3680
        %v3787 = vunpack.c.l.b16 %v3681
        %v3788 = vunpack.c.h.b16 %v3681
        %v3789 = vunpack.c.l.b16 %v3682
        %v3790 = vunpack.c.h.b16 %v3682
        %v3791 = vunpack.c.l.b16 %v3683
        %v3792 = vunpack.c.h.b16 %v3683
        %v3793 = vunpack.c.l.b16 %v3684
        %v3794 = vunpack.c.h.b16 %v3684
        %v3795 = vunpack.c.l.b16 %v3685
        %v3796 = vunpack.c.h.b16 %v3685
        %v3797 = vunpack.c.l.b16 %v3686
        %v3798 = vunpack.c.h.b16 %v3686
        %v3799 = vunpack.c.l.b16 %v3687
        %v3800 = vunpack.c.h.b16 %v3687
        %v3801 = vunpack.c.l.b16 %v3688
        %v3802 = vunpack.c.h.b16 %v3688
        %v3803 = vunpack.c.l.b16 %v3689
        %v3804 = vunpack.c.h.b16 %v3689
        %v3805 = vunpack.c.l.b16 %v3690
        %v3806 = vunpack.c.h.b16 %v3690
        %v3807 = vunpack.c.l.b16 %v3691
        %v3808 = vunpack.c.h.b16 %v3691
        %v3809 = vunpack.c.l.b16 %v3692
        %v3810 = vunpack.c.h.b16 %v3692
        %v3811 = vunpack.c.l.b16 %v3693
        %v3812 = vunpack.c.h.b16 %v3693
        %v3813 = vunpack.c.l.b16 %v3694
        %v3814 = vunpack.c.h.b16 %v3694
        %v3815 = vunpack.c.l.b16 %v3695
        %v3816 = vunpack.c.h.b16 %v3695
        %v3817 = vunpack.c.l.b16 %v3696
        %v3818 = vunpack.c.h.b16 %v3696
        %v3819 = vunpack.c.l.b16 %v3697
        %v3820 = vunpack.c.h.b16 %v3697
        %v3821 = vunpack.c.l.b16 %v3698
        %v3822 = vunpack.c.h.b16 %v3698
        %v3823 = vunpack.c.l.b16 %v3699
        %v3824 = vunpack.c.h.b16 %v3699
        %v3825 = vunpack.c.l.b16 %v3700
        %v3826 = vunpack.c.h.b16 %v3700
        %v3827 = vunpack.c.l.b16 %v3701
        %v3828 = vunpack.c.h.b16 %v3701
        %v3829 = vunpack.c.l.b16 %v3702
        %v3830 = vunpack.c.h.b16 %v3702
        %v3831 = vunpack.c.l.b16 %v3703
        %v3832 = vunpack.c.h.b16 %v3703
        %v3833 = vunpack.c.l.b16 %v3704
        %v3834 = vunpack.c.h.b16 %v3704
        %v3835 = vunpack.c.l.b16 %v3705
        %v3836 = vunpack.c.h.b16 %v3705
        %v3837 = vunpack.c.l.b16 %v3706
        %v3838 = vunpack.c.h.b16 %v3706
        %v3839 = vunpack.c.l.b16 %v3707
        %v3840 = vunpack.c.h.b16 %v3707
        %v3841 = vunpack.c.l.b16 %v3708
        %v3842 = vunpack.c.h.b16 %v3708
        %v3843 = vunpack.c.l.b16 %v3709
        %v3844 = vunpack.c.h.b16 %v3709
        %v3845 = vunpack.c.l.b16 %v3710
        %v3846 = vunpack.c.h.b16 %v3710
        %v3847 = vunpack.c.l.b16 %v3711
        %v3848 = vunpack.c.h.b16 %v3711
        %v3849 = vunpack.c.l.b16 %v3712
        %v3850 = vunpack.c.h.b16 %v3712
        %v3851 = vunpack.c.l.b16 %v3713
        %v3852 = vunpack.c.h.b16 %v3713
        %v3853 = vunpack.c.l.b16 %v3714
        %v3854 = vunpack.c.h.b16 %v3714
        %v3855 = vunpack.c.l.b16 %v3715
        %v3856 = vunpack.c.h.b16 %v3715
        %v3857 = vunpack.c.l.b16 %v3716
        %v3858 = vunpack.c.h.b16 %v3716
        %v3859 = vunpack.c.l.b16 %v3717
        %v3860 = vunpack.c.h.b16 %v3717
        %v3861 = vunpack.c.l.b16 %v3718
        %v3862 = vunpack.c.h.b16 %v3718
        %v3863 = vpack.c.b16 %v3769, %v3767
        %v3864 = vpack.c.b16 %v3770, %v3768
        %v3865 = vpack.c.b16 %v3773, %v3771
        %v3866 = vpack.c.b16 %v3774, %v3772
        %v3867 = vpack.c.b16 %v3777, %v3775
        %v3868 = vpack.c.b16 %v3778, %v3776
        %v3869 = vpack.c.b16 %v3781, %v3779
        %v3870 = vpack.c.b16 %v3782, %v3780
        %v3871 = vpack.c.b16 %v3785, %v3783
        %v3872 = vpack.c.b16 %v3786, %v3784
        %v3873 = vpack.c.b16 %v3789, %v3787
        %v3874 = vpack.c.b16 %v3790, %v3788
        %v3875 = vpack.c.b16 %v3793, %v3791
        %v3876 = vpack.c.b16 %v3794, %v3792
        %v3877 = vpack.c.b16 %v3797, %v3795
        %v3878 = vpack.c.b16 %v3798, %v3796
        %v3879 = vpack.c.b16 %v3801, %v3799
        %v3880 = vpack.c.b16 %v3802, %v3800
        %v3881 = vpack.c.b16 %v3805, %v3803
        %v3882 = vpack.c.b16 %v3806, %v3804
        %v3883 = vpack.c.b16 %v3809, %v3807
        %v3884 = vpack.c.b16 %v3810, %v3808
        %v3885 = vpack.c.b16 %v3813, %v3811
        %v3886 = vpack.c.b16 %v3814, %v3812
        %v3887 = vpack.c.b16 %v3817, %v3815
        %v3888 = vpack.c.b16 %v3818, %v3816
        %v3889 = vpack.c.b16 %v3821, %v3819
        %v3890 = vpack.c.b16 %v3822, %v3820
        %v3891 = vpack.c.b16 %v3825, %v3823
        %v3892 = vpack.c.b16 %v3826, %v3824
        %v3893 = vpack.c.b16 %v3829, %v3827
        %v3894 = vpack.c.b16 %v3830, %v3828
        %v3895 = vpack.c.b16 %v3833, %v3831
        %v3896 = vpack.c.b16 %v3834, %v3832
        %v3897 = vpack.c.b16 %v3837, %v3835
        %v3898 = vpack.c.b16 %v3838, %v3836
        %v3899 = vpack.c.b16 %v3841, %v3839
        %v3900 = vpack.c.b16 %v3842, %v3840
        %v3901 = vpack.c.b16 %v3845, %v3843
        %v3902 = vpack.c.b16 %v3846, %v3844
        %v3903 = vpack.c.b16 %v3849, %v3847
        %v3904 = vpack.c.b16 %v3850, %v3848
        %v3905 = vpack.c.b16 %v3853, %v3851
        %v3906 = vpack.c.b16 %v3854, %v3852
        %v3907 = vpack.c.b16 %v3857, %v3855
        %v3908 = vpack.c.b16 %v3858, %v3856
        %v3909 = vpack.c.b16 %v3861, %v3859
        %v3910 = vpack.c.b16 %v3862, %v3860
        %3959 = vmatprep.subr.bf16.mxu0 %v3864
        %3960 = vmatpush1.bf16.msra.mxu0 %v3863
        %3961 = vmatprep.subr.bf16.mxu0 %v3866
        %3962 = vmatpush1.bf16.msra.mxu0 %v3865
        %3963 = vmatprep.subr.bf16.mxu0 %v3868
        %3964 = vmatpush1.bf16.msra.mxu0 %v3867
        %3965 = vmatprep.subr.bf16.mxu0 %v3870
        %3966 = vmatpush1.bf16.msra.mxu0 %v3869
        %3967 = vmatprep.subr.bf16.mxu0 %v3872
        %3968 = vmatpush1.bf16.msra.mxu0 %v3871
        %3969 = vmatprep.subr.bf16.mxu0 %v3874
        %3970 = vmatpush1.bf16.msra.mxu0 %v3873
        %3971 = vmatprep.subr.bf16.mxu0 %v3876
        %3972 = vmatpush1.bf16.msra.mxu0 %v3875
        %3973 = vmatprep.subr.bf16.mxu0 %v3878
        %3974 = vmatpush1.bf16.msra.mxu0 %v3877
        %3975 = vmatprep.subr.bf16.mxu0 %v3880
        %3976 = vmatpush1.bf16.msra.mxu0 %v3879
        %3977 = vmatprep.subr.bf16.mxu0 %v3882
        %3978 = vmatpush1.bf16.msra.mxu0 %v3881
        %3979 = vmatprep.subr.bf16.mxu0 %v3884
        %3980 = vmatpush1.bf16.msra.mxu0 %v3883
        %3981 = vmatprep.subr.bf16.mxu0 %v3886
        %3982 = vmatpush1.bf16.msra.mxu0 %v3885
        %3983 = vmatprep.subr.bf16.mxu0 %v3888
        %3984 = vmatpush1.bf16.msra.mxu0 %v3887
        %3985 = vmatprep.subr.bf16.mxu0 %v3890
        %3986 = vmatpush1.bf16.msra.mxu0 %v3889
        %3987 = vmatprep.subr.bf16.mxu0 %v3892
        %3988 = vmatpush1.bf16.msra.mxu0 %v3891
        %3989 = vmatprep.subr.bf16.mxu0 %v3894
        %3990 = vmatpush1.bf16.msra.mxu0 %v3893
        %3991 = vmatprep.mubr.bf16.mxu0 %v3659
        %3992 = vmatmul.mubr.bf16.gmra.mrb[0].mxu0 %v3658
        %v3993 = vpop.f32.mrb[0].mxu0
        %v3994 = vadd.f32 0.0, %v3993
        %v3995 = vpop.f32.mrb[0].mxu0
        %v3996 = vadd.f32 0.0, %v3995
        %v3997 = vpop.f32.mrb[0].mxu0
        %v3998 = vadd.f32 0.0, %v3997
        %v3999 = vpop.f32.mrb[0].mxu0
        %v4000 = vadd.f32 0.0, %v3999
        %4001 = vmatprep.mubr.bf16.mxu0 %v3662
        %4002 = vmatmul.mubr.bf16.gmra.mrb[0].mxu0 %v3661
        %v4003 = vpop.f32.mrb[0].mxu0
        %v4004 = vadd.f32 0.0, %v4003
        %v4005 = vpop.f32.mrb[0].mxu0
        %v4006 = vadd.f32 0.0, %v4005
        %v4007 = vpop.f32.mrb[0].mxu0
        %v4008 = vadd.f32 0.0, %v4007
        %v4009 = vpop.f32.mrb[0].mxu0
        %v4010 = vadd.f32 0.0, %v4009
        %4011 = vmatprep.mubr.bf16.mxu0 %v3665
        %4012 = vmatmul.mubr.bf16.gmra.mrb[0].mxu0 %v3664
        %v4013 = vpop.f32.mrb[0].mxu0
        %v4014 = vadd.f32 0.0, %v4013
        %v4015 = vpop.f32.mrb[0].mxu0
        %v4016 = vadd.f32 0.0, %v4015
        %v4017 = vpop.f32.mrb[0].mxu0
        %v4018 = vadd.f32 0.0, %v4017
        %v4019 = vpop.f32.mrb[0].mxu0
        %v4020 = vadd.f32 0.0, %v4019
        %4021 = vmatprep.mubr.bf16.mxu0 %v3668
        %4022 = vmatmul.mubr.bf16.gmra.mrb[0].mxu0 %v3667
        %v4023 = vpop.f32.mrb[0].mxu0
        %v4024 = vadd.f32 0.0, %v4023
        %v4025 = vpop.f32.mrb[0].mxu0
        %v4026 = vadd.f32 0.0, %v4025
        %v4027 = vpop.f32.mrb[0].mxu0
        %v4028 = vadd.f32 0.0, %v4027
        %v4029 = vpop.f32.mrb[0].mxu0
        %v4030 = vadd.f32 0.0, %v4029
        %4031 = vdwg.mxu0
        %4032 = vmatprep.subr.bf16.mxu0 %v3896
        %4033 = vmatpush1.bf16.msra.mxu0 %v3895
        %4034 = vmatprep.subr.bf16.mxu0 %v3898
        %4035 = vmatpush1.bf16.msra.mxu0 %v3897
        %4036 = vmatprep.subr.bf16.mxu0 %v3900
        %4037 = vmatpush1.bf16.msra.mxu0 %v3899
        %4038 = vmatprep.subr.bf16.mxu0 %v3902
        %4039 = vmatpush1.bf16.msra.mxu0 %v3901
        %4040 = vmatprep.subr.bf16.mxu0 %v3904
        %4041 = vmatpush1.bf16.msra.mxu0 %v3903
        %4042 = vmatprep.subr.bf16.mxu0 %v3906
        %4043 = vmatpush1.bf16.msra.mxu0 %v3905
        %4044 = vmatprep.subr.bf16.mxu0 %v3908
        %4045 = vmatpush1.bf16.msra.mxu0 %v3907
        %4046 = vmatprep.subr.bf16.mxu0 %v3910
        %4047 = vmatpush1.bf16.msra.mxu0 %v3909
        %4048 = vmatprep.subr.bf16.mxu0 0
        %4049 = vmatpush1.bf16.msra.mxu0 0
        %4050 = vmatprep.subr.bf16.mxu0 0
        %4051 = vmatpush1.bf16.msra.mxu0 0
        %4052 = vmatprep.subr.bf16.mxu0 0
        %4053 = vmatpush1.bf16.msra.mxu0 0
        %4054 = vmatprep.subr.bf16.mxu0 0
        %4055 = vmatpush1.bf16.msra.mxu0 0
        %4056 = vmatprep.subr.bf16.mxu0 0
        %4057 = vmatpush1.bf16.msra.mxu0 0
        %4058 = vmatprep.subr.bf16.mxu0 0
        %4059 = vmatpush1.bf16.msra.mxu0 0
        %4060 = vmatprep.subr.bf16.mxu0 0
        %4061 = vmatpush1.bf16.msra.mxu0 0
        %4062 = vmatprep.subr.bf16.mxu0 0
        %4063 = vmatpush1.bf16.msra.mxu0 0
        %4064 = vmatprep.mubr.bf16.mxu0 0
        %4065 = vmatmul.mubr.bf16.gmra.mrb[0].mxu0 %v3660
        %v4066 = vpop.f32.mrb[0].mxu0
        %v4067 = vadd.f32 %v3994, %v4066
        %v4068 = vpop.f32.mrb[0].mxu0
        %v4069 = vadd.f32 %v3996, %v4068
        %v4070 = vpop.f32.mrb[0].mxu0
        %v4071 = vadd.f32 %v3998, %v4070
        %v4072 = vpop.f32.mrb[0].mxu0
        %v4073 = vadd.f32 %v4000, %v4072
        %4074 = vmatprep.mubr.bf16.mxu0 0
        %4075 = vmatmul.mubr.bf16.gmra.mrb[0].mxu0 %v3663
        %v4076 = vpop.f32.mrb[0].mxu0
        %v4077 = vadd.f32 %v4004, %v4076
        %v4078 = vpop.f32.mrb[0].mxu0
        %v4079 = vadd.f32 %v4006, %v4078
        %v4080 = vpop.f32.mrb[0].mxu0
        %v4081 = vadd.f32 %v4008, %v4080
        %v4082 = vpop.f32.mrb[0].mxu0
        %v4083 = vadd.f32 %v4010, %v4082
        %4084 = vmatprep.mubr.bf16.mxu0 0
        %4085 = vmatmul.mubr.bf16.gmra.mrb[0].mxu0 %v3666
        %v4086 = vpop.f32.mrb[0].mxu0
        %v4087 = vadd.f32 %v4014, %v4086
        %v4088 = vpop.f32.mrb[0].mxu0
        %v4089 = vadd.f32 %v4016, %v4088
        %v4090 = vpop.f32.mrb[0].mxu0
        %v4091 = vadd.f32 %v4018, %v4090
        %v4092 = vpop.f32.mrb[0].mxu0
        %v4093 = vadd.f32 %v4020, %v4092
        %4094 = vmatprep.mubr.bf16.mxu0 0
        %4095 = vmatmul.mubr.bf16.gmra.mrb[0].mxu0 %v3669
        %v4096 = vpop.f32.mrb[0].mxu0
        %v4097 = vadd.f32 %v4024, %v4096
        %v4098 = vpop.f32.mrb[0].mxu0
        %v4099 = vadd.f32 %v4026, %v4098
        %v4100 = vpop.f32.mrb[0].mxu0
        %v4101 = vadd.f32 %v4028, %v4100
        %v4102 = vpop.f32.mrb[0].mxu0
        %v4103 = vadd.f32 %v4030, %v4102
        %4104 = vdwg.mxu0
        %v4105 = vadd.f32 %v3596, %v4067
        %v4106 = vadd.f32 %v3598, %v4069
        %v4107 = vadd.f32 %v3600, %v4071
        %v4108 = vadd.f32 %v3602, %v4073
        %v4109 = vadd.f32 %v3606, %v4077
        %v4110 = vadd.f32 %v3608, %v4079
        %v4111 = vadd.f32 %v3610, %v4081
        %v4112 = vadd.f32 %v3612, %v4083
        %v4113 = vadd.f32 %v3616, %v4087
        %v4114 = vadd.f32 %v3618, %v4089
        %v4115 = vadd.f32 %v3620, %v4091
        %v4116 = vadd.f32 %v3622, %v4093
        %v4117 = vadd.f32 %v3626, %v4097
        %v4118 = vadd.f32 %v3628, %v4099
        %v4119 = vadd.f32 %v3630, %v4101
        %v4120 = vadd.f32 %v3632, %v4103
        %v4121 = vld [vmem:[%s223] sm:$0xff]
        %v4122 = vld [vmem:[%s223 + $0x8] sm:$0xff]
        %v4123 = vld [vmem:[%s223 + $0x10] sm:$0xff]
        %v4124 = vld [vmem:[%s223 + $0x18] sm:$0xff]
        %v4125 = vld [vmem:[%s223 + $0x20] sm:$0xff]
        %v4126 = vld [vmem:[%s223 + $0x28] sm:$0xff]
        %v4127 = vld [vmem:[%s223 + $0x30] sm:$0xff]
        %v4128 = vld [vmem:[%s223 + $0x38] sm:$0xff]
        %v4129 = vld [vmem:[%s223 + $0x40] sm:$0xff]
        %v4130 = vld [vmem:[%s223 + $0x48] sm:$0xff]
        %v4131 = vld [vmem:[%s223 + $0x50] sm:$0xff]
        %v4132 = vld [vmem:[%s223 + $0x58] sm:$0xff]
        %v4133 = vld [vmem:[%s223 + $0x60] sm:$0xff]
        %v4134 = vld [vmem:[%s223 + $0x68] sm:$0xff]
        %v4135 = vld [vmem:[%s223 + $0x70] sm:$0xff]
        %v4136 = vld [vmem:[%s223 + $0x78] sm:$0xff]
        %v4137 = vadd.f32 %v4105, %v4121
        %v4138 = vadd.f32 %v4106, %v4122
        %v4139 = vadd.f32 %v4107, %v4123
        %v4140 = vadd.f32 %v4108, %v4124
        %v4141 = vadd.f32 %v4109, %v4125
        %v4142 = vadd.f32 %v4110, %v4126
        %v4143 = vadd.f32 %v4111, %v4127
        %v4144 = vadd.f32 %v4112, %v4128
        %v4145 = vadd.f32 %v4113, %v4129
        %v4146 = vadd.f32 %v4114, %v4130
        %v4147 = vadd.f32 %v4115, %v4131
        %v4148 = vadd.f32 %v4116, %v4132
        %v4149 = vadd.f32 %v4117, %v4133
        %v4150 = vadd.f32 %v4118, %v4134
        %v4151 = vadd.f32 %v4119, %v4135
        %v4152 = vadd.f32 %v4120, %v4136
        %4153 = vst [vmem:[%s259] sm:$0xff] %v4137
        %4154 = vst [vmem:[%s259 + $0x8] sm:$0xff] %v4138
        %4155 = vst [vmem:[%s259 + $0x10] sm:$0xff] %v4139
        %4156 = vst [vmem:[%s259 + $0x18] sm:$0xff] %v4140
        %4157 = vst [vmem:[%s259 + $0x20] sm:$0xff] %v4141
        %4158 = vst [vmem:[%s259 + $0x28] sm:$0xff] %v4142
        %4159 = vst [vmem:[%s259 + $0x30] sm:$0xff] %v4143
        %4160 = vst [vmem:[%s259 + $0x38] sm:$0xff] %v4144
        %4161 = vst [vmem:[%s259 + $0x40] sm:$0xff] %v4145
        %4162 = vst [vmem:[%s259 + $0x48] sm:$0xff] %v4146
        %4163 = vst [vmem:[%s259 + $0x50] sm:$0xff] %v4147
        %4164 = vst [vmem:[%s259 + $0x58] sm:$0xff] %v4148
        %4165 = vst [vmem:[%s259 + $0x60] sm:$0xff] %v4149
        %4166 = vst [vmem:[%s259 + $0x68] sm:$0xff] %v4150
        %4167 = vst [vmem:[%s259 + $0x70] sm:$0xff] %v4151
        %4168 = vst [vmem:[%s259 + $0x78] sm:$0xff] %v4152
        %s4169 = sand.u32 %s120, 1
        %s4170 = scalar_lea.sflag [#allocation5], %s4169
        %s4171 = sand.u32 %s120, 1
        %s4172 = smul.addr %s4171, 128
        %s4173 = scalar_lea.vmem [#allocation11], %s4172
        // Predicated region
        $region53: #{inception_block_a.1} parent=35 // pred_check
          %p4174 = pneg %p130
        $region54: #{inception_block_a.1} parent=35 // pred_check_branch
          %4176 = sbr.rel (%p4174) target = $region56
        $region55: #{inception_block_a.1} parent=35 // pred_region
          %s4178 = ssub.s32 2048, 2048
          %4179 = vsyncadd %s4170, %s4178
          %s4180 = smul.addr %s23, 16
          %s4181 = smul.addr %s4180, 128
          %s4182 = scalar_lea.hbm %s4, %s4181
          %s4183 = sshll.u32 %s4173, 4
          %s4184 = int_to_ptr.vmem [resolvable:$true] %s4183
          %4189 = dma.vmem_to_hbm [thread:$0]  %s4184, 2048, %s4182, %s4170, 256, 256, 16
        $region56: #{inception_block_a.1} parent=35 // pred_fallthru
          _
      $region36: #{inception_block_a.1} parent=5 // pred_fallthru
        _
      %p4190 = scmp.le.s32.totalorder 2, %s18
      // Predicated region
      $region57: #{inception_block_a.1} parent=5 // pred_check
        %p4191 = pneg %p4190
      $region58: #{inception_block_a.1} parent=5 // pred_check_branch
        %4193 = sbr.rel (%p4191) target = $region60
      $region59: #{inception_block_a.1} parent=5 // pred_region
        %s4194 = ssub.s32 %s18, 2
        // Predicated region
        $region61: #{inception_block_a.1} parent=59 // pred_check
          %p4195 = pneg %p136
        $region62: #{inception_block_a.1} parent=59 // pred_check_branch
          %4197 = sbr.rel (%p4195) target = $region64
        $region63: #{inception_block_a.1} parent=59 // pred_region
          %s4198 = sand.u32 %s121, 1
          %s4199 = scalar_lea.sflag [#allocation5], %s4198
          %s4200 = sand.u32 %s121, 1
          %s4201 = smul.addr %s4200, 128
          %s4202 = scalar_lea.vmem [#allocation11], %s4201
          %4203 = dma.done %s4199, 2048
        $region64: #{inception_block_a.1} parent=59 // pred_fallthru
          _
      $region60: #{inception_block_a.1} parent=5 // pred_fallthru
        _
    $region6: #{inception_block_a.1} parent=1 // loop_footer
      %s22 = sadd.s32 1, %s18
    $region7: #{inception_block_a.1} parent=1 // loop_footer_branch
      %17 = sbr.rel target = $region3
    $region8: #{inception_block_a.1} parent=1 // loop_exit
      _
    %4204 = vsyncpa [#allocation4], 1
    %s4205 = scalar_lea.sflag [#allocation4], 1
    %4206 = vsyncpa %s4205, 1
    %4207 = vsyncpa [#allocation7], 1
    %4208 = vsyncpa [#allocation10], 1
    %4209 = vsyncpa [#allocation5], 1
    %s4210 = scalar_lea.sflag [#allocation5], 1
    %4211 = vsyncpa %s4210, 1

</llo_original>
